<compile_context>
chip_gen: v7x
topology: tpu7x:2x2x1
jax: 0.10.0
libtpu: 0.0.40
codegen_flags: <defaults>
</compile_context>

<pallas_src>
import functools

import jax
import jax.numpy as jnp
from jax import lax
from jax.experimental import pallas as pl
from jax.experimental.pallas import tpu as pltpu


def _attention_kernel(x_ref,
                      wq_ref, wk_ref, wv_ref,
                      bq_ref, bk_ref, bv_ref,
                      wp_ref, bp_ref,
                      o_ref,
                      k_cache, v_cache,
                      *, n_heads: int, emb: int, q_tile: int):
    """One grid step = (batch element b, query-token tile qi).

    x_ref    : (1, T, C) bf16   tokens-major activations (full T)
    wq/wk/wv : (C, C)    bf16   fused projection weights (x @ W); wq pre-scaled
    bq/bk/bv : (1, C)    f32    fused biases (bq pre-scaled by emb**-0.5)
    wp_ref   : (n_heads, C, emb) bf16  proj weight pre-split per head
    bp_ref   : (C, 1)    f32    proj bias
    o_ref    : (1, C, q_tile)   output tile, channels-major (B, C, T) layout
    k_cache/v_cache : (T, C) bf16 VMEM scratch, filled once per batch element
    """
    qi = pl.program_id(1)
    f32 = jnp.float32
    bf16 = jnp.bfloat16
    nt = (((1,), (1,)), ((), ()))          # contract last dims of both (A @ B^T)

    # ---- K/V projections: one full-width matmul each, computed only for the
    #      first query tile of each batch element and cached in VMEM.
    @pl.when(qi == 0)
    def _():
        xf = x_ref[0]                                                   # (T, C)
        k_all = jnp.dot(xf, wk_ref[...], preferred_element_type=f32) + bk_ref[...]
        v_all = jnp.dot(xf, wv_ref[...], preferred_element_type=f32) + bv_ref[...]
        k_cache[...] = k_all.astype(bf16)
        v_cache[...] = v_all.astype(bf16)

    # ---- Q projection for this tile (sliced from the resident full-T block).
    start = qi * q_tile
    if q_tile % 128 == 0:
        start = pl.multiple_of(start, q_tile)
    x_q = x_ref[0, pl.ds(start, q_tile), :]                             # (tq, C)
    q_all = (jnp.dot(x_q, wq_ref[...], preferred_element_type=f32)
             + bq_ref[...]).astype(bf16)                                # (tq, C)

    # ---- Per-head attention; each head's result is folded directly into the
    #      output projection: lane-dense (C, tq) accumulation, no masked stores.
    n_ch = wp_ref.shape[1]
    y = jnp.zeros((n_ch, q_tile), dtype=f32)                            # (C, tq)
    for h in range(n_heads):
        lo, hi = h * emb, (h + 1) * emb
        q_h = q_all[:, lo:hi]                                           # (tq, e)
        k_h = k_cache[:, lo:hi]                                         # (T,  e)
        v_h = v_cache[:, lo:hi]                                         # (T,  e)

        # scores: emb contracted directly (no k.T); emb**-0.5 folded into wq/bq
        s = lax.dot_general(q_h, k_h, nt, preferred_element_type=f32)   # (tq, T)
        s = s - jnp.max(s, axis=-1, keepdims=True)
        p = jnp.exp(s)
        p = p * pl.reciprocal(jnp.sum(p, axis=-1, keepdims=True), approx=True)

        o_h = jnp.dot(p.astype(bf16), v_h, preferred_element_type=f32)  # (tq, e)
        # output projection slice for this head: (C, e) x (tq, e)^T -> (C, tq)
        y = y + lax.dot_general(wp_ref[h], o_h.astype(bf16), nt,
                                preferred_element_type=f32)

    o_ref[0] = (y + bp_ref[...]).astype(o_ref.dtype)


def _vmem_estimate(T, C, n_heads, emb, q_tile):
    """Rough per-core VMEM bytes for tile selection / vmem_limit."""
    bf2, f4 = 2, 4
    est = 0
    est += 2 * T * C * bf2                                   # x block (double buffered)
    est += 2 * C * q_tile * f4                               # output block (double buffered)
    est += 2 * (3 * C * C + n_heads * C * emb) * bf2         # weights (double buffered)
    est += 2 * (3 * C + C) * f4                              # biases
    est += 2 * T * C * bf2                                   # K/V bf16 caches
    est += q_tile * T * (f4 + bf2)                           # scores f32 + probs bf16
    est += q_tile * C * (f4 + bf2) + C * q_tile * f4         # q_all + y accumulator
    return est


def attention_pallas(x, wqkv, bqkv, wproj, bproj, n_heads, *, q_tile=None):
    """x: (B, C, H, W) NCHW; weights in PyTorch Conv2d 1x1 layout (squeezed)."""
    B, C, H, W = x.shape
    T = H * W
    assert C % n_heads == 0
    emb = C // n_heads
    scale = emb ** (-0.5)

    budget = 40 * 2 ** 20   # conservative across v5e/v6e/v7x
    if q_tile is None:
        q_tile = T          # fall back to a single tile per batch element
        for t in (512, 256, 128):   # prefer big tiles for the 256-wide MXUs
            if T % t == 0 and _vmem_estimate(T, C, n_heads, emb, t) <= budget:
                q_tile = t
                break
    assert T % q_tile == 0 and (q_tile % 128 == 0 or q_tile == T)
    est = _vmem_estimate(T, C, n_heads, emb, q_tile)
    assert est <= budget, (
        f"attention tiling needs ~{est} B VMEM (> {budget}); use a smaller q_tile")
    n_q = T // q_tile

    # activations tokens-major and bf16: channels on the lane axis, half the DMA
    x_t = x.reshape(B, C, T).transpose(0, 2, 1).astype(jnp.bfloat16)     # (B, T, C)

    # fused projection weights: x @ W form, emb**-0.5 folded into Wq / bq
    wq_t = (wqkv[0 * C:1 * C].T * scale).astype(jnp.bfloat16)            # (C, C)
    wk_t = wqkv[1 * C:2 * C].T.astype(jnp.bfloat16)
    wv_t = wqkv[2 * C:3 * C].T.astype(jnp.bfloat16)
    bq = (bqkv[0 * C:1 * C] * scale).reshape(1, C).astype(jnp.float32)
    bk = bqkv[1 * C:2 * C].reshape(1, C).astype(jnp.float32)
    bv = bqkv[2 * C:3 * C].reshape(1, C).astype(jnp.float32)
    # proj weight pre-split per head: wp3[h] = wproj[:, h*emb:(h+1)*emb]
    wp3 = wproj.reshape(C, n_heads, emb).transpose(1, 0, 2).astype(jnp.bfloat16)
    bp = bproj.reshape(C, 1).astype(jnp.float32)

    kernel = functools.partial(_attention_kernel,
                               n_heads=n_heads, emb=emb, q_tile=q_tile)
    vmem_limit = int(min(max(est * 3 // 2, 32 * 2 ** 20), 96 * 2 ** 20))

    out = pl.pallas_call(
        kernel,
        out_shape=jax.ShapeDtypeStruct((B, C, T), x.dtype),
        grid=(B, n_q),
        in_specs=[
            pl.BlockSpec((1, T, C), lambda b, qi: (b, 0, 0)),            # x (full T)
            pl.BlockSpec((C, C), lambda b, qi: (0, 0)),                  # wq (scaled)
            pl.BlockSpec((C, C), lambda b, qi: (0, 0)),                  # wk
            pl.BlockSpec((C, C), lambda b, qi: (0, 0)),                  # wv
            pl.BlockSpec((1, C), lambda b, qi: (0, 0)),                  # bq (scaled)
            pl.BlockSpec((1, C), lambda b, qi: (0, 0)),                  # bk
            pl.BlockSpec((1, C), lambda b, qi: (0, 0)),                  # bv
            pl.BlockSpec((n_heads, C, emb), lambda b, qi: (0, 0, 0)),    # wproj split
            pl.BlockSpec((C, 1), lambda b, qi: (0, 0)),                  # bproj
        ],
        out_specs=pl.BlockSpec((1, C, q_tile), lambda b, qi: (b, 0, qi)),
        scratch_shapes=[pltpu.VMEM((T, C), jnp.bfloat16),                # K cache
                        pltpu.VMEM((T, C), jnp.bfloat16)],               # V cache
        compiler_params=pltpu.CompilerParams(
            dimension_semantics=("parallel", "arbitrary"),
            vmem_limit_bytes=vmem_limit),
    )(x_t, wq_t, wk_t, wv_t, bq, bk, bv, wp3, bp)

    # output is already channels-major: (B, C, T) -> NCHW is a free reshape
    return out.reshape(B, C, H, W)


def attention_reference(x, wqkv, bqkv, wproj, bproj, n_heads, *, matmul_dtype=None):
    """Plain-JAX mirror of the PyTorch forward.

    If matmul_dtype is given (e.g. bf16), matmul operands are cast to it while
    accumulation / softmax stay f32 — mirroring the kernel's precision choices.
    """
    B, C, H, W = x.shape
    T = H * W
    emb = C // n_heads
    cast = (lambda a: a.astype(matmul_dtype)) if matmul_dtype is not None else (lambda a: a)
    f32 = jnp.float32

    xt = x.reshape(B, C, T)                                            # (B, C, T)
    qkv = jnp.einsum('oc,bct->bot', cast(wqkv), cast(xt),
                     preferred_element_type=f32) + bqkv[None, :, None]
    qkv = qkv.reshape(B, 3, n_heads, emb, T).transpose(1, 0, 2, 4, 3)  # (3,B,h,T,e)
    q, k, v = qkv[0], qkv[1], qkv[2]
    attn = jnp.einsum('bhte,bhTe->bhtT', cast(q * emb ** (-0.5)), cast(k),
                      preferred_element_type=f32)
    attn = jax.nn.softmax(attn, axis=-1)
    out = jnp.einsum('bhtT,bhTe->bhte', cast(attn), cast(v),
                     preferred_element_type=f32)
    out = out.transpose(0, 1, 3, 2).reshape(B, C, T)                   # chan = h*emb+e
    y = jnp.einsum('oc,bct->bot', cast(wproj), cast(out),
                   preferred_element_type=f32) + bproj[None, :, None]
    return y.reshape(B, C, H, W)


if __name__ == "__main__":
    B, C, H, W = 2, 32, 16, 16          # T = 256 tokens
    n_heads = 4

    key = jax.random.PRNGKey(0)
    kx, k1, k2, k3, k4 = jax.random.split(key, 5)

    x = jax.random.normal(kx, (B, C, H, W), dtype=jnp.float32)

    # PyTorch Conv2d 1x1 shaped parameters (squeezed).
    wqkv = jax.random.normal(k1, (3 * C, C), dtype=jnp.float32) * (1.0 / jnp.sqrt(C))
    bqkv = jax.random.normal(k2, (3 * C,), dtype=jnp.float32) * 0.02
    wproj = jax.random.normal(k3, (C, C), dtype=jnp.float32) * (1.0 / jnp.sqrt(C))
    bproj = jax.random.normal(k4, (C,), dtype=jnp.float32) * 0.02

    # references
    y_ref_bf16 = attention_reference(x, wqkv, bqkv, wproj, bproj, n_heads,
                                     matmul_dtype=jnp.bfloat16)
    y_ref_f32 = attention_reference(x, wqkv, bqkv, wproj, bproj, n_heads)

    # 1) auto tile selection (q_tile = 256 = T here, single tile per batch elem)
    y = attention_pallas(x, wqkv, bqkv, wproj, bproj, n_heads)
    y = jax.block_until_ready(y)
    assert y.shape == (B, C, H, W)
    assert jnp.allclose(y, y_ref_bf16, atol=3e-2, rtol=3e-2), \
        "mismatch vs matched-precision reference (auto tile)"
    assert jnp.allclose(y, y_ref_f32, atol=1e-1, rtol=1e-1), \
        "mismatch vs f32 reference (auto tile)"

    # 2) multi-tile path: exercises the K/V VMEM cache reuse across q tiles
    y2 = attention_pallas(x, wqkv, bqkv, wproj, bproj, n_heads, q_tile=128)
    y2 = jax.block_until_ready(y2)
    assert jnp.allclose(y2, y_ref_bf16, atol=3e-2, rtol=3e-2), \
        "mismatch vs matched-precision reference (q_tile=128)"
    assert jnp.allclose(y2, y_ref_f32, atol=1e-1, rtol=1e-1), \
        "mismatch vs f32 reference (q_tile=128)"

    print("KERNEL_OK")
</pallas_src>

<mosaic_0001>
module attributes {stable_mosaic.version = 11 : i64} {
  func.func @_attention_kernel(%arg0: i32, %arg1: i32, %arg2: memref<1x256x32xbf16, #tpu.memory_space<vmem>>, %arg3: memref<32x32xbf16, #tpu.memory_space<vmem>>, %arg4: memref<32x32xbf16, #tpu.memory_space<vmem>>, %arg5: memref<32x32xbf16, #tpu.memory_space<vmem>>, %arg6: memref<1x32xf32, #tpu.memory_space<vmem>>, %arg7: memref<1x32xf32, #tpu.memory_space<vmem>>, %arg8: memref<1x32xf32, #tpu.memory_space<vmem>>, %arg9: memref<4x32x8xbf16, #tpu.memory_space<vmem>>, %arg10: memref<32x1xf32, #tpu.memory_space<vmem>>, %arg11: memref<1x32x256xf32, #tpu.memory_space<vmem>>, %arg12: memref<256x32xbf16, #tpu.memory_space<vmem>>, %arg13: memref<256x32xbf16, #tpu.memory_space<vmem>>) attributes {dimension_semantics = [#tpu.dimension_semantics<parallel>, #tpu.dimension_semantics<arbitrary>], iteration_bounds = array<i64: 2, 1>, scalar_prefetch = 0 : i64, scratch_operands = 2 : i64, tpu.core_type = #tpu.core_type<tc>, window_params = [{transform_indices = @transform_0, window_bounds = array<i64: 1, 256, 32>}, {pipeline_mode = #tpu.pipeline_mode<synchronous>, transform_indices = @transform_1, window_bounds = array<i64: 32, 32>}, {pipeline_mode = #tpu.pipeline_mode<synchronous>, transform_indices = @transform_2, window_bounds = array<i64: 32, 32>}, {pipeline_mode = #tpu.pipeline_mode<synchronous>, transform_indices = @transform_3, window_bounds = array<i64: 32, 32>}, {pipeline_mode = #tpu.pipeline_mode<synchronous>, transform_indices = @transform_4, window_bounds = array<i64: 1, 32>}, {pipeline_mode = #tpu.pipeline_mode<synchronous>, transform_indices = @transform_5, window_bounds = array<i64: 1, 32>}, {pipeline_mode = #tpu.pipeline_mode<synchronous>, transform_indices = @transform_6, window_bounds = array<i64: 1, 32>}, {pipeline_mode = #tpu.pipeline_mode<synchronous>, transform_indices = @transform_7, window_bounds = array<i64: 4, 32, 8>}, {pipeline_mode = #tpu.pipeline_mode<synchronous>, transform_indices = @transform_8, window_bounds = array<i64: 32, 1>}, {transform_indices = @transform_9, window_bounds = array<i64: 1, 32, 256>}]} {
    %c0_i32 = arith.constant 0 : i32
    %0 = arith.cmpi eq, %arg1, %c0_i32 : i32
    %1 = arith.extui %0 : i1 to i32
    %c0_i32_0 = arith.constant 0 : i32
    %2 = arith.cmpi ne, %1, %c0_i32_0 : i32
    scf.if %2 {
      %c0_54 = arith.constant 0 : index
      %c0_55 = arith.constant 0 : index
      %c0_56 = arith.constant 0 : index
      %105 = vector.load %arg2[%c0_54, %c0_55, %c0_56] : memref<1x256x32xbf16, #tpu.memory_space<vmem>>, vector<1x256x32xbf16>
      %106 = vector.shape_cast %105 : vector<1x256x32xbf16> to vector<256x32xbf16>
      %c0_57 = arith.constant 0 : index
      %c0_58 = arith.constant 0 : index
      %107 = vector.load %arg4[%c0_57, %c0_58] : memref<32x32xbf16, #tpu.memory_space<vmem>>, vector<32x32xbf16>
      %cst_59 = arith.constant dense<0.000000e+00> : vector<256x32xf32>
      %108 = tpu.matmul %106, %107, %cst_59 {dimension_numbers = #tpu.dot_dimension_numbers<[1], [0], [0], [1], [0, 0, 1, 1], [], []>} : vector<256x32xbf16>, vector<32x32xbf16>, vector<256x32xf32> -> vector<256x32xf32>
      %c0_60 = arith.constant 0 : index
      %c0_61 = arith.constant 0 : index
      %109 = vector.load %arg7[%c0_60, %c0_61] : memref<1x32xf32, #tpu.memory_space<vmem>>, vector<1x32xf32>
      %110 = vector.broadcast %109 : vector<1x32xf32> to vector<256x32xf32>
      %111 = arith.addf %108, %110 : vector<256x32xf32>
      %c0_62 = arith.constant 0 : index
      %c0_63 = arith.constant 0 : index
      %112 = vector.load %arg5[%c0_62, %c0_63] : memref<32x32xbf16, #tpu.memory_space<vmem>>, vector<32x32xbf16>
      %cst_64 = arith.constant dense<0.000000e+00> : vector<256x32xf32>
      %113 = tpu.matmul %106, %112, %cst_64 {dimension_numbers = #tpu.dot_dimension_numbers<[1], [0], [0], [1], [0, 0, 1, 1], [], []>} : vector<256x32xbf16>, vector<32x32xbf16>, vector<256x32xf32> -> vector<256x32xf32>
      %c0_65 = arith.constant 0 : index
      %c0_66 = arith.constant 0 : index
      %114 = vector.load %arg8[%c0_65, %c0_66] : memref<1x32xf32, #tpu.memory_space<vmem>>, vector<1x32xf32>
      %115 = vector.broadcast %114 : vector<1x32xf32> to vector<256x32xf32>
      %116 = arith.addf %113, %115 : vector<256x32xf32>
      %117 = arith.truncf %111 : vector<256x32xf32> to vector<256x32xbf16>
      %c0_67 = arith.constant 0 : index
      %c0_68 = arith.constant 0 : index
      %118 = vector.load %arg12[%c0_67, %c0_68] : memref<256x32xbf16, #tpu.memory_space<vmem>>, vector<256x32xbf16>
      tpu.vector_store %arg12[%c0_67, %c0_68], %117 {strides = array<i32>} : memref<256x32xbf16, #tpu.memory_space<vmem>>, vector<256x32xbf16>,
      %119 = arith.truncf %116 : vector<256x32xf32> to vector<256x32xbf16>
      %c0_69 = arith.constant 0 : index
      %c0_70 = arith.constant 0 : index
      %120 = vector.load %arg13[%c0_69, %c0_70] : memref<256x32xbf16, #tpu.memory_space<vmem>>, vector<256x32xbf16>
      tpu.vector_store %arg13[%c0_69, %c0_70], %119 {strides = array<i32>} : memref<256x32xbf16, #tpu.memory_space<vmem>>, vector<256x32xbf16>,
    } else {
    }
    %c256_i32 = arith.constant 256 : i32
    %3 = arith.muli %arg1, %c256_i32 : i32
    %4 = tpu.assume_multiple %3, 256 : i32
    %c0 = arith.constant 0 : index
    %5 = arith.index_cast %4 : i32 to index
    %c0_1 = arith.constant 0 : index
    %6 = vector.load %arg2[%c0, %5, %c0_1] : memref<1x256x32xbf16, #tpu.memory_space<vmem>>, vector<1x256x32xbf16>
    %7 = vector.shape_cast %6 : vector<1x256x32xbf16> to vector<256x32xbf16>
    %c0_2 = arith.constant 0 : index
    %c0_3 = arith.constant 0 : index
    %8 = vector.load %arg3[%c0_2, %c0_3] : memref<32x32xbf16, #tpu.memory_space<vmem>>, vector<32x32xbf16>
    %cst = arith.constant dense<0.000000e+00> : vector<256x32xf32>
    %9 = tpu.matmul %7, %8, %cst {dimension_numbers = #tpu.dot_dimension_numbers<[1], [0], [0], [1], [0, 0, 1, 1], [], []>} : vector<256x32xbf16>, vector<32x32xbf16>, vector<256x32xf32> -> vector<256x32xf32>
    %c0_4 = arith.constant 0 : index
    %c0_5 = arith.constant 0 : index
    %10 = vector.load %arg6[%c0_4, %c0_5] : memref<1x32xf32, #tpu.memory_space<vmem>>, vector<1x32xf32>
    %11 = vector.broadcast %10 : vector<1x32xf32> to vector<256x32xf32>
    %12 = arith.addf %9, %11 : vector<256x32xf32>
    %13 = arith.truncf %12 : vector<256x32xf32> to vector<256x32xbf16>
    %cst_6 = arith.constant 0.000000e+00 : f32
    %14 = vector.broadcast %cst_6 : f32 to vector<32x256xf32>
    %15 = vector.extract_strided_slice %13 {offsets = [0, 0], sizes = [256, 8], strides = [1, 1]} : vector<256x32xbf16> to vector<256x8xbf16>
    %c0_7 = arith.constant 0 : index
    %c0_8 = arith.constant 0 : index
    %16 = vector.load %arg12[%c0_7, %c0_8] : memref<256x32xbf16, #tpu.memory_space<vmem>>, vector<256x8xbf16>
    %c0_9 = arith.constant 0 : index
    %c0_10 = arith.constant 0 : index
    %17 = vector.load %arg13[%c0_9, %c0_10] : memref<256x32xbf16, #tpu.memory_space<vmem>>, vector<256x8xbf16>
    %cst_11 = arith.constant dense<0.000000e+00> : vector<256x256xf32>
    %18 = tpu.matmul %15, %16, %cst_11 {dimension_numbers = #tpu.dot_dimension_numbers<[1], [1], [0], [0], [0, 0, 1, 0], [], []>} : vector<256x8xbf16>, vector<256x8xbf16>, vector<256x256xf32> -> vector<256x256xf32>
    %cst_12 = arith.constant dense<0xFF800000> : vector<256xf32>
    %19 = vector.multi_reduction <maximumf>, %18, %cst_12 [1] : vector<256x256xf32> to vector<256xf32>
    %20 = vector.shape_cast %19 : vector<256xf32> to vector<256x1xf32>
    %21 = vector.broadcast %20 : vector<256x1xf32> to vector<256x256xf32>
    %22 = arith.subf %18, %21 : vector<256x256xf32>
    %23 = math.exp %22 : vector<256x256xf32>
    %cst_13 = arith.constant dense<0.000000e+00> : vector<256xf32>
    %24 = vector.multi_reduction <add>, %23, %cst_13 [1] : vector<256x256xf32> to vector<256xf32>
    %25 = vector.shape_cast %24 : vector<256xf32> to vector<256x1xf32>
    %26 = tpu.reciprocal %25 {approx = true} : vector<256x1xf32> -> vector<256x1xf32>
    %27 = vector.broadcast %26 : vector<256x1xf32> to vector<256x256xf32>
    %28 = arith.mulf %23, %27 : vector<256x256xf32>
    %29 = arith.truncf %28 : vector<256x256xf32> to vector<256x256xbf16>
    %cst_14 = arith.constant dense<0.000000e+00> : vector<256x8xf32>
    %30 = tpu.matmul %29, %17, %cst_14 {dimension_numbers = #tpu.dot_dimension_numbers<[1], [0], [0], [1], [0, 0, 1, 1], [], []>} : vector<256x256xbf16>, vector<256x8xbf16>, vector<256x8xf32> -> vector<256x8xf32>
    %c0_15 = arith.constant 0 : index
    %c0_16 = arith.constant 0 : index
    %c0_17 = arith.constant 0 : index
    %31 = vector.load %arg9[%c0_15, %c0_16, %c0_17] : memref<4x32x8xbf16, #tpu.memory_space<vmem>>, vector<1x32x8xbf16>
    %32 = vector.shape_cast %31 : vector<1x32x8xbf16> to vector<32x8xbf16>
    %33 = arith.truncf %30 : vector<256x8xf32> to vector<256x8xbf16>
    %cst_18 = arith.constant dense<0.000000e+00> : vector<32x256xf32>
    %34 = tpu.matmul %32, %33, %cst_18 {dimension_numbers = #tpu.dot_dimension_numbers<[1], [1], [0], [0], [0, 0, 1, 0], [], []>} : vector<32x8xbf16>, vector<256x8xbf16>, vector<32x256xf32> -> vector<32x256xf32>
    %35 = arith.addf %14, %34 : vector<32x256xf32>
    %36 = vector.extract_strided_slice %13 {offsets = [0, 8], sizes = [256, 8], strides = [1, 1]} : vector<256x32xbf16> to vector<256x8xbf16>
    %c0_19 = arith.constant 0 : index
    %c8 = arith.constant 8 : index
    %37 = vector.load %arg12[%c0_19, %c8] : memref<256x32xbf16, #tpu.memory_space<vmem>>, vector<256x8xbf16>
    %c0_20 = arith.constant 0 : index
    %c8_21 = arith.constant 8 : index
    %38 = vector.load %arg13[%c0_20, %c8_21] : memref<256x32xbf16, #tpu.memory_space<vmem>>, vector<256x8xbf16>
    %cst_22 = arith.constant dense<0.000000e+00> : vector<256x256xf32>
    %39 = tpu.matmul %36, %37, %cst_22 {dimension_numbers = #tpu.dot_dimension_numbers<[1], [1], [0], [0], [0, 0, 1, 0], [], []>} : vector<256x8xbf16>, vector<256x8xbf16>, vector<256x256xf32> -> vector<256x256xf32>
    %cst_23 = arith.constant dense<0xFF800000> : vector<256xf32>
    %40 = vector.multi_reduction <maximumf>, %39, %cst_23 [1] : vector<256x256xf32> to vector<256xf32>
    %41 = vector.shape_cast %40 : vector<256xf32> to vector<256x1xf32>
    %42 = vector.broadcast %41 : vector<256x1xf32> to vector<256x256xf32>
    %43 = arith.subf %39, %42 : vector<256x256xf32>
    %44 = math.exp %43 : vector<256x256xf32>
    %cst_24 = arith.constant dense<0.000000e+00> : vector<256xf32>
    %45 = vector.multi_reduction <add>, %44, %cst_24 [1] : vector<256x256xf32> to vector<256xf32>
    %46 = vector.shape_cast %45 : vector<256xf32> to vector<256x1xf32>
    %47 = tpu.reciprocal %46 {approx = true} : vector<256x1xf32> -> vector<256x1xf32>
    %48 = vector.broadcast %47 : vector<256x1xf32> to vector<256x256xf32>
    %49 = arith.mulf %44, %48 : vector<256x256xf32>
    %50 = arith.truncf %49 : vector<256x256xf32> to vector<256x256xbf16>
    %cst_25 = arith.constant dense<0.000000e+00> : vector<256x8xf32>
    %51 = tpu.matmul %50, %38, %cst_25 {dimension_numbers = #tpu.dot_dimension_numbers<[1], [0], [0], [1], [0, 0, 1, 1], [], []>} : vector<256x256xbf16>, vector<256x8xbf16>, vector<256x8xf32> -> vector<256x8xf32>
    %c1 = arith.constant 1 : index
    %c0_26 = arith.constant 0 : index
    %c0_27 = arith.constant 0 : index
    %52 = vector.load %arg9[%c1, %c0_26, %c0_27] : memref<4x32x8xbf16, #tpu.memory_space<vmem>>, vector<1x32x8xbf16>
    %53 = vector.shape_cast %52 : vector<1x32x8xbf16> to vector<32x8xbf16>
    %54 = arith.truncf %51 : vector<256x8xf32> to vector<256x8xbf16>
    %cst_28 = arith.constant dense<0.000000e+00> : vector<32x256xf32>
    %55 = tpu.matmul %53, %54, %cst_28 {dimension_numbers = #tpu.dot_dimension_numbers<[1], [1], [0], [0], [0, 0, 1, 0], [], []>} : vector<32x8xbf16>, vector<256x8xbf16>, vector<32x256xf32> -> vector<32x256xf32>
    %56 = arith.addf %35, %55 : vector<32x256xf32>
    %57 = vector.extract_strided_slice %13 {offsets = [0, 16], sizes = [256, 8], strides = [1, 1]} : vector<256x32xbf16> to vector<256x8xbf16>
    %c0_29 = arith.constant 0 : index
    %c16 = arith.constant 16 : index
    %58 = vector.load %arg12[%c0_29, %c16] : memref<256x32xbf16, #tpu.memory_space<vmem>>, vector<256x8xbf16>
    %c0_30 = arith.constant 0 : index
    %c16_31 = arith.constant 16 : index
    %59 = vector.load %arg13[%c0_30, %c16_31] : memref<256x32xbf16, #tpu.memory_space<vmem>>, vector<256x8xbf16>
    %cst_32 = arith.constant dense<0.000000e+00> : vector<256x256xf32>
    %60 = tpu.matmul %57, %58, %cst_32 {dimension_numbers = #tpu.dot_dimension_numbers<[1], [1], [0], [0], [0, 0, 1, 0], [], []>} : vector<256x8xbf16>, vector<256x8xbf16>, vector<256x256xf32> -> vector<256x256xf32>
    %cst_33 = arith.constant dense<0xFF800000> : vector<256xf32>
    %61 = vector.multi_reduction <maximumf>, %60, %cst_33 [1] : vector<256x256xf32> to vector<256xf32>
    %62 = vector.shape_cast %61 : vector<256xf32> to vector<256x1xf32>
    %63 = vector.broadcast %62 : vector<256x1xf32> to vector<256x256xf32>
    %64 = arith.subf %60, %63 : vector<256x256xf32>
    %65 = math.exp %64 : vector<256x256xf32>
    %cst_34 = arith.constant dense<0.000000e+00> : vector<256xf32>
    %66 = vector.multi_reduction <add>, %65, %cst_34 [1] : vector<256x256xf32> to vector<256xf32>
    %67 = vector.shape_cast %66 : vector<256xf32> to vector<256x1xf32>
    %68 = tpu.reciprocal %67 {approx = true} : vector<256x1xf32> -> vector<256x1xf32>
    %69 = vector.broadcast %68 : vector<256x1xf32> to vector<256x256xf32>
    %70 = arith.mulf %65, %69 : vector<256x256xf32>
    %71 = arith.truncf %70 : vector<256x256xf32> to vector<256x256xbf16>
    %cst_35 = arith.constant dense<0.000000e+00> : vector<256x8xf32>
    %72 = tpu.matmul %71, %59, %cst_35 {dimension_numbers = #tpu.dot_dimension_numbers<[1], [0], [0], [1], [0, 0, 1, 1], [], []>} : vector<256x256xbf16>, vector<256x8xbf16>, vector<256x8xf32> -> vector<256x8xf32>
    %c2 = arith.constant 2 : index
    %c0_36 = arith.constant 0 : index
    %c0_37 = arith.constant 0 : index
    %73 = vector.load %arg9[%c2, %c0_36, %c0_37] : memref<4x32x8xbf16, #tpu.memory_space<vmem>>, vector<1x32x8xbf16>
    %74 = vector.shape_cast %73 : vector<1x32x8xbf16> to vector<32x8xbf16>
    %75 = arith.truncf %72 : vector<256x8xf32> to vector<256x8xbf16>
    %cst_38 = arith.constant dense<0.000000e+00> : vector<32x256xf32>
    %76 = tpu.matmul %74, %75, %cst_38 {dimension_numbers = #tpu.dot_dimension_numbers<[1], [1], [0], [0], [0, 0, 1, 0], [], []>} : vector<32x8xbf16>, vector<256x8xbf16>, vector<32x256xf32> -> vector<32x256xf32>
    %77 = arith.addf %56, %76 : vector<32x256xf32>
    %78 = vector.extract_strided_slice %13 {offsets = [0, 24], sizes = [256, 8], strides = [1, 1]} : vector<256x32xbf16> to vector<256x8xbf16>
    %c0_39 = arith.constant 0 : index
    %c24 = arith.constant 24 : index
    %79 = vector.load %arg12[%c0_39, %c24] : memref<256x32xbf16, #tpu.memory_space<vmem>>, vector<256x8xbf16>
    %c0_40 = arith.constant 0 : index
    %c24_41 = arith.constant 24 : index
    %80 = vector.load %arg13[%c0_40, %c24_41] : memref<256x32xbf16, #tpu.memory_space<vmem>>, vector<256x8xbf16>
    %cst_42 = arith.constant dense<0.000000e+00> : vector<256x256xf32>
    %81 = tpu.matmul %78, %79, %cst_42 {dimension_numbers = #tpu.dot_dimension_numbers<[1], [1], [0], [0], [0, 0, 1, 0], [], []>} : vector<256x8xbf16>, vector<256x8xbf16>, vector<256x256xf32> -> vector<256x256xf32>
    %cst_43 = arith.constant dense<0xFF800000> : vector<256xf32>
    %82 = vector.multi_reduction <maximumf>, %81, %cst_43 [1] : vector<256x256xf32> to vector<256xf32>
    %83 = vector.shape_cast %82 : vector<256xf32> to vector<256x1xf32>
    %84 = vector.broadcast %83 : vector<256x1xf32> to vector<256x256xf32>
    %85 = arith.subf %81, %84 : vector<256x256xf32>
    %86 = math.exp %85 : vector<256x256xf32>
    %cst_44 = arith.constant dense<0.000000e+00> : vector<256xf32>
    %87 = vector.multi_reduction <add>, %86, %cst_44 [1] : vector<256x256xf32> to vector<256xf32>
    %88 = vector.shape_cast %87 : vector<256xf32> to vector<256x1xf32>
    %89 = tpu.reciprocal %88 {approx = true} : vector<256x1xf32> -> vector<256x1xf32>
    %90 = vector.broadcast %89 : vector<256x1xf32> to vector<256x256xf32>
    %91 = arith.mulf %86, %90 : vector<256x256xf32>
    %92 = arith.truncf %91 : vector<256x256xf32> to vector<256x256xbf16>
    %cst_45 = arith.constant dense<0.000000e+00> : vector<256x8xf32>
    %93 = tpu.matmul %92, %80, %cst_45 {dimension_numbers = #tpu.dot_dimension_numbers<[1], [0], [0], [1], [0, 0, 1, 1], [], []>} : vector<256x256xbf16>, vector<256x8xbf16>, vector<256x8xf32> -> vector<256x8xf32>
    %c3 = arith.constant 3 : index
    %c0_46 = arith.constant 0 : index
    %c0_47 = arith.constant 0 : index
    %94 = vector.load %arg9[%c3, %c0_46, %c0_47] : memref<4x32x8xbf16, #tpu.memory_space<vmem>>, vector<1x32x8xbf16>
    %95 = vector.shape_cast %94 : vector<1x32x8xbf16> to vector<32x8xbf16>
    %96 = arith.truncf %93 : vector<256x8xf32> to vector<256x8xbf16>
    %cst_48 = arith.constant dense<0.000000e+00> : vector<32x256xf32>
    %97 = tpu.matmul %95, %96, %cst_48 {dimension_numbers = #tpu.dot_dimension_numbers<[1], [1], [0], [0], [0, 0, 1, 0], [], []>} : vector<32x8xbf16>, vector<256x8xbf16>, vector<32x256xf32> -> vector<32x256xf32>
    %98 = arith.addf %77, %97 : vector<32x256xf32>
    %c0_49 = arith.constant 0 : index
    %c0_50 = arith.constant 0 : index
    %99 = vector.load %arg10[%c0_49, %c0_50] : memref<32x1xf32, #tpu.memory_space<vmem>>, vector<32x1xf32>
    %100 = vector.broadcast %99 : vector<32x1xf32> to vector<32x256xf32>
    %101 = arith.addf %98, %100 : vector<32x256xf32>
    %c0_51 = arith.constant 0 : index
    %c0_52 = arith.constant 0 : index
    %c0_53 = arith.constant 0 : index
    %102 = vector.load %arg11[%c0_51, %c0_52, %c0_53] : memref<1x32x256xf32, #tpu.memory_space<vmem>>, vector<1x32x256xf32>
    %103 = vector.shape_cast %102 : vector<1x32x256xf32> to vector<32x256xf32>
    %104 = vector.shape_cast %101 : vector<32x256xf32> to vector<1x32x256xf32>
    tpu.vector_store %arg11[%c0_51, %c0_52, %c0_53], %104 {strides = array<i32>} : memref<1x32x256xf32, #tpu.memory_space<vmem>>, vector<1x32x256xf32>,
    return
  }
  func.func @transform_0(%arg0: i32, %arg1: i32) -> (i32, i32, i32) {
    %c0_i32 = arith.constant 0 : i32
    %c0_i32_0 = arith.constant 0 : i32
    %c0_i32_1 = arith.constant 0 : i32
    return %arg0, %c0_i32, %c0_i32_0 : i32, i32, i32
  }
  func.func @transform_1(%arg0: i32, %arg1: i32) -> (i32, i32) {
    %c0_i32 = arith.constant 0 : i32
    %c0_i32_0 = arith.constant 0 : i32
    %c0_i32_1 = arith.constant 0 : i32
    return %c0_i32, %c0_i32_0 : i32, i32
  }
  func.func @transform_2(%arg0: i32, %arg1: i32) -> (i32, i32) {
    %c0_i32 = arith.constant 0 : i32
    %c0_i32_0 = arith.constant 0 : i32
    %c0_i32_1 = arith.constant 0 : i32
    return %c0_i32, %c0_i32_0 : i32, i32
  }
  func.func @transform_3(%arg0: i32, %arg1: i32) -> (i32, i32) {
    %c0_i32 = arith.constant 0 : i32
    %c0_i32_0 = arith.constant 0 : i32
    %c0_i32_1 = arith.constant 0 : i32
    return %c0_i32, %c0_i32_0 : i32, i32
  }
  func.func @transform_4(%arg0: i32, %arg1: i32) -> (i32, i32) {
    %c0_i32 = arith.constant 0 : i32
    %c0_i32_0 = arith.constant 0 : i32
    %c0_i32_1 = arith.constant 0 : i32
    return %c0_i32, %c0_i32_0 : i32, i32
  }
  func.func @transform_5(%arg0: i32, %arg1: i32) -> (i32, i32) {
    %c0_i32 = arith.constant 0 : i32
    %c0_i32_0 = arith.constant 0 : i32
    %c0_i32_1 = arith.constant 0 : i32
    return %c0_i32, %c0_i32_0 : i32, i32
  }
  func.func @transform_6(%arg0: i32, %arg1: i32) -> (i32, i32) {
    %c0_i32 = arith.constant 0 : i32
    %c0_i32_0 = arith.constant 0 : i32
    %c0_i32_1 = arith.constant 0 : i32
    return %c0_i32, %c0_i32_0 : i32, i32
  }
  func.func @transform_7(%arg0: i32, %arg1: i32) -> (i32, i32, i32) {
    %c0_i32 = arith.constant 0 : i32
    %c0_i32_0 = arith.constant 0 : i32
    %c0_i32_1 = arith.constant 0 : i32
    %c0_i32_2 = arith.constant 0 : i32
    return %c0_i32, %c0_i32_0, %c0_i32_1 : i32, i32, i32
  }
  func.func @transform_8(%arg0: i32, %arg1: i32) -> (i32, i32) {
    %c0_i32 = arith.constant 0 : i32
    %c0_i32_0 = arith.constant 0 : i32
    %c0_i32_1 = arith.constant 0 : i32
    return %c0_i32, %c0_i32_0 : i32, i32
  }
  func.func @transform_9(%arg0: i32, %arg1: i32) -> (i32, i32, i32) {
    %c0_i32 = arith.constant 0 : i32
    %c0_i32_0 = arith.constant 0 : i32
    return %arg0, %c0_i32, %arg1 : i32, i32, i32
  }
}

</mosaic_0001>

<llo_original>
// kernel: tpu_custom_call.1
$region0: #{tpu_custom_call.1}
  #allocation0 [shape = 'u32[]', space=smem, size = 0x4, offset = 0x4, fixed_abs, tag = 'smem constant byte address 0x4 - core index']
  #allocation1 [shape = 'u32[144,128]{1,0:T(1,128)}', space=vmem, size = 0x12000, scoped, tag = 'internal scratch']
  #allocation2 [shape = 'bf16[256,32]{1,0:T(16,128)(2,1)}', space=vmem, size = 0x10000, scoped, tag = 'scratch operand']
  #allocation3 [shape = 'bf16[256,32]{1,0:T(16,128)(2,1)}', space=vmem, size = 0x10000, scoped, tag = 'scratch operand']
  %s0 = inlined_call_operand.vmem [shape: bf16[2,256,32], index: 0, kind: input, shape index: {}]
  %s1 = inlined_call_operand.vmem [shape: bf16[32,32], index: 1, kind: input, shape index: {}]
  %s2 = inlined_call_operand.vmem [shape: bf16[32,32], index: 2, kind: input, shape index: {}]
  %s3 = inlined_call_operand.vmem [shape: bf16[32,32], index: 3, kind: input, shape index: {}]
  %s4 = inlined_call_operand.vmem [shape: f32[1,32], index: 4, kind: input, shape index: {}]
  %s5 = inlined_call_operand.vmem [shape: f32[1,32], index: 5, kind: input, shape index: {}]
  %s6 = inlined_call_operand.vmem [shape: f32[1,32], index: 6, kind: input, shape index: {}]
  %s7 = inlined_call_operand.vmem [shape: bf16[4,32,8], index: 7, kind: input, shape index: {}]
  %s8 = inlined_call_operand.vmem [shape: f32[32,1], index: 8, kind: input, shape index: {}]
  %s9 = inlined_call_operand.hbm [shape: f32[2,32,256], index: 9, kind: output, shape index: {}]
  %s10 = sld [smem:[#allocation0]]
  $region73: #{tpu_custom_call.1} parent=0
    _
  %s12 = ssub.s32 1, %s10
  %s13 = scalar_select 0, %s12, %s10
  $region1: #{tpu_custom_call.1} parent=0
    #allocation4 [shape = 'u8[65536]{0}', space=vmem, size = 0x10000, scoped, tag = 'output window, operand 0']
    #allocation5 [shape = 's32[2]{0}', space=sflag, size = 0x8, scoped, tag = 'scoped memory for tpu_custom_call.1']
    %14 = vsyncpa [#allocation5], 0
    %s15 = scalar_lea.sflag [#allocation5], 1
    %16 = vsyncpa %s15, 0
    loop: start=0, step=1, limit=4
    $region2: #{tpu_custom_call.1} parent=1 // loop_pre_header
      _
    $region3: #{tpu_custom_call.1} parent=1 // loop_header
      %s18 = sphi 0, %s22
      %p19 = scmp.ge.s32.totalorder %s18, 4
      %s25 = sphi 0, %s37
      %s26 = sphi 0, %s33
      %s27 = sphi 0, %s25
      %s28 = sphi 0, %s26
      %s29 = sphi 0, %s27
      %s30 = sphi 0, %s28
      %s40 = sphi 0, %s42
      %s43 = sphi 0, %s40
      %s44 = sphi 0, %s43
      %s60 = sphi 0, %s44
      %s64 = sphi 0, %s64
      %s66 = sphi 0, %s64
      %s67 = sphi 0, %s66
      %s81 = sphi 0, %s67
      %s85 = sphi 0, %s85
      %s87 = sphi 0, %s85
      %s88 = sphi 0, %s87
      %s102 = sphi 0, %s88
      %s106 = sphi 0, %s106
      %s108 = sphi 0, %s106
      %s109 = sphi 0, %s108
      %s123 = sphi 0, %s109
      %s127 = sphi 0, %s127
      %s129 = sphi 0, %s127
      %s130 = sphi 0, %s129
      %s144 = sphi 0, %s130
      %s148 = sphi 0, %s148
      %s150 = sphi 0, %s148
      %s151 = sphi 0, %s150
      %s165 = sphi 0, %s151
      %s169 = sphi 0, %s169
      %s171 = sphi 0, %s169
      %s172 = sphi 0, %s171
      %s186 = sphi 0, %s172
      %s190 = sphi 0, %s190
      %s192 = sphi 0, %s190
      %s193 = sphi 0, %s192
      %s207 = sphi 0, %s193
      %s211 = sphi 0, %s211
      %s213 = sphi 0, %s211
      %s214 = sphi 0, %s213
      %s228 = sphi 0, %s214
      %s236 = sphi 0, %s238
      %s239 = sphi 0, %s236
      %s240 = sphi 0, %s239
      %s256 = sphi 0, %s240
    $region4: #{tpu_custom_call.1} parent=1 // loop_header_branch
      %21 = sbr.rel (%p19) target = $region8
    $region5: #{tpu_custom_call.1} parent=1 // loop_body
      %s23 = ssub.s32 %s18, 1
      %s24 = ssub.s32 %s18, 2
      %s31 = sadd.s32 1, %s26
      %p32 = scmp.ge.s32.totalorder %s31, 1
      %s33 = scalar_select %p32, 0, %s31
      %s34 = sadd.s32 1, %s25
      %s35 = scalar_select %p32, %s34, %s25
      %p36 = scmp.ge.s32.totalorder %s35, 2
      %s37 = scalar_select %p36, 0, %s35
      %s38 = ssub.s32 %s25, %s37
      %p39 = scmp.eq.s32.totalorder %s38, 0
      %s41 = sadd.s32 %s40, 1
      %s42 = scalar_select %p39, %s40, %s41
      %p45 = pneg %p39
      %p46 = scmp.eq.s32.totalorder %s18, 1
      %p47 = por %p45, %p46
      %p48 = scmp.ne.s32.totalorder %s40, %s43
      %p49 = scmp.eq.s32.totalorder %s18, 0
      %p50 = por %p48, %p49
      %p51 = scmp.ne.s32.totalorder %s40, %s43
      %p52 = scmp.eq.s32.totalorder %s23, 1
      %p53 = por %p51, %p52
      %p54 = scmp.ne.s32.totalorder %s43, %s44
      %p55 = scmp.eq.s32.totalorder %s23, 0
      %p56 = por %p54, %p55
      %p57 = scmp.ne.s32.totalorder %s43, %s44
      %p58 = scmp.eq.s32.totalorder %s24, 1
      %p59 = por %p57, %p58
      %p61 = scmp.ne.s32.totalorder %s44, %s60
      %p62 = scmp.eq.s32.totalorder %s24, 0
      %p63 = por %p61, %p62
      %s65 = sadd.s32 %s64, 1
      %p68 = scmp.eq.s32.totalorder %s18, 1
      %p69 = scmp.ne.s32.totalorder %s64, %s66
      %p70 = scmp.eq.s32.totalorder %s18, 0
      %p71 = por %p69, %p70
      %p72 = scmp.ne.s32.totalorder %s64, %s66
      %p73 = scmp.eq.s32.totalorder %s23, 1
      %p74 = por %p72, %p73
      %p75 = scmp.ne.s32.totalorder %s66, %s67
      %p76 = scmp.eq.s32.totalorder %s23, 0
      %p77 = por %p75, %p76
      %p78 = scmp.ne.s32.totalorder %s66, %s67
      %p79 = scmp.eq.s32.totalorder %s24, 1
      %p80 = por %p78, %p79
      %p82 = scmp.ne.s32.totalorder %s67, %s81
      %p83 = scmp.eq.s32.totalorder %s24, 0
      %p84 = por %p82, %p83
      %s86 = sadd.s32 %s85, 1
      %p89 = scmp.eq.s32.totalorder %s18, 1
      %p90 = scmp.ne.s32.totalorder %s85, %s87
      %p91 = scmp.eq.s32.totalorder %s18, 0
      %p92 = por %p90, %p91
      %p93 = scmp.ne.s32.totalorder %s85, %s87
      %p94 = scmp.eq.s32.totalorder %s23, 1
      %p95 = por %p93, %p94
      %p96 = scmp.ne.s32.totalorder %s87, %s88
      %p97 = scmp.eq.s32.totalorder %s23, 0
      %p98 = por %p96, %p97
      %p99 = scmp.ne.s32.totalorder %s87, %s88
      %p100 = scmp.eq.s32.totalorder %s24, 1
      %p101 = por %p99, %p100
      %p103 = scmp.ne.s32.totalorder %s88, %s102
      %p104 = scmp.eq.s32.totalorder %s24, 0
      %p105 = por %p103, %p104
      %s107 = sadd.s32 %s106, 1
      %p110 = scmp.eq.s32.totalorder %s18, 1
      %p111 = scmp.ne.s32.totalorder %s106, %s108
      %p112 = scmp.eq.s32.totalorder %s18, 0
      %p113 = por %p111, %p112
      %p114 = scmp.ne.s32.totalorder %s106, %s108
      %p115 = scmp.eq.s32.totalorder %s23, 1
      %p116 = por %p114, %p115
      %p117 = scmp.ne.s32.totalorder %s108, %s109
      %p118 = scmp.eq.s32.totalorder %s23, 0
      %p119 = por %p117, %p118
      %p120 = scmp.ne.s32.totalorder %s108, %s109
      %p121 = scmp.eq.s32.totalorder %s24, 1
      %p122 = por %p120, %p121
      %p124 = scmp.ne.s32.totalorder %s109, %s123
      %p125 = scmp.eq.s32.totalorder %s24, 0
      %p126 = por %p124, %p125
      %s128 = sadd.s32 %s127, 1
      %p131 = scmp.eq.s32.totalorder %s18, 1
      %p132 = scmp.ne.s32.totalorder %s127, %s129
      %p133 = scmp.eq.s32.totalorder %s18, 0
      %p134 = por %p132, %p133
      %p135 = scmp.ne.s32.totalorder %s127, %s129
      %p136 = scmp.eq.s32.totalorder %s23, 1
      %p137 = por %p135, %p136
      %p138 = scmp.ne.s32.totalorder %s129, %s130
      %p139 = scmp.eq.s32.totalorder %s23, 0
      %p140 = por %p138, %p139
      %p141 = scmp.ne.s32.totalorder %s129, %s130
      %p142 = scmp.eq.s32.totalorder %s24, 1
      %p143 = por %p141, %p142
      %p145 = scmp.ne.s32.totalorder %s130, %s144
      %p146 = scmp.eq.s32.totalorder %s24, 0
      %p147 = por %p145, %p146
      %s149 = sadd.s32 %s148, 1
      %p152 = scmp.eq.s32.totalorder %s18, 1
      %p153 = scmp.ne.s32.totalorder %s148, %s150
      %p154 = scmp.eq.s32.totalorder %s18, 0
      %p155 = por %p153, %p154
      %p156 = scmp.ne.s32.totalorder %s148, %s150
      %p157 = scmp.eq.s32.totalorder %s23, 1
      %p158 = por %p156, %p157
      %p159 = scmp.ne.s32.totalorder %s150, %s151
      %p160 = scmp.eq.s32.totalorder %s23, 0
      %p161 = por %p159, %p160
      %p162 = scmp.ne.s32.totalorder %s150, %s151
      %p163 = scmp.eq.s32.totalorder %s24, 1
      %p164 = por %p162, %p163
      %p166 = scmp.ne.s32.totalorder %s151, %s165
      %p167 = scmp.eq.s32.totalorder %s24, 0
      %p168 = por %p166, %p167
      %s170 = sadd.s32 %s169, 1
      %p173 = scmp.eq.s32.totalorder %s18, 1
      %p174 = scmp.ne.s32.totalorder %s169, %s171
      %p175 = scmp.eq.s32.totalorder %s18, 0
      %p176 = por %p174, %p175
      %p177 = scmp.ne.s32.totalorder %s169, %s171
      %p178 = scmp.eq.s32.totalorder %s23, 1
      %p179 = por %p177, %p178
      %p180 = scmp.ne.s32.totalorder %s171, %s172
      %p181 = scmp.eq.s32.totalorder %s23, 0
      %p182 = por %p180, %p181
      %p183 = scmp.ne.s32.totalorder %s171, %s172
      %p184 = scmp.eq.s32.totalorder %s24, 1
      %p185 = por %p183, %p184
      %p187 = scmp.ne.s32.totalorder %s172, %s186
      %p188 = scmp.eq.s32.totalorder %s24, 0
      %p189 = por %p187, %p188
      %s191 = sadd.s32 %s190, 1
      %p194 = scmp.eq.s32.totalorder %s18, 1
      %p195 = scmp.ne.s32.totalorder %s190, %s192
      %p196 = scmp.eq.s32.totalorder %s18, 0
      %p197 = por %p195, %p196
      %p198 = scmp.ne.s32.totalorder %s190, %s192
      %p199 = scmp.eq.s32.totalorder %s23, 1
      %p200 = por %p198, %p199
      %p201 = scmp.ne.s32.totalorder %s192, %s193
      %p202 = scmp.eq.s32.totalorder %s23, 0
      %p203 = por %p201, %p202
      %p204 = scmp.ne.s32.totalorder %s192, %s193
      %p205 = scmp.eq.s32.totalorder %s24, 1
      %p206 = por %p204, %p205
      %p208 = scmp.ne.s32.totalorder %s193, %s207
      %p209 = scmp.eq.s32.totalorder %s24, 0
      %p210 = por %p208, %p209
      %s212 = sadd.s32 %s211, 1
      %p215 = scmp.eq.s32.totalorder %s18, 1
      %p216 = scmp.ne.s32.totalorder %s211, %s213
      %p217 = scmp.eq.s32.totalorder %s18, 0
      %p218 = por %p216, %p217
      %p219 = scmp.ne.s32.totalorder %s211, %s213
      %p220 = scmp.eq.s32.totalorder %s23, 1
      %p221 = por %p219, %p220
      %p222 = scmp.ne.s32.totalorder %s213, %s214
      %p223 = scmp.eq.s32.totalorder %s23, 0
      %p224 = por %p222, %p223
      %p225 = scmp.ne.s32.totalorder %s213, %s214
      %p226 = scmp.eq.s32.totalorder %s24, 1
      %p227 = por %p225, %p226
      %p229 = scmp.ne.s32.totalorder %s214, %s228
      %p230 = scmp.eq.s32.totalorder %s24, 0
      %p231 = por %p229, %p230
      %s232 = ssub.s32 %s25, %s37
      %s233 = ssub.s32 %s26, %s33
      %s234 = sor.u32 %s232, %s233
      %p235 = scmp.eq.s32.totalorder %s234, 0
      %s237 = sadd.s32 %s236, 1
      %s238 = scalar_select %p235, %s236, %s237
      %p241 = pneg %p235
      %p242 = scmp.eq.s32.totalorder %s18, 1
      %p243 = por %p241, %p242
      %p244 = scmp.ne.s32.totalorder %s236, %s239
      %p245 = scmp.eq.s32.totalorder %s18, 0
      %p246 = por %p244, %p245
      %p247 = scmp.ne.s32.totalorder %s236, %s239
      %p248 = scmp.eq.s32.totalorder %s23, 1
      %p249 = por %p247, %p248
      %p250 = scmp.ne.s32.totalorder %s239, %s240
      %p251 = scmp.eq.s32.totalorder %s23, 0
      %p252 = por %p250, %p251
      %p253 = scmp.ne.s32.totalorder %s239, %s240
      %p254 = scmp.eq.s32.totalorder %s24, 1
      %p255 = por %p253, %p254
      %p257 = scmp.ne.s32.totalorder %s240, %s256
      %p258 = scmp.eq.s32.totalorder %s24, 0
      %p259 = por %p257, %p258
      %p260 = scmp.le.s32.totalorder 1, %s18
      %p261 = scmp.lt.s32.totalorder %s18, 3
      %p262 = pnand %p260, %p261
      %p263 = pneg %p262
      // Predicated region
      $region9: #{tpu_custom_call.1} parent=5 // pred_check
        _
      $region10: #{tpu_custom_call.1} parent=5 // pred_check_branch
        %265 = sbr.rel (%p262) target = $region12
      $region11: #{tpu_custom_call.1} parent=5 // pred_region
        %s266 = ssub.s32 %s18, 1
        // Predicated region
        $region13: #{tpu_custom_call.1} parent=11 // pred_check
          %p267 = pneg %p77
        $region14: #{tpu_custom_call.1} parent=11 // pred_check_branch
          %269 = sbr.rel (%p267) target = $region16
        $region15: #{tpu_custom_call.1} parent=11 // pred_region
          _
        $region16: #{tpu_custom_call.1} parent=11 // pred_fallthru
          _
        // Predicated region
        $region17: #{tpu_custom_call.1} parent=11 // pred_check
          %p270 = pneg %p98
        $region18: #{tpu_custom_call.1} parent=11 // pred_check_branch
          %272 = sbr.rel (%p270) target = $region20
        $region19: #{tpu_custom_call.1} parent=11 // pred_region
          _
        $region20: #{tpu_custom_call.1} parent=11 // pred_fallthru
          _
        // Predicated region
        $region21: #{tpu_custom_call.1} parent=11 // pred_check
          %p273 = pneg %p119
        $region22: #{tpu_custom_call.1} parent=11 // pred_check_branch
          %275 = sbr.rel (%p273) target = $region24
        $region23: #{tpu_custom_call.1} parent=11 // pred_region
          _
        $region24: #{tpu_custom_call.1} parent=11 // pred_fallthru
          _
        // Predicated region
        $region25: #{tpu_custom_call.1} parent=11 // pred_check
          %p276 = pneg %p140
        $region26: #{tpu_custom_call.1} parent=11 // pred_check_branch
          %278 = sbr.rel (%p276) target = $region28
        $region27: #{tpu_custom_call.1} parent=11 // pred_region
          _
        $region28: #{tpu_custom_call.1} parent=11 // pred_fallthru
          _
        // Predicated region
        $region29: #{tpu_custom_call.1} parent=11 // pred_check
          %p279 = pneg %p161
        $region30: #{tpu_custom_call.1} parent=11 // pred_check_branch
          %281 = sbr.rel (%p279) target = $region32
        $region31: #{tpu_custom_call.1} parent=11 // pred_region
          _
        $region32: #{tpu_custom_call.1} parent=11 // pred_fallthru
          _
        // Predicated region
        $region33: #{tpu_custom_call.1} parent=11 // pred_check
          %p282 = pneg %p182
        $region34: #{tpu_custom_call.1} parent=11 // pred_check_branch
          %284 = sbr.rel (%p282) target = $region36
        $region35: #{tpu_custom_call.1} parent=11 // pred_region
          _
        $region36: #{tpu_custom_call.1} parent=11 // pred_fallthru
          _
        // Predicated region
        $region37: #{tpu_custom_call.1} parent=11 // pred_check
          %p285 = pneg %p203
        $region38: #{tpu_custom_call.1} parent=11 // pred_check_branch
          %287 = sbr.rel (%p285) target = $region40
        $region39: #{tpu_custom_call.1} parent=11 // pred_region
          _
        $region40: #{tpu_custom_call.1} parent=11 // pred_fallthru
          _
        // Predicated region
        $region41: #{tpu_custom_call.1} parent=11 // pred_check
          %p288 = pneg %p224
        $region42: #{tpu_custom_call.1} parent=11 // pred_check_branch
          %290 = sbr.rel (%p288) target = $region44
        $region43: #{tpu_custom_call.1} parent=11 // pred_region
          _
        $region44: #{tpu_custom_call.1} parent=11 // pred_fallthru
          _
      $region12: #{tpu_custom_call.1} parent=5 // pred_fallthru
        _
      %p291 = scmp.lt.s32.totalorder %s18, 2
      // Predicated region
      $region45: #{tpu_custom_call.1} parent=5 // pred_check
        %p292 = pneg %p291
      $region46: #{tpu_custom_call.1} parent=5 // pred_check_branch
        %294 = sbr.rel (%p292) target = $region48
      $region47: #{tpu_custom_call.1} parent=5 // pred_region
        // Predicated region
        $region49: #{tpu_custom_call.1} parent=47 // pred_check
          %p295 = pneg %p50
        $region50: #{tpu_custom_call.1} parent=47 // pred_check_branch
          %297 = sbr.rel (%p295) target = $region52
        $region51: #{tpu_custom_call.1} parent=47 // pred_region
          %p298 = scmp.lt.s32.totalorder %s25, 1
          %s299 = scalar_select %p298, %s25, 1
          %s300 = smul.addr %s299, 32
          %s301 = smul.addr %s300, 4
          %s302 = scalar_lea.vmem %s0, %s301
        $region52: #{tpu_custom_call.1} parent=47 // pred_fallthru
          _
      $region48: #{tpu_custom_call.1} parent=5 // pred_fallthru
        _
      %p303 = scmp.le.s32.totalorder 1, %s18
      %p304 = scmp.lt.s32.totalorder %s18, 3
      %p305 = pnand %p303, %p304
      %p306 = pneg %p305
      // Predicated region
      $region53: #{tpu_custom_call.1} parent=5 // pred_check
        _
      $region54: #{tpu_custom_call.1} parent=5 // pred_check_branch
        %308 = sbr.rel (%p305) target = $region56
      $region55: #{tpu_custom_call.1} parent=5 // pred_region
        %s309 = ssub.s32 %s18, 1
        %p310 = scmp.lt.s32.totalorder %s27, 1
        %s311 = scalar_select %p310, %s27, 1
        %s312 = smul.addr %s311, 32
        %s313 = smul.addr %s312, 4
        %s314 = scalar_lea.vmem %s0, %s313
        %p315 = pneg %p56
        %p316 = pneg %p53
        %p317 = pneg %p77
        %p318 = pneg %p74
        %p319 = pneg %p98
        %p320 = pneg %p95
        %p321 = pneg %p119
        %p322 = pneg %p116
        %p323 = pneg %p140
        %p324 = pneg %p137
        %p325 = pneg %p161
        %p326 = pneg %p158
        %p327 = pneg %p182
        %p328 = pneg %p179
        %p329 = pneg %p203
        %p330 = pneg %p200
        %p331 = pneg %p224
        %p332 = pneg %p221
        %p333 = pneg %p252
        %p334 = pneg %p249
        %s335 = sand.u32 %s239, 1
        %s336 = scalar_lea.sflag [#allocation5], %s335
        %s337 = sand.u32 %s239, 1
        %s338 = smul.addr %s337, 64
        %s339 = scalar_lea.vmem [#allocation4], %s338
        %p340 = scmp.lt.s32.totalorder %s27, 1
        %s341 = scalar_select %p340, %s27, 1
        %s342 = smul.addr %s341, 32
        %s343 = smul.addr %s342, 4
        %s344 = scalar_lea.vmem %s0, %s343
        %s345 = smul.u32 2, %s28
        %p347 = scmp.eq.s32.totalorder %s28, 0
        // Predicated region
        $region57: #{tpu_custom_call.1} parent=55 // pred_check
          %p348 = pneg %p347
        $region58: #{tpu_custom_call.1} parent=55 // pred_check_branch
          %350 = sbr.rel (%p348) target = $region60
        $region59: #{tpu_custom_call.1} parent=55 // pred_region
          %v351 = vld [vmem:[%s344] sm:$0xf]
          %v352 = vld [vmem:[%s344 + $0x4] sm:$0xf]
          %v353 = vld [vmem:[%s344 + $0x8] sm:$0xf]
          %v354 = vld [vmem:[%s344 + $0xc] sm:$0xf]
          %v355 = vld [vmem:[%s344 + $0x10] sm:$0xf]
          %v356 = vld [vmem:[%s344 + $0x14] sm:$0xf]
          %v357 = vld [vmem:[%s344 + $0x18] sm:$0xf]
          %v358 = vld [vmem:[%s344 + $0x1c] sm:$0xf]
          %v359 = vld [vmem:[%s344 + $0x20] sm:$0xf]
          %v360 = vld [vmem:[%s344 + $0x24] sm:$0xf]
          %v361 = vld [vmem:[%s344 + $0x28] sm:$0xf]
          %v362 = vld [vmem:[%s344 + $0x2c] sm:$0xf]
          %v363 = vld [vmem:[%s344 + $0x30] sm:$0xf]
          %v364 = vld [vmem:[%s344 + $0x34] sm:$0xf]
          %v365 = vld [vmem:[%s344 + $0x38] sm:$0xf]
          %v366 = vld [vmem:[%s344 + $0x3c] sm:$0xf]
          %v367 = vld [vmem:[%s344 + $0x40] sm:$0xf]
          %v368 = vld [vmem:[%s344 + $0x44] sm:$0xf]
          %v369 = vld [vmem:[%s344 + $0x48] sm:$0xf]
          %v370 = vld [vmem:[%s344 + $0x4c] sm:$0xf]
          %v371 = vld [vmem:[%s344 + $0x50] sm:$0xf]
          %v372 = vld [vmem:[%s344 + $0x54] sm:$0xf]
          %v373 = vld [vmem:[%s344 + $0x58] sm:$0xf]
          %v374 = vld [vmem:[%s344 + $0x5c] sm:$0xf]
          %v375 = vld [vmem:[%s344 + $0x60] sm:$0xf]
          %v376 = vld [vmem:[%s344 + $0x64] sm:$0xf]
          %v377 = vld [vmem:[%s344 + $0x68] sm:$0xf]
          %v378 = vld [vmem:[%s344 + $0x6c] sm:$0xf]
          %v379 = vld [vmem:[%s344 + $0x70] sm:$0xf]
          %v380 = vld [vmem:[%s344 + $0x74] sm:$0xf]
          %v381 = vld [vmem:[%s344 + $0x78] sm:$0xf]
          %v382 = vld [vmem:[%s344 + $0x7c] sm:$0xf]
          %v383 = vld [vmem:[%s2] sm:$0xf]
          %v384 = vld [vmem:[%s2 + $0x4] sm:$0xf]
          %v385 = vld [vmem:[%s2 + $0x8] sm:$0xf]
          %v386 = vld [vmem:[%s2 + $0xc] sm:$0xf]
          %v387 = vld [vmem:[%s5] sm:$0x1]
          %v389 = vlaneseq
          %v390 = vshrl.u32 %v389, 7
          %v391 = vsub.s32 0, %v390
          %v392 = vrot.slane %v387, %v391
          %v426 = vunpack.c.l.b16 %v351
          %v427 = vunpack.c.l.b16 %v352
          %v428 = vunpack.c.l.b16 %v353
          %v429 = vunpack.c.l.b16 %v354
          %v430 = vunpack.c.l.b16 %v355
          %v431 = vunpack.c.l.b16 %v356
          %v432 = vunpack.c.l.b16 %v357
          %v433 = vunpack.c.l.b16 %v358
          %v434 = vunpack.c.l.b16 %v359
          %v435 = vunpack.c.l.b16 %v360
          %v436 = vunpack.c.l.b16 %v361
          %v437 = vunpack.c.l.b16 %v362
          %v438 = vunpack.c.l.b16 %v363
          %v439 = vunpack.c.l.b16 %v364
          %v440 = vunpack.c.l.b16 %v365
          %v441 = vunpack.c.l.b16 %v366
          %v442 = vunpack.c.l.b16 %v367
          %v443 = vunpack.c.l.b16 %v368
          %v444 = vunpack.c.l.b16 %v369
          %v445 = vunpack.c.l.b16 %v370
          %v446 = vunpack.c.l.b16 %v371
          %v447 = vunpack.c.l.b16 %v372
          %v448 = vunpack.c.l.b16 %v373
          %v449 = vunpack.c.l.b16 %v374
          %v450 = vunpack.c.l.b16 %v375
          %v451 = vunpack.c.l.b16 %v376
          %v452 = vunpack.c.l.b16 %v377
          %v453 = vunpack.c.l.b16 %v378
          %v454 = vunpack.c.l.b16 %v379
          %v455 = vunpack.c.l.b16 %v380
          %v456 = vunpack.c.l.b16 %v381
          %v457 = vunpack.c.l.b16 %v382
          %v458 = vpack.c.b16 %v427, %v426
          %v459 = vpack.c.b16 %v429, %v428
          %v460 = vpack.c.b16 %v431, %v430
          %v461 = vpack.c.b16 %v433, %v432
          %v462 = vpack.c.b16 %v435, %v434
          %v463 = vpack.c.b16 %v437, %v436
          %v464 = vpack.c.b16 %v439, %v438
          %v465 = vpack.c.b16 %v441, %v440
          %v466 = vpack.c.b16 %v443, %v442
          %v467 = vpack.c.b16 %v445, %v444
          %v468 = vpack.c.b16 %v447, %v446
          %v469 = vpack.c.b16 %v449, %v448
          %v470 = vpack.c.b16 %v451, %v450
          %v471 = vpack.c.b16 %v453, %v452
          %v472 = vpack.c.b16 %v455, %v454
          %v473 = vpack.c.b16 %v457, %v456
          %v478 = vunpack.c.l.b16 %v383
          %v479 = vunpack.c.l.b16 %v384
          %v480 = vunpack.c.l.b16 %v385
          %v481 = vunpack.c.l.b16 %v386
          %v482 = vpack.c.b16 %v479, %v478
          %v483 = vpack.c.b16 %v481, %v480
          %vm486 = vcmask 261120
          %v488 = vsel %vm486, %v458, 0
          %v491 = vsel %vm486, %v459, 0
          %v494 = vsel %vm486, %v460, 0
          %v497 = vsel %vm486, %v461, 0
          %v500 = vsel %vm486, %v462, 0
          %v503 = vsel %vm486, %v463, 0
          %v506 = vsel %vm486, %v464, 0
          %v509 = vsel %vm486, %v465, 0
          %v512 = vsel %vm486, %v466, 0
          %v515 = vsel %vm486, %v467, 0
          %v518 = vsel %vm486, %v468, 0
          %v521 = vsel %vm486, %v469, 0
          %v524 = vsel %vm486, %v470, 0
          %v527 = vsel %vm486, %v471, 0
          %v530 = vsel %vm486, %v472, 0
          %v533 = vsel %vm486, %v473, 0
          %535 = vmatprep.subr.bf16.mxu0 0
          %536 = vmatpush1.bf16.msra.mxu0 %v482
          %537 = vmatprep.subr.bf16.mxu0 0
          %538 = vmatpush1.bf16.msra.mxu0 %v483
          %539 = vmatprep.subr.bf16.mxu0 0
          %540 = vmatpush1.bf16.msra.mxu0 0
          %541 = vmatprep.subr.bf16.mxu0 0
          %542 = vmatpush1.bf16.msra.mxu0 0
          %543 = vmatprep.subr.bf16.mxu0 0
          %544 = vmatpush1.bf16.msra.mxu0 0
          %545 = vmatprep.subr.bf16.mxu0 0
          %546 = vmatpush1.bf16.msra.mxu0 0
          %547 = vmatprep.subr.bf16.mxu0 0
          %548 = vmatpush1.bf16.msra.mxu0 0
          %549 = vmatprep.subr.bf16.mxu0 0
          %550 = vmatpush1.bf16.msra.mxu0 0
          %551 = vmatprep.subr.bf16.mxu0 0
          %552 = vmatpush1.bf16.msra.mxu0 0
          %553 = vmatprep.subr.bf16.mxu0 0
          %554 = vmatpush1.bf16.msra.mxu0 0
          %555 = vmatprep.subr.bf16.mxu0 0
          %556 = vmatpush1.bf16.msra.mxu0 0
          %557 = vmatprep.subr.bf16.mxu0 0
          %558 = vmatpush1.bf16.msra.mxu0 0
          %559 = vmatprep.subr.bf16.mxu0 0
          %560 = vmatpush1.bf16.msra.mxu0 0
          %561 = vmatprep.subr.bf16.mxu0 0
          %562 = vmatpush1.bf16.msra.mxu0 0
          %563 = vmatprep.subr.bf16.mxu0 0
          %564 = vmatpush1.bf16.msra.mxu0 0
          %565 = vmatprep.subr.bf16.mxu0 0
          %566 = vmatpush1.bf16.msra.mxu0 0
          %567 = vmatprep.mubr.bf16.mxu0 0
          %568 = vmatmul.mubr.bf16.gmra.mrb[0].mxu0 %v488
          %v569 = vpop.f32.mrb[0].mxu0
          %v570 = vadd.f32 %v392, %v569
          %v571 = vpop.f32.mrb[0].mxu0
          %v572 = vpop.f32.mrb[0].mxu0
          %v573 = vadd.f32 %v392, %v572
          %v574 = vpop.f32.mrb[0].mxu0
          %575 = vmatprep.mubr.bf16.mxu0 0
          %576 = vmatmul.mubr.bf16.gmra.mrb[0].mxu0 %v491
          %v577 = vpop.f32.mrb[0].mxu0
          %v578 = vadd.f32 %v392, %v577
          %v579 = vpop.f32.mrb[0].mxu0
          %v580 = vpop.f32.mrb[0].mxu0
          %v581 = vadd.f32 %v392, %v580
          %v582 = vpop.f32.mrb[0].mxu0
          %583 = vmatprep.mubr.bf16.mxu0 0
          %584 = vmatmul.mubr.bf16.gmra.mrb[0].mxu0 %v494
          %v585 = vpop.f32.mrb[0].mxu0
          %v586 = vadd.f32 %v392, %v585
          %v587 = vpop.f32.mrb[0].mxu0
          %v588 = vpop.f32.mrb[0].mxu0
          %v589 = vadd.f32 %v392, %v588
          %v590 = vpop.f32.mrb[0].mxu0
          %591 = vmatprep.mubr.bf16.mxu0 0
          %592 = vmatmul.mubr.bf16.gmra.mrb[0].mxu0 %v497
          %v593 = vpop.f32.mrb[0].mxu0
          %v594 = vadd.f32 %v392, %v593
          %v595 = vpop.f32.mrb[0].mxu0
          %v596 = vpop.f32.mrb[0].mxu0
          %v597 = vadd.f32 %v392, %v596
          %v598 = vpop.f32.mrb[0].mxu0
          %599 = vmatprep.mubr.bf16.mxu0 0
          %600 = vmatmul.mubr.bf16.gmra.mrb[0].mxu0 %v500
          %v601 = vpop.f32.mrb[0].mxu0
          %v602 = vadd.f32 %v392, %v601
          %v603 = vpop.f32.mrb[0].mxu0
          %v604 = vpop.f32.mrb[0].mxu0
          %v605 = vadd.f32 %v392, %v604
          %v606 = vpop.f32.mrb[0].mxu0
          %607 = vmatprep.mubr.bf16.mxu0 0
          %608 = vmatmul.mubr.bf16.gmra.mrb[0].mxu0 %v503
          %v609 = vpop.f32.mrb[0].mxu0
          %v610 = vadd.f32 %v392, %v609
          %v611 = vpop.f32.mrb[0].mxu0
          %v612 = vpop.f32.mrb[0].mxu0
          %v613 = vadd.f32 %v392, %v612
          %v614 = vpop.f32.mrb[0].mxu0
          %615 = vmatprep.mubr.bf16.mxu0 0
          %616 = vmatmul.mubr.bf16.gmra.mrb[0].mxu0 %v506
          %v617 = vpop.f32.mrb[0].mxu0
          %v618 = vadd.f32 %v392, %v617
          %v619 = vpop.f32.mrb[0].mxu0
          %v620 = vpop.f32.mrb[0].mxu0
          %v621 = vadd.f32 %v392, %v620
          %v622 = vpop.f32.mrb[0].mxu0
          %623 = vmatprep.mubr.bf16.mxu0 0
          %624 = vmatmul.mubr.bf16.gmra.mrb[0].mxu0 %v509
          %v625 = vpop.f32.mrb[0].mxu0
          %v626 = vadd.f32 %v392, %v625
          %v627 = vpop.f32.mrb[0].mxu0
          %v628 = vpop.f32.mrb[0].mxu0
          %v629 = vadd.f32 %v392, %v628
          %v630 = vpop.f32.mrb[0].mxu0
          %631 = vmatprep.mubr.bf16.mxu0 0
          %632 = vmatmul.mubr.bf16.gmra.mrb[0].mxu0 %v512
          %v633 = vpop.f32.mrb[0].mxu0
          %v634 = vadd.f32 %v392, %v633
          %v635 = vpop.f32.mrb[0].mxu0
          %v636 = vpop.f32.mrb[0].mxu0
          %v637 = vadd.f32 %v392, %v636
          %v638 = vpop.f32.mrb[0].mxu0
          %639 = vmatprep.mubr.bf16.mxu0 0
          %640 = vmatmul.mubr.bf16.gmra.mrb[0].mxu0 %v515
          %v641 = vpop.f32.mrb[0].mxu0
          %v642 = vadd.f32 %v392, %v641
          %v643 = vpop.f32.mrb[0].mxu0
          %v644 = vpop.f32.mrb[0].mxu0
          %v645 = vadd.f32 %v392, %v644
          %v646 = vpop.f32.mrb[0].mxu0
          %647 = vmatprep.mubr.bf16.mxu0 0
          %648 = vmatmul.mubr.bf16.gmra.mrb[0].mxu0 %v518
          %v649 = vpop.f32.mrb[0].mxu0
          %v650 = vadd.f32 %v392, %v649
          %v651 = vpop.f32.mrb[0].mxu0
          %v652 = vpop.f32.mrb[0].mxu0
          %v653 = vadd.f32 %v392, %v652
          %v654 = vpop.f32.mrb[0].mxu0
          %655 = vmatprep.mubr.bf16.mxu0 0
          %656 = vmatmul.mubr.bf16.gmra.mrb[0].mxu0 %v521
          %v657 = vpop.f32.mrb[0].mxu0
          %v658 = vadd.f32 %v392, %v657
          %v659 = vpop.f32.mrb[0].mxu0
          %v660 = vpop.f32.mrb[0].mxu0
          %v661 = vadd.f32 %v392, %v660
          %v662 = vpop.f32.mrb[0].mxu0
          %663 = vmatprep.mubr.bf16.mxu0 0
          %664 = vmatmul.mubr.bf16.gmra.mrb[0].mxu0 %v524
          %v665 = vpop.f32.mrb[0].mxu0
          %v666 = vadd.f32 %v392, %v665
          %v667 = vpop.f32.mrb[0].mxu0
          %v668 = vpop.f32.mrb[0].mxu0
          %v669 = vadd.f32 %v392, %v668
          %v670 = vpop.f32.mrb[0].mxu0
          %671 = vmatprep.mubr.bf16.mxu0 0
          %672 = vmatmul.mubr.bf16.gmra.mrb[0].mxu0 %v527
          %v673 = vpop.f32.mrb[0].mxu0
          %v674 = vadd.f32 %v392, %v673
          %v675 = vpop.f32.mrb[0].mxu0
          %v676 = vpop.f32.mrb[0].mxu0
          %v677 = vadd.f32 %v392, %v676
          %v678 = vpop.f32.mrb[0].mxu0
          %679 = vmatprep.mubr.bf16.mxu0 0
          %680 = vmatmul.mubr.bf16.gmra.mrb[0].mxu0 %v530
          %v681 = vpop.f32.mrb[0].mxu0
          %v682 = vadd.f32 %v392, %v681
          %v683 = vpop.f32.mrb[0].mxu0
          %v684 = vpop.f32.mrb[0].mxu0
          %v685 = vadd.f32 %v392, %v684
          %v686 = vpop.f32.mrb[0].mxu0
          %687 = vmatprep.mubr.bf16.mxu0 0
          %688 = vmatmul.mubr.bf16.gmra.mrb[0].mxu0 %v533
          %v689 = vpop.f32.mrb[0].mxu0
          %v690 = vadd.f32 %v392, %v689
          %v691 = vpop.f32.mrb[0].mxu0
          %v692 = vpop.f32.mrb[0].mxu0
          %v693 = vadd.f32 %v392, %v692
          %v694 = vpop.f32.mrb[0].mxu0
          %695 = vdwg.mxu0
          %v696 = vld [vmem:[%s3] sm:$0xf]
          %v697 = vld [vmem:[%s3 + $0x4] sm:$0xf]
          %v698 = vld [vmem:[%s3 + $0x8] sm:$0xf]
          %v699 = vld [vmem:[%s3 + $0xc] sm:$0xf]
          %v700 = vld [vmem:[%s6] sm:$0x1]
          %v702 = vlaneseq
          %v703 = vshrl.u32 %v702, 7
          %v704 = vsub.s32 0, %v703
          %v705 = vrot.slane %v700, %v704
          %v711 = vunpack.c.l.b16 %v696
          %v712 = vunpack.c.l.b16 %v697
          %v713 = vunpack.c.l.b16 %v698
          %v714 = vunpack.c.l.b16 %v699
          %v715 = vpack.c.b16 %v712, %v711
          %v716 = vpack.c.b16 %v714, %v713
          %719 = vmatprep.subr.bf16.mxu0 0
          %720 = vmatpush1.bf16.msra.mxu0 %v715
          %721 = vmatprep.subr.bf16.mxu0 0
          %722 = vmatpush1.bf16.msra.mxu0 %v716
          %723 = vmatprep.subr.bf16.mxu0 0
          %724 = vmatpush1.bf16.msra.mxu0 0
          %725 = vmatprep.subr.bf16.mxu0 0
          %726 = vmatpush1.bf16.msra.mxu0 0
          %727 = vmatprep.subr.bf16.mxu0 0
          %728 = vmatpush1.bf16.msra.mxu0 0
          %729 = vmatprep.subr.bf16.mxu0 0
          %730 = vmatpush1.bf16.msra.mxu0 0
          %731 = vmatprep.subr.bf16.mxu0 0
          %732 = vmatpush1.bf16.msra.mxu0 0
          %733 = vmatprep.subr.bf16.mxu0 0
          %734 = vmatpush1.bf16.msra.mxu0 0
          %735 = vmatprep.subr.bf16.mxu0 0
          %736 = vmatpush1.bf16.msra.mxu0 0
          %737 = vmatprep.subr.bf16.mxu0 0
          %738 = vmatpush1.bf16.msra.mxu0 0
          %739 = vmatprep.subr.bf16.mxu0 0
          %740 = vmatpush1.bf16.msra.mxu0 0
          %741 = vmatprep.subr.bf16.mxu0 0
          %742 = vmatpush1.bf16.msra.mxu0 0
          %743 = vmatprep.subr.bf16.mxu0 0
          %744 = vmatpush1.bf16.msra.mxu0 0
          %745 = vmatprep.subr.bf16.mxu0 0
          %746 = vmatpush1.bf16.msra.mxu0 0
          %747 = vmatprep.subr.bf16.mxu0 0
          %748 = vmatpush1.bf16.msra.mxu0 0
          %749 = vmatprep.subr.bf16.mxu0 0
          %750 = vmatpush1.bf16.msra.mxu0 0
          %751 = vmatprep.mubr.bf16.mxu0 0
          %752 = vmatmul.mubr.bf16.gmra.mrb[0].mxu0 %v488
          %v753 = vpop.f32.mrb[0].mxu0
          %v754 = vadd.f32 %v705, %v753
          %v755 = vpop.f32.mrb[0].mxu0
          %v756 = vpop.f32.mrb[0].mxu0
          %v757 = vadd.f32 %v705, %v756
          %v758 = vpop.f32.mrb[0].mxu0
          %759 = vmatprep.mubr.bf16.mxu0 0
          %760 = vmatmul.mubr.bf16.gmra.mrb[0].mxu0 %v491
          %v761 = vpop.f32.mrb[0].mxu0
          %v762 = vadd.f32 %v705, %v761
          %v763 = vpop.f32.mrb[0].mxu0
          %v764 = vpop.f32.mrb[0].mxu0
          %v765 = vadd.f32 %v705, %v764
          %v766 = vpop.f32.mrb[0].mxu0
          %767 = vmatprep.mubr.bf16.mxu0 0
          %768 = vmatmul.mubr.bf16.gmra.mrb[0].mxu0 %v494
          %v769 = vpop.f32.mrb[0].mxu0
          %v770 = vadd.f32 %v705, %v769
          %v771 = vpop.f32.mrb[0].mxu0
          %v772 = vpop.f32.mrb[0].mxu0
          %v773 = vadd.f32 %v705, %v772
          %v774 = vpop.f32.mrb[0].mxu0
          %775 = vmatprep.mubr.bf16.mxu0 0
          %776 = vmatmul.mubr.bf16.gmra.mrb[0].mxu0 %v497
          %v777 = vpop.f32.mrb[0].mxu0
          %v778 = vadd.f32 %v705, %v777
          %v779 = vpop.f32.mrb[0].mxu0
          %v780 = vpop.f32.mrb[0].mxu0
          %v781 = vadd.f32 %v705, %v780
          %v782 = vpop.f32.mrb[0].mxu0
          %783 = vmatprep.mubr.bf16.mxu0 0
          %784 = vmatmul.mubr.bf16.gmra.mrb[0].mxu0 %v500
          %v785 = vpop.f32.mrb[0].mxu0
          %v786 = vadd.f32 %v705, %v785
          %v787 = vpop.f32.mrb[0].mxu0
          %v788 = vpop.f32.mrb[0].mxu0
          %v789 = vadd.f32 %v705, %v788
          %v790 = vpop.f32.mrb[0].mxu0
          %791 = vmatprep.mubr.bf16.mxu0 0
          %792 = vmatmul.mubr.bf16.gmra.mrb[0].mxu0 %v503
          %v793 = vpop.f32.mrb[0].mxu0
          %v794 = vadd.f32 %v705, %v793
          %v795 = vpop.f32.mrb[0].mxu0
          %v796 = vpop.f32.mrb[0].mxu0
          %v797 = vadd.f32 %v705, %v796
          %v798 = vpop.f32.mrb[0].mxu0
          %799 = vmatprep.mubr.bf16.mxu0 0
          %800 = vmatmul.mubr.bf16.gmra.mrb[0].mxu0 %v506
          %v801 = vpop.f32.mrb[0].mxu0
          %v802 = vadd.f32 %v705, %v801
          %v803 = vpop.f32.mrb[0].mxu0
          %v804 = vpop.f32.mrb[0].mxu0
          %v805 = vadd.f32 %v705, %v804
          %v806 = vpop.f32.mrb[0].mxu0
          %807 = vmatprep.mubr.bf16.mxu0 0
          %808 = vmatmul.mubr.bf16.gmra.mrb[0].mxu0 %v509
          %v809 = vpop.f32.mrb[0].mxu0
          %v810 = vadd.f32 %v705, %v809
          %v811 = vpop.f32.mrb[0].mxu0
          %v812 = vpop.f32.mrb[0].mxu0
          %v813 = vadd.f32 %v705, %v812
          %v814 = vpop.f32.mrb[0].mxu0
          %815 = vmatprep.mubr.bf16.mxu0 0
          %816 = vmatmul.mubr.bf16.gmra.mrb[0].mxu0 %v512
          %v817 = vpop.f32.mrb[0].mxu0
          %v818 = vadd.f32 %v705, %v817
          %v819 = vpop.f32.mrb[0].mxu0
          %v820 = vpop.f32.mrb[0].mxu0
          %v821 = vadd.f32 %v705, %v820
          %v822 = vpop.f32.mrb[0].mxu0
          %823 = vmatprep.mubr.bf16.mxu0 0
          %824 = vmatmul.mubr.bf16.gmra.mrb[0].mxu0 %v515
          %v825 = vpop.f32.mrb[0].mxu0
          %v826 = vadd.f32 %v705, %v825
          %v827 = vpop.f32.mrb[0].mxu0
          %v828 = vpop.f32.mrb[0].mxu0
          %v829 = vadd.f32 %v705, %v828
          %v830 = vpop.f32.mrb[0].mxu0
          %831 = vmatprep.mubr.bf16.mxu0 0
          %832 = vmatmul.mubr.bf16.gmra.mrb[0].mxu0 %v518
          %v833 = vpop.f32.mrb[0].mxu0
          %v834 = vadd.f32 %v705, %v833
          %v835 = vpop.f32.mrb[0].mxu0
          %v836 = vpop.f32.mrb[0].mxu0
          %v837 = vadd.f32 %v705, %v836
          %v838 = vpop.f32.mrb[0].mxu0
          %839 = vmatprep.mubr.bf16.mxu0 0
          %840 = vmatmul.mubr.bf16.gmra.mrb[0].mxu0 %v521
          %v841 = vpop.f32.mrb[0].mxu0
          %v842 = vadd.f32 %v705, %v841
          %v843 = vpop.f32.mrb[0].mxu0
          %v844 = vpop.f32.mrb[0].mxu0
          %v845 = vadd.f32 %v705, %v844
          %v846 = vpop.f32.mrb[0].mxu0
          %847 = vmatprep.mubr.bf16.mxu0 0
          %848 = vmatmul.mubr.bf16.gmra.mrb[0].mxu0 %v524
          %v849 = vpop.f32.mrb[0].mxu0
          %v850 = vadd.f32 %v705, %v849
          %v851 = vpop.f32.mrb[0].mxu0
          %v852 = vpop.f32.mrb[0].mxu0
          %v853 = vadd.f32 %v705, %v852
          %v854 = vpop.f32.mrb[0].mxu0
          %855 = vmatprep.mubr.bf16.mxu0 0
          %856 = vmatmul.mubr.bf16.gmra.mrb[0].mxu0 %v527
          %v857 = vpop.f32.mrb[0].mxu0
          %v858 = vadd.f32 %v705, %v857
          %v859 = vpop.f32.mrb[0].mxu0
          %v860 = vpop.f32.mrb[0].mxu0
          %v861 = vadd.f32 %v705, %v860
          %v862 = vpop.f32.mrb[0].mxu0
          %863 = vmatprep.mubr.bf16.mxu0 0
          %864 = vmatmul.mubr.bf16.gmra.mrb[0].mxu0 %v530
          %v865 = vpop.f32.mrb[0].mxu0
          %v866 = vadd.f32 %v705, %v865
          %v867 = vpop.f32.mrb[0].mxu0
          %v868 = vpop.f32.mrb[0].mxu0
          %v869 = vadd.f32 %v705, %v868
          %v870 = vpop.f32.mrb[0].mxu0
          %871 = vmatprep.mubr.bf16.mxu0 0
          %872 = vmatmul.mubr.bf16.gmra.mrb[0].mxu0 %v533
          %v873 = vpop.f32.mrb[0].mxu0
          %v874 = vadd.f32 %v705, %v873
          %v875 = vpop.f32.mrb[0].mxu0
          %v876 = vpop.f32.mrb[0].mxu0
          %v877 = vadd.f32 %v705, %v876
          %v878 = vpop.f32.mrb[0].mxu0
          %879 = vdwg.mxu0
          %v880 = vpack.c.bf16 %v573, %v570
          %v881 = vpack.c.bf16 %v581, %v578
          %v882 = vpack.c.bf16 %v589, %v586
          %v883 = vpack.c.bf16 %v597, %v594
          %v884 = vpack.c.bf16 %v605, %v602
          %v885 = vpack.c.bf16 %v613, %v610
          %v886 = vpack.c.bf16 %v621, %v618
          %v887 = vpack.c.bf16 %v629, %v626
          %v888 = vpack.c.bf16 %v637, %v634
          %v889 = vpack.c.bf16 %v645, %v642
          %v890 = vpack.c.bf16 %v653, %v650
          %v891 = vpack.c.bf16 %v661, %v658
          %v892 = vpack.c.bf16 %v669, %v666
          %v893 = vpack.c.bf16 %v677, %v674
          %v894 = vpack.c.bf16 %v685, %v682
          %v895 = vpack.c.bf16 %v693, %v690
          %896 = vst.msk [vmem:[#allocation2] sm:$0xff] %vm486, %v880
          %897 = vst.msk [vmem:[#allocation2 + $0x8] sm:$0xff] %vm486, %v881
          %898 = vst.msk [vmem:[#allocation2 + $0x10] sm:$0xff] %vm486, %v882
          %899 = vst.msk [vmem:[#allocation2 + $0x18] sm:$0xff] %vm486, %v883
          %900 = vst.msk [vmem:[#allocation2 + $0x20] sm:$0xff] %vm486, %v884
          %901 = vst.msk [vmem:[#allocation2 + $0x28] sm:$0xff] %vm486, %v885
          %902 = vst.msk [vmem:[#allocation2 + $0x30] sm:$0xff] %vm486, %v886
          %903 = vst.msk [vmem:[#allocation2 + $0x38] sm:$0xff] %vm486, %v887
          %904 = vst.msk [vmem:[#allocation2 + $0x40] sm:$0xff] %vm486, %v888
          %905 = vst.msk [vmem:[#allocation2 + $0x48] sm:$0xff] %vm486, %v889
          %906 = vst.msk [vmem:[#allocation2 + $0x50] sm:$0xff] %vm486, %v890
          %907 = vst.msk [vmem:[#allocation2 + $0x58] sm:$0xff] %vm486, %v891
          %908 = vst.msk [vmem:[#allocation2 + $0x60] sm:$0xff] %vm486, %v892
          %909 = vst.msk [vmem:[#allocation2 + $0x68] sm:$0xff] %vm486, %v893
          %910 = vst.msk [vmem:[#allocation2 + $0x70] sm:$0xff] %vm486, %v894
          %911 = vst.msk [vmem:[#allocation2 + $0x78] sm:$0xff] %vm486, %v895
          %v912 = vpack.c.bf16 %v757, %v754
          %v913 = vpack.c.bf16 %v765, %v762
          %v914 = vpack.c.bf16 %v773, %v770
          %v915 = vpack.c.bf16 %v781, %v778
          %v916 = vpack.c.bf16 %v789, %v786
          %v917 = vpack.c.bf16 %v797, %v794
          %v918 = vpack.c.bf16 %v805, %v802
          %v919 = vpack.c.bf16 %v813, %v810
          %v920 = vpack.c.bf16 %v821, %v818
          %v921 = vpack.c.bf16 %v829, %v826
          %v922 = vpack.c.bf16 %v837, %v834
          %v923 = vpack.c.bf16 %v845, %v842
          %v924 = vpack.c.bf16 %v853, %v850
          %v925 = vpack.c.bf16 %v861, %v858
          %v926 = vpack.c.bf16 %v869, %v866
          %v927 = vpack.c.bf16 %v877, %v874
          %928 = vst.msk [vmem:[#allocation3] sm:$0xff] %vm486, %v912
          %929 = vst.msk [vmem:[#allocation3 + $0x8] sm:$0xff] %vm486, %v913
          %930 = vst.msk [vmem:[#allocation3 + $0x10] sm:$0xff] %vm486, %v914
          %931 = vst.msk [vmem:[#allocation3 + $0x18] sm:$0xff] %vm486, %v915
          %932 = vst.msk [vmem:[#allocation3 + $0x20] sm:$0xff] %vm486, %v916
          %933 = vst.msk [vmem:[#allocation3 + $0x28] sm:$0xff] %vm486, %v917
          %934 = vst.msk [vmem:[#allocation3 + $0x30] sm:$0xff] %vm486, %v918
          %935 = vst.msk [vmem:[#allocation3 + $0x38] sm:$0xff] %vm486, %v919
          %936 = vst.msk [vmem:[#allocation3 + $0x40] sm:$0xff] %vm486, %v920
          %937 = vst.msk [vmem:[#allocation3 + $0x48] sm:$0xff] %vm486, %v921
          %938 = vst.msk [vmem:[#allocation3 + $0x50] sm:$0xff] %vm486, %v922
          %939 = vst.msk [vmem:[#allocation3 + $0x58] sm:$0xff] %vm486, %v923
          %940 = vst.msk [vmem:[#allocation3 + $0x60] sm:$0xff] %vm486, %v924
          %941 = vst.msk [vmem:[#allocation3 + $0x68] sm:$0xff] %vm486, %v925
          %942 = vst.msk [vmem:[#allocation3 + $0x70] sm:$0xff] %vm486, %v926
          %943 = vst.msk [vmem:[#allocation3 + $0x78] sm:$0xff] %vm486, %v927
        $region60: #{tpu_custom_call.1} parent=55 // pred_fallthru
          _
        %s944 = smul.u32 %s28, 256
        %s945 = sshra.s32 %s944, 3
        %s946 = sand.u32 %s944, 7
        %s947 = smul.addr %s945, 4
        %s948 = scalar_lea.vmem %s344, %s947
        %v949 = vld [vmem:[%s948] sm:$0xf]
        %v950 = vld [vmem:[%s948 + $0x4] sm:$0xf]
        %v951 = vld [vmem:[%s948 + $0x8] sm:$0xf]
        %v952 = vld [vmem:[%s948 + $0xc] sm:$0xf]
        %v953 = vld [vmem:[%s948 + $0x10] sm:$0xf]
        %v954 = vld [vmem:[%s948 + $0x14] sm:$0xf]
        %v955 = vld [vmem:[%s948 + $0x18] sm:$0xf]
        %v956 = vld [vmem:[%s948 + $0x1c] sm:$0xf]
        %v957 = vld [vmem:[%s948 + $0x20] sm:$0xf]
        %v958 = vld [vmem:[%s948 + $0x24] sm:$0xf]
        %v959 = vld [vmem:[%s948 + $0x28] sm:$0xf]
        %v960 = vld [vmem:[%s948 + $0x2c] sm:$0xf]
        %v961 = vld [vmem:[%s948 + $0x30] sm:$0xf]
        %v962 = vld [vmem:[%s948 + $0x34] sm:$0xf]
        %v963 = vld [vmem:[%s948 + $0x38] sm:$0xf]
        %v964 = vld [vmem:[%s948 + $0x3c] sm:$0xf]
        %v965 = vld [vmem:[%s948 + $0x40] sm:$0xf]
        %v966 = vld [vmem:[%s948 + $0x44] sm:$0xf]
        %v967 = vld [vmem:[%s948 + $0x48] sm:$0xf]
        %v968 = vld [vmem:[%s948 + $0x4c] sm:$0xf]
        %v969 = vld [vmem:[%s948 + $0x50] sm:$0xf]
        %v970 = vld [vmem:[%s948 + $0x54] sm:$0xf]
        %v971 = vld [vmem:[%s948 + $0x58] sm:$0xf]
        %v972 = vld [vmem:[%s948 + $0x5c] sm:$0xf]
        %v973 = vld [vmem:[%s948 + $0x60] sm:$0xf]
        %v974 = vld [vmem:[%s948 + $0x64] sm:$0xf]
        %v975 = vld [vmem:[%s948 + $0x68] sm:$0xf]
        %v976 = vld [vmem:[%s948 + $0x6c] sm:$0xf]
        %v977 = vld [vmem:[%s948 + $0x70] sm:$0xf]
        %v978 = vld [vmem:[%s948 + $0x74] sm:$0xf]
        %v979 = vld [vmem:[%s948 + $0x78] sm:$0xf]
        %v980 = vld [vmem:[%s948 + $0x7c] sm:$0xf]
        %v981 = vld [vmem:[%s1] sm:$0xf]
        %v982 = vld [vmem:[%s1 + $0x4] sm:$0xf]
        %v983 = vld [vmem:[%s1 + $0x8] sm:$0xf]
        %v984 = vld [vmem:[%s1 + $0xc] sm:$0xf]
        %v985 = vld [vmem:[%s4] sm:$0x1]
        %v987 = vlaneseq
        %v988 = vshrl.u32 %v987, 7
        %v989 = vsub.s32 0, %v988
        %v990 = vrot.slane %v985, %v989
        %v1024 = vunpack.c.l.b16 %v949
        %v1025 = vunpack.c.l.b16 %v950
        %v1026 = vunpack.c.l.b16 %v951
        %v1027 = vunpack.c.l.b16 %v952
        %v1028 = vunpack.c.l.b16 %v953
        %v1029 = vunpack.c.l.b16 %v954
        %v1030 = vunpack.c.l.b16 %v955
        %v1031 = vunpack.c.l.b16 %v956
        %v1032 = vunpack.c.l.b16 %v957
        %v1033 = vunpack.c.l.b16 %v958
        %v1034 = vunpack.c.l.b16 %v959
        %v1035 = vunpack.c.l.b16 %v960
        %v1036 = vunpack.c.l.b16 %v961
        %v1037 = vunpack.c.l.b16 %v962
        %v1038 = vunpack.c.l.b16 %v963
        %v1039 = vunpack.c.l.b16 %v964
        %v1040 = vunpack.c.l.b16 %v965
        %v1041 = vunpack.c.l.b16 %v966
        %v1042 = vunpack.c.l.b16 %v967
        %v1043 = vunpack.c.l.b16 %v968
        %v1044 = vunpack.c.l.b16 %v969
        %v1045 = vunpack.c.l.b16 %v970
        %v1046 = vunpack.c.l.b16 %v971
        %v1047 = vunpack.c.l.b16 %v972
        %v1048 = vunpack.c.l.b16 %v973
        %v1049 = vunpack.c.l.b16 %v974
        %v1050 = vunpack.c.l.b16 %v975
        %v1051 = vunpack.c.l.b16 %v976
        %v1052 = vunpack.c.l.b16 %v977
        %v1053 = vunpack.c.l.b16 %v978
        %v1054 = vunpack.c.l.b16 %v979
        %v1055 = vunpack.c.l.b16 %v980
        %v1056 = vpack.c.b16 %v1025, %v1024
        %v1057 = vpack.c.b16 %v1027, %v1026
        %v1058 = vpack.c.b16 %v1029, %v1028
        %v1059 = vpack.c.b16 %v1031, %v1030
        %v1060 = vpack.c.b16 %v1033, %v1032
        %v1061 = vpack.c.b16 %v1035, %v1034
        %v1062 = vpack.c.b16 %v1037, %v1036
        %v1063 = vpack.c.b16 %v1039, %v1038
        %v1064 = vpack.c.b16 %v1041, %v1040
        %v1065 = vpack.c.b16 %v1043, %v1042
        %v1066 = vpack.c.b16 %v1045, %v1044
        %v1067 = vpack.c.b16 %v1047, %v1046
        %v1068 = vpack.c.b16 %v1049, %v1048
        %v1069 = vpack.c.b16 %v1051, %v1050
        %v1070 = vpack.c.b16 %v1053, %v1052
        %v1071 = vpack.c.b16 %v1055, %v1054
        %v1076 = vunpack.c.l.b16 %v981
        %v1077 = vunpack.c.l.b16 %v982
        %v1078 = vunpack.c.l.b16 %v983
        %v1079 = vunpack.c.l.b16 %v984
        %v1080 = vpack.c.b16 %v1077, %v1076
        %v1081 = vpack.c.b16 %v1079, %v1078
        %vm1084 = vcmask 261120
        %v1086 = vsel %vm1084, %v1056, 0
        %v1089 = vsel %vm1084, %v1057, 0
        %v1092 = vsel %vm1084, %v1058, 0
        %v1095 = vsel %vm1084, %v1059, 0
        %v1098 = vsel %vm1084, %v1060, 0
        %v1101 = vsel %vm1084, %v1061, 0
        %v1104 = vsel %vm1084, %v1062, 0
        %v1107 = vsel %vm1084, %v1063, 0
        %v1110 = vsel %vm1084, %v1064, 0
        %v1113 = vsel %vm1084, %v1065, 0
        %v1116 = vsel %vm1084, %v1066, 0
        %v1119 = vsel %vm1084, %v1067, 0
        %v1122 = vsel %vm1084, %v1068, 0
        %v1125 = vsel %vm1084, %v1069, 0
        %v1128 = vsel %vm1084, %v1070, 0
        %v1131 = vsel %vm1084, %v1071, 0
        %1133 = vmatprep.subr.bf16.mxu0 0
        %1134 = vmatpush1.bf16.msra.mxu0 %v1080
        %1135 = vmatprep.subr.bf16.mxu0 0
        %1136 = vmatpush1.bf16.msra.mxu0 %v1081
        %1137 = vmatprep.subr.bf16.mxu0 0
        %1138 = vmatpush1.bf16.msra.mxu0 0
        %1139 = vmatprep.subr.bf16.mxu0 0
        %1140 = vmatpush1.bf16.msra.mxu0 0
        %1141 = vmatprep.subr.bf16.mxu0 0
        %1142 = vmatpush1.bf16.msra.mxu0 0
        %1143 = vmatprep.subr.bf16.mxu0 0
        %1144 = vmatpush1.bf16.msra.mxu0 0
        %1145 = vmatprep.subr.bf16.mxu0 0
        %1146 = vmatpush1.bf16.msra.mxu0 0
        %1147 = vmatprep.subr.bf16.mxu0 0
        %1148 = vmatpush1.bf16.msra.mxu0 0
        %1149 = vmatprep.subr.bf16.mxu0 0
        %1150 = vmatpush1.bf16.msra.mxu0 0
        %1151 = vmatprep.subr.bf16.mxu0 0
        %1152 = vmatpush1.bf16.msra.mxu0 0
        %1153 = vmatprep.subr.bf16.mxu0 0
        %1154 = vmatpush1.bf16.msra.mxu0 0
        %1155 = vmatprep.subr.bf16.mxu0 0
        %1156 = vmatpush1.bf16.msra.mxu0 0
        %1157 = vmatprep.subr.bf16.mxu0 0
        %1158 = vmatpush1.bf16.msra.mxu0 0
        %1159 = vmatprep.subr.bf16.mxu0 0
        %1160 = vmatpush1.bf16.msra.mxu0 0
        %1161 = vmatprep.subr.bf16.mxu0 0
        %1162 = vmatpush1.bf16.msra.mxu0 0
        %1163 = vmatprep.subr.bf16.mxu0 0
        %1164 = vmatpush1.bf16.msra.mxu0 0
        %1165 = vmatprep.mubr.bf16.mxu0 0
        %1166 = vmatmul.mubr.bf16.gmra.mrb[0].mxu0 %v1086
        %v1167 = vpop.f32.mrb[0].mxu0
        %v1168 = vadd.f32 %v990, %v1167
        %v1169 = vpop.f32.mrb[0].mxu0
        %v1170 = vpop.f32.mrb[0].mxu0
        %v1171 = vadd.f32 %v990, %v1170
        %v1172 = vpop.f32.mrb[0].mxu0
        %1173 = vmatprep.mubr.bf16.mxu0 0
        %1174 = vmatmul.mubr.bf16.gmra.mrb[0].mxu0 %v1089
        %v1175 = vpop.f32.mrb[0].mxu0
        %v1176 = vadd.f32 %v990, %v1175
        %v1177 = vpop.f32.mrb[0].mxu0
        %v1178 = vpop.f32.mrb[0].mxu0
        %v1179 = vadd.f32 %v990, %v1178
        %v1180 = vpop.f32.mrb[0].mxu0
        %1181 = vmatprep.mubr.bf16.mxu0 0
        %1182 = vmatmul.mubr.bf16.gmra.mrb[0].mxu0 %v1092
        %v1183 = vpop.f32.mrb[0].mxu0
        %v1184 = vadd.f32 %v990, %v1183
        %v1185 = vpop.f32.mrb[0].mxu0
        %v1186 = vpop.f32.mrb[0].mxu0
        %v1187 = vadd.f32 %v990, %v1186
        %v1188 = vpop.f32.mrb[0].mxu0
        %1189 = vmatprep.mubr.bf16.mxu0 0
        %1190 = vmatmul.mubr.bf16.gmra.mrb[0].mxu0 %v1095
        %v1191 = vpop.f32.mrb[0].mxu0
        %v1192 = vadd.f32 %v990, %v1191
        %v1193 = vpop.f32.mrb[0].mxu0
        %v1194 = vpop.f32.mrb[0].mxu0
        %v1195 = vadd.f32 %v990, %v1194
        %v1196 = vpop.f32.mrb[0].mxu0
        %1197 = vmatprep.mubr.bf16.mxu0 0
        %1198 = vmatmul.mubr.bf16.gmra.mrb[0].mxu0 %v1098
        %v1199 = vpop.f32.mrb[0].mxu0
        %v1200 = vadd.f32 %v990, %v1199
        %v1201 = vpop.f32.mrb[0].mxu0
        %v1202 = vpop.f32.mrb[0].mxu0
        %v1203 = vadd.f32 %v990, %v1202
        %v1204 = vpop.f32.mrb[0].mxu0
        %1205 = vmatprep.mubr.bf16.mxu0 0
        %1206 = vmatmul.mubr.bf16.gmra.mrb[0].mxu0 %v1101
        %v1207 = vpop.f32.mrb[0].mxu0
        %v1208 = vadd.f32 %v990, %v1207
        %v1209 = vpop.f32.mrb[0].mxu0
        %v1210 = vpop.f32.mrb[0].mxu0
        %v1211 = vadd.f32 %v990, %v1210
        %v1212 = vpop.f32.mrb[0].mxu0
        %1213 = vmatprep.mubr.bf16.mxu0 0
        %1214 = vmatmul.mubr.bf16.gmra.mrb[0].mxu0 %v1104
        %v1215 = vpop.f32.mrb[0].mxu0
        %v1216 = vadd.f32 %v990, %v1215
        %v1217 = vpop.f32.mrb[0].mxu0
        %v1218 = vpop.f32.mrb[0].mxu0
        %v1219 = vadd.f32 %v990, %v1218
        %v1220 = vpop.f32.mrb[0].mxu0
        %1221 = vmatprep.mubr.bf16.mxu0 0
        %1222 = vmatmul.mubr.bf16.gmra.mrb[0].mxu0 %v1107
        %v1223 = vpop.f32.mrb[0].mxu0
        %v1224 = vadd.f32 %v990, %v1223
        %v1225 = vpop.f32.mrb[0].mxu0
        %v1226 = vpop.f32.mrb[0].mxu0
        %v1227 = vadd.f32 %v990, %v1226
        %v1228 = vpop.f32.mrb[0].mxu0
        %1229 = vmatprep.mubr.bf16.mxu0 0
        %1230 = vmatmul.mubr.bf16.gmra.mrb[0].mxu0 %v1110
        %v1231 = vpop.f32.mrb[0].mxu0
        %v1232 = vadd.f32 %v990, %v1231
        %v1233 = vpop.f32.mrb[0].mxu0
        %v1234 = vpop.f32.mrb[0].mxu0
        %v1235 = vadd.f32 %v990, %v1234
        %v1236 = vpop.f32.mrb[0].mxu0
        %1237 = vmatprep.mubr.bf16.mxu0 0
        %1238 = vmatmul.mubr.bf16.gmra.mrb[0].mxu0 %v1113
        %v1239 = vpop.f32.mrb[0].mxu0
        %v1240 = vadd.f32 %v990, %v1239
        %v1241 = vpop.f32.mrb[0].mxu0
        %v1242 = vpop.f32.mrb[0].mxu0
        %v1243 = vadd.f32 %v990, %v1242
        %v1244 = vpop.f32.mrb[0].mxu0
        %1245 = vmatprep.mubr.bf16.mxu0 0
        %1246 = vmatmul.mubr.bf16.gmra.mrb[0].mxu0 %v1116
        %v1247 = vpop.f32.mrb[0].mxu0
        %v1248 = vadd.f32 %v990, %v1247
        %v1249 = vpop.f32.mrb[0].mxu0
        %v1250 = vpop.f32.mrb[0].mxu0
        %v1251 = vadd.f32 %v990, %v1250
        %v1252 = vpop.f32.mrb[0].mxu0
        %1253 = vmatprep.mubr.bf16.mxu0 0
        %1254 = vmatmul.mubr.bf16.gmra.mrb[0].mxu0 %v1119
        %v1255 = vpop.f32.mrb[0].mxu0
        %v1256 = vadd.f32 %v990, %v1255
        %v1257 = vpop.f32.mrb[0].mxu0
        %v1258 = vpop.f32.mrb[0].mxu0
        %v1259 = vadd.f32 %v990, %v1258
        %v1260 = vpop.f32.mrb[0].mxu0
        %1261 = vmatprep.mubr.bf16.mxu0 0
        %1262 = vmatmul.mubr.bf16.gmra.mrb[0].mxu0 %v1122
        %v1263 = vpop.f32.mrb[0].mxu0
        %v1264 = vadd.f32 %v990, %v1263
        %v1265 = vpop.f32.mrb[0].mxu0
        %v1266 = vpop.f32.mrb[0].mxu0
        %v1267 = vadd.f32 %v990, %v1266
        %v1268 = vpop.f32.mrb[0].mxu0
        %1269 = vmatprep.mubr.bf16.mxu0 0
        %1270 = vmatmul.mubr.bf16.gmra.mrb[0].mxu0 %v1125
        %v1271 = vpop.f32.mrb[0].mxu0
        %v1272 = vadd.f32 %v990, %v1271
        %v1273 = vpop.f32.mrb[0].mxu0
        %v1274 = vpop.f32.mrb[0].mxu0
        %v1275 = vadd.f32 %v990, %v1274
        %v1276 = vpop.f32.mrb[0].mxu0
        %1277 = vmatprep.mubr.bf16.mxu0 0
        %1278 = vmatmul.mubr.bf16.gmra.mrb[0].mxu0 %v1128
        %v1279 = vpop.f32.mrb[0].mxu0
        %v1280 = vadd.f32 %v990, %v1279
        %v1281 = vpop.f32.mrb[0].mxu0
        %v1282 = vpop.f32.mrb[0].mxu0
        %v1283 = vadd.f32 %v990, %v1282
        %v1284 = vpop.f32.mrb[0].mxu0
        %1285 = vmatprep.mubr.bf16.mxu0 0
        %1286 = vmatmul.mubr.bf16.gmra.mrb[0].mxu0 %v1131
        %v1287 = vpop.f32.mrb[0].mxu0
        %v1288 = vadd.f32 %v990, %v1287
        %v1289 = vpop.f32.mrb[0].mxu0
        %v1290 = vpop.f32.mrb[0].mxu0
        %v1291 = vadd.f32 %v990, %v1290
        %v1292 = vpop.f32.mrb[0].mxu0
        %1293 = vdwg.mxu0
        %v1294 = vpack.c.bf16 %v1171, %v1168
        %v1295 = vpack.c.bf16 %v1179, %v1176
        %v1296 = vpack.c.bf16 %v1187, %v1184
        %v1297 = vpack.c.bf16 %v1195, %v1192
        %v1298 = vpack.c.bf16 %v1203, %v1200
        %v1299 = vpack.c.bf16 %v1211, %v1208
        %v1300 = vpack.c.bf16 %v1219, %v1216
        %v1301 = vpack.c.bf16 %v1227, %v1224
        %v1302 = vpack.c.bf16 %v1235, %v1232
        %v1303 = vpack.c.bf16 %v1243, %v1240
        %v1304 = vpack.c.bf16 %v1251, %v1248
        %v1305 = vpack.c.bf16 %v1259, %v1256
        %v1306 = vpack.c.bf16 %v1267, %v1264
        %v1307 = vpack.c.bf16 %v1275, %v1272
        %v1308 = vpack.c.bf16 %v1283, %v1280
        %v1309 = vpack.c.bf16 %v1291, %v1288
        %v1310 = vld [vmem:[#allocation2] sm:$0xff]
        %v1311 = vld [vmem:[#allocation2 + $0x8] sm:$0xff]
        %v1312 = vld [vmem:[#allocation2 + $0x10] sm:$0xff]
        %v1313 = vld [vmem:[#allocation2 + $0x18] sm:$0xff]
        %v1314 = vld [vmem:[#allocation2 + $0x20] sm:$0xff]
        %v1315 = vld [vmem:[#allocation2 + $0x28] sm:$0xff]
        %v1316 = vld [vmem:[#allocation2 + $0x30] sm:$0xff]
        %v1317 = vld [vmem:[#allocation2 + $0x38] sm:$0xff]
        %v1318 = vld [vmem:[#allocation2 + $0x40] sm:$0xff]
        %v1319 = vld [vmem:[#allocation2 + $0x48] sm:$0xff]
        %v1320 = vld [vmem:[#allocation2 + $0x50] sm:$0xff]
        %v1321 = vld [vmem:[#allocation2 + $0x58] sm:$0xff]
        %v1322 = vld [vmem:[#allocation2 + $0x60] sm:$0xff]
        %v1323 = vld [vmem:[#allocation2 + $0x68] sm:$0xff]
        %v1324 = vld [vmem:[#allocation2 + $0x70] sm:$0xff]
        %v1325 = vld [vmem:[#allocation2 + $0x78] sm:$0xff]
        %v1326 = vld [vmem:[#allocation3] sm:$0xff]
        %v1327 = vld [vmem:[#allocation3 + $0x8] sm:$0xff]
        %v1328 = vld [vmem:[#allocation3 + $0x10] sm:$0xff]
        %v1329 = vld [vmem:[#allocation3 + $0x18] sm:$0xff]
        %v1330 = vld [vmem:[#allocation3 + $0x20] sm:$0xff]
        %v1331 = vld [vmem:[#allocation3 + $0x28] sm:$0xff]
        %v1332 = vld [vmem:[#allocation3 + $0x30] sm:$0xff]
        %v1333 = vld [vmem:[#allocation3 + $0x38] sm:$0xff]
        %v1334 = vld [vmem:[#allocation3 + $0x40] sm:$0xff]
        %v1335 = vld [vmem:[#allocation3 + $0x48] sm:$0xff]
        %v1336 = vld [vmem:[#allocation3 + $0x50] sm:$0xff]
        %v1337 = vld [vmem:[#allocation3 + $0x58] sm:$0xff]
        %v1338 = vld [vmem:[#allocation3 + $0x60] sm:$0xff]
        %v1339 = vld [vmem:[#allocation3 + $0x68] sm:$0xff]
        %v1340 = vld [vmem:[#allocation3 + $0x70] sm:$0xff]
        %v1341 = vld [vmem:[#allocation3 + $0x78] sm:$0xff]
        %vm1342 = vcmask 64512
        %v1344 = vsel %vm1342, %v1294, 0
        %v1347 = vsel %vm1342, %v1295, 0
        %v1350 = vsel %vm1342, %v1296, 0
        %v1353 = vsel %vm1342, %v1297, 0
        %v1356 = vsel %vm1342, %v1298, 0
        %v1359 = vsel %vm1342, %v1299, 0
        %v1362 = vsel %vm1342, %v1300, 0
        %v1365 = vsel %vm1342, %v1301, 0
        %v1368 = vsel %vm1342, %v1302, 0
        %v1371 = vsel %vm1342, %v1303, 0
        %v1374 = vsel %vm1342, %v1304, 0
        %v1377 = vsel %vm1342, %v1305, 0
        %v1380 = vsel %vm1342, %v1306, 0
        %v1383 = vsel %vm1342, %v1307, 0
        %v1386 = vsel %vm1342, %v1308, 0
        %v1389 = vsel %vm1342, %v1309, 0
        %v1392 = vsel %vm1342, %v1310, 0
        %v1395 = vsel %vm1342, %v1311, 0
        %v1398 = vsel %vm1342, %v1312, 0
        %v1401 = vsel %vm1342, %v1313, 0
        %v1404 = vsel %vm1342, %v1314, 0
        %v1407 = vsel %vm1342, %v1315, 0
        %v1410 = vsel %vm1342, %v1316, 0
        %v1413 = vsel %vm1342, %v1317, 0
        %v1416 = vsel %vm1342, %v1318, 0
        %v1419 = vsel %vm1342, %v1319, 0
        %v1422 = vsel %vm1342, %v1320, 0
        %v1425 = vsel %vm1342, %v1321, 0
        %v1428 = vsel %vm1342, %v1322, 0
        %v1431 = vsel %vm1342, %v1323, 0
        %v1434 = vsel %vm1342, %v1324, 0
        %v1437 = vsel %vm1342, %v1325, 0
        %1439 = vmatprep.subr.bf16.mxu0 0
        %1440 = vmatpush1.bf16.xpose.msra.mxu0 %v1392
        %1441 = vmatprep.subr.bf16.mxu0 0
        %1442 = vmatpush1.bf16.xpose.msra.mxu0 %v1395
        %1443 = vmatprep.subr.bf16.mxu0 0
        %1444 = vmatpush1.bf16.xpose.msra.mxu0 %v1398
        %1445 = vmatprep.subr.bf16.mxu0 0
        %1446 = vmatpush1.bf16.xpose.msra.mxu0 %v1401
        %1447 = vmatprep.subr.bf16.mxu0 0
        %1448 = vmatpush1.bf16.xpose.msra.mxu0 %v1404
        %1449 = vmatprep.subr.bf16.mxu0 0
        %1450 = vmatpush1.bf16.xpose.msra.mxu0 %v1407
        %1451 = vmatprep.subr.bf16.mxu0 0
        %1452 = vmatpush1.bf16.xpose.msra.mxu0 %v1410
        %1453 = vmatprep.subr.bf16.mxu0 0
        %1454 = vmatpush1.bf16.xpose.msra.mxu0 %v1413
        %1455 = vmatprep.subr.bf16.mxu0 0
        %1456 = vmatpush1.bf16.xpose.msra.mxu0 %v1416
        %1457 = vmatprep.subr.bf16.mxu0 0
        %1458 = vmatpush1.bf16.xpose.msra.mxu0 %v1419
        %1459 = vmatprep.subr.bf16.mxu0 0
        %1460 = vmatpush1.bf16.xpose.msra.mxu0 %v1422
        %1461 = vmatprep.subr.bf16.mxu0 0
        %1462 = vmatpush1.bf16.xpose.msra.mxu0 %v1425
        %1463 = vmatprep.subr.bf16.mxu0 0
        %1464 = vmatpush1.bf16.xpose.msra.mxu0 %v1428
        %1465 = vmatprep.subr.bf16.mxu0 0
        %1466 = vmatpush1.bf16.xpose.msra.mxu0 %v1431
        %1467 = vmatprep.subr.bf16.mxu0 0
        %1468 = vmatpush1.bf16.xpose.msra.mxu0 %v1434
        %1469 = vmatprep.subr.bf16.mxu0 0
        %1470 = vmatpush1.bf16.xpose.msra.mxu0 %v1437
        %1471 = vmatprep.mubr.bf16.mxu0 0
        %1472 = vmatmul.mubr.bf16.gmra.mrb[0].mxu0 %v1344
        %v1473 = vpop.f32.mrb[0].mxu0
        %v1474 = vadd.f32 0.0, %v1473
        %v1475 = vpop.f32.mrb[0].mxu0
        %v1476 = vadd.f32 0.0, %v1475
        %v1477 = vpop.f32.mrb[0].mxu0
        %v1478 = vadd.f32 0.0, %v1477
        %v1479 = vpop.f32.mrb[0].mxu0
        %v1480 = vadd.f32 0.0, %v1479
        %1481 = vmatprep.mubr.bf16.mxu0 0
        %1482 = vmatmul.mubr.bf16.gmra.mrb[0].mxu0 %v1347
        %v1483 = vpop.f32.mrb[0].mxu0
        %v1484 = vadd.f32 0.0, %v1483
        %v1485 = vpop.f32.mrb[0].mxu0
        %v1486 = vadd.f32 0.0, %v1485
        %v1487 = vpop.f32.mrb[0].mxu0
        %v1488 = vadd.f32 0.0, %v1487
        %v1489 = vpop.f32.mrb[0].mxu0
        %v1490 = vadd.f32 0.0, %v1489
        %1491 = vmatprep.mubr.bf16.mxu0 0
        %1492 = vmatmul.mubr.bf16.gmra.mrb[0].mxu0 %v1350
        %v1493 = vpop.f32.mrb[0].mxu0
        %v1494 = vadd.f32 0.0, %v1493
        %v1495 = vpop.f32.mrb[0].mxu0
        %v1496 = vadd.f32 0.0, %v1495
        %v1497 = vpop.f32.mrb[0].mxu0
        %v1498 = vadd.f32 0.0, %v1497
        %v1499 = vpop.f32.mrb[0].mxu0
        %v1500 = vadd.f32 0.0, %v1499
        %1501 = vmatprep.mubr.bf16.mxu0 0
        %1502 = vmatmul.mubr.bf16.gmra.mrb[0].mxu0 %v1353
        %v1503 = vpop.f32.mrb[0].mxu0
        %v1504 = vadd.f32 0.0, %v1503
        %v1505 = vpop.f32.mrb[0].mxu0
        %v1506 = vadd.f32 0.0, %v1505
        %v1507 = vpop.f32.mrb[0].mxu0
        %v1508 = vadd.f32 0.0, %v1507
        %v1509 = vpop.f32.mrb[0].mxu0
        %v1510 = vadd.f32 0.0, %v1509
        %1511 = vmatprep.mubr.bf16.mxu0 0
        %1512 = vmatmul.mubr.bf16.gmra.mrb[0].mxu0 %v1356
        %v1513 = vpop.f32.mrb[0].mxu0
        %v1514 = vadd.f32 0.0, %v1513
        %v1515 = vpop.f32.mrb[0].mxu0
        %v1516 = vadd.f32 0.0, %v1515
        %v1517 = vpop.f32.mrb[0].mxu0
        %v1518 = vadd.f32 0.0, %v1517
        %v1519 = vpop.f32.mrb[0].mxu0
        %v1520 = vadd.f32 0.0, %v1519
        %1521 = vmatprep.mubr.bf16.mxu0 0
        %1522 = vmatmul.mubr.bf16.gmra.mrb[0].mxu0 %v1359
        %v1523 = vpop.f32.mrb[0].mxu0
        %v1524 = vadd.f32 0.0, %v1523
        %v1525 = vpop.f32.mrb[0].mxu0
        %v1526 = vadd.f32 0.0, %v1525
        %v1527 = vpop.f32.mrb[0].mxu0
        %v1528 = vadd.f32 0.0, %v1527
        %v1529 = vpop.f32.mrb[0].mxu0
        %v1530 = vadd.f32 0.0, %v1529
        %1531 = vmatprep.mubr.bf16.mxu0 0
        %1532 = vmatmul.mubr.bf16.gmra.mrb[0].mxu0 %v1362
        %v1533 = vpop.f32.mrb[0].mxu0
        %v1534 = vadd.f32 0.0, %v1533
        %v1535 = vpop.f32.mrb[0].mxu0
        %v1536 = vadd.f32 0.0, %v1535
        %v1537 = vpop.f32.mrb[0].mxu0
        %v1538 = vadd.f32 0.0, %v1537
        %v1539 = vpop.f32.mrb[0].mxu0
        %v1540 = vadd.f32 0.0, %v1539
        %1541 = vmatprep.mubr.bf16.mxu0 0
        %1542 = vmatmul.mubr.bf16.gmra.mrb[0].mxu0 %v1365
        %v1543 = vpop.f32.mrb[0].mxu0
        %v1544 = vadd.f32 0.0, %v1543
        %v1545 = vpop.f32.mrb[0].mxu0
        %v1546 = vadd.f32 0.0, %v1545
        %v1547 = vpop.f32.mrb[0].mxu0
        %v1548 = vadd.f32 0.0, %v1547
        %v1549 = vpop.f32.mrb[0].mxu0
        %v1550 = vadd.f32 0.0, %v1549
        %1551 = vmatprep.mubr.bf16.mxu0 0
        %1552 = vmatmul.mubr.bf16.gmra.mrb[0].mxu0 %v1368
        %v1553 = vpop.f32.mrb[0].mxu0
        %v1554 = vadd.f32 0.0, %v1553
        %v1555 = vpop.f32.mrb[0].mxu0
        %v1556 = vadd.f32 0.0, %v1555
        %v1557 = vpop.f32.mrb[0].mxu0
        %v1558 = vadd.f32 0.0, %v1557
        %v1559 = vpop.f32.mrb[0].mxu0
        %v1560 = vadd.f32 0.0, %v1559
        %1561 = vmatprep.mubr.bf16.mxu0 0
        %1562 = vmatmul.mubr.bf16.gmra.mrb[0].mxu0 %v1371
        %v1563 = vpop.f32.mrb[0].mxu0
        %v1564 = vadd.f32 0.0, %v1563
        %v1565 = vpop.f32.mrb[0].mxu0
        %v1566 = vadd.f32 0.0, %v1565
        %v1567 = vpop.f32.mrb[0].mxu0
        %v1568 = vadd.f32 0.0, %v1567
        %v1569 = vpop.f32.mrb[0].mxu0
        %v1570 = vadd.f32 0.0, %v1569
        %1571 = vmatprep.mubr.bf16.mxu0 0
        %1572 = vmatmul.mubr.bf16.gmra.mrb[0].mxu0 %v1374
        %v1573 = vpop.f32.mrb[0].mxu0
        %v1574 = vadd.f32 0.0, %v1573
        %v1575 = vpop.f32.mrb[0].mxu0
        %v1576 = vadd.f32 0.0, %v1575
        %v1577 = vpop.f32.mrb[0].mxu0
        %v1578 = vadd.f32 0.0, %v1577
        %v1579 = vpop.f32.mrb[0].mxu0
        %v1580 = vadd.f32 0.0, %v1579
        %1581 = vmatprep.mubr.bf16.mxu0 0
        %1582 = vmatmul.mubr.bf16.gmra.mrb[0].mxu0 %v1377
        %v1583 = vpop.f32.mrb[0].mxu0
        %v1584 = vadd.f32 0.0, %v1583
        %v1585 = vpop.f32.mrb[0].mxu0
        %v1586 = vadd.f32 0.0, %v1585
        %v1587 = vpop.f32.mrb[0].mxu0
        %v1588 = vadd.f32 0.0, %v1587
        %v1589 = vpop.f32.mrb[0].mxu0
        %v1590 = vadd.f32 0.0, %v1589
        %1591 = vmatprep.mubr.bf16.mxu0 0
        %1592 = vmatmul.mubr.bf16.gmra.mrb[0].mxu0 %v1380
        %v1593 = vpop.f32.mrb[0].mxu0
        %v1594 = vadd.f32 0.0, %v1593
        %v1595 = vpop.f32.mrb[0].mxu0
        %v1596 = vadd.f32 0.0, %v1595
        %v1597 = vpop.f32.mrb[0].mxu0
        %v1598 = vadd.f32 0.0, %v1597
        %v1599 = vpop.f32.mrb[0].mxu0
        %v1600 = vadd.f32 0.0, %v1599
        %1601 = vmatprep.mubr.bf16.mxu0 0
        %1602 = vmatmul.mubr.bf16.gmra.mrb[0].mxu0 %v1383
        %v1603 = vpop.f32.mrb[0].mxu0
        %v1604 = vadd.f32 0.0, %v1603
        %v1605 = vpop.f32.mrb[0].mxu0
        %v1606 = vadd.f32 0.0, %v1605
        %v1607 = vpop.f32.mrb[0].mxu0
        %v1608 = vadd.f32 0.0, %v1607
        %v1609 = vpop.f32.mrb[0].mxu0
        %v1610 = vadd.f32 0.0, %v1609
        %1611 = vmatprep.mubr.bf16.mxu0 0
        %1612 = vmatmul.mubr.bf16.gmra.mrb[0].mxu0 %v1386
        %v1613 = vpop.f32.mrb[0].mxu0
        %v1614 = vadd.f32 0.0, %v1613
        %v1615 = vpop.f32.mrb[0].mxu0
        %v1616 = vadd.f32 0.0, %v1615
        %v1617 = vpop.f32.mrb[0].mxu0
        %v1618 = vadd.f32 0.0, %v1617
        %v1619 = vpop.f32.mrb[0].mxu0
        %v1620 = vadd.f32 0.0, %v1619
        %1621 = vmatprep.mubr.bf16.mxu0 0
        %1622 = vmatmul.mubr.bf16.gmra.mrb[0].mxu0 %v1389
        %v1623 = vpop.f32.mrb[0].mxu0
        %v1624 = vadd.f32 0.0, %v1623
        %v1625 = vpop.f32.mrb[0].mxu0
        %v1626 = vadd.f32 0.0, %v1625
        %v1627 = vpop.f32.mrb[0].mxu0
        %v1628 = vadd.f32 0.0, %v1627
        %v1629 = vpop.f32.mrb[0].mxu0
        %v1630 = vadd.f32 0.0, %v1629
        %1631 = vdwg.mxu0
        %v1632 = vmax.f32 %v1474, %v1476
        %1633 = vmax.xlane.f32.xlu0 %v1632
        %v1634 = vpop.xlane.xlu0 %1633
        %v1635 = vmax.f32 %v1478, %v1480
        %1636 = vmax.xlane.f32.xlu0 %v1635
        %v1637 = vpop.xlane.xlu0 %1636
        %v1638 = vmax.f32 %v1484, %v1486
        %1639 = vmax.xlane.f32.xlu0 %v1638
        %v1640 = vpop.xlane.xlu0 %1639
        %v1641 = vmax.f32 %v1488, %v1490
        %1642 = vmax.xlane.f32.xlu0 %v1641
        %v1643 = vpop.xlane.xlu0 %1642
        %v1644 = vmax.f32 %v1494, %v1496
        %1645 = vmax.xlane.f32.xlu0 %v1644
        %v1646 = vpop.xlane.xlu0 %1645
        %v1647 = vmax.f32 %v1498, %v1500
        %1648 = vmax.xlane.f32.xlu0 %v1647
        %v1649 = vpop.xlane.xlu0 %1648
        %v1650 = vmax.f32 %v1504, %v1506
        %1651 = vmax.xlane.f32.xlu0 %v1650
        %v1652 = vpop.xlane.xlu0 %1651
        %v1653 = vmax.f32 %v1508, %v1510
        %1654 = vmax.xlane.f32.xlu0 %v1653
        %v1655 = vpop.xlane.xlu0 %1654
        %v1656 = vmax.f32 %v1514, %v1516
        %1657 = vmax.xlane.f32.xlu0 %v1656
        %v1658 = vpop.xlane.xlu0 %1657
        %v1659 = vmax.f32 %v1518, %v1520
        %1660 = vmax.xlane.f32.xlu0 %v1659
        %v1661 = vpop.xlane.xlu0 %1660
        %v1662 = vmax.f32 %v1524, %v1526
        %1663 = vmax.xlane.f32.xlu0 %v1662
        %v1664 = vpop.xlane.xlu0 %1663
        %v1665 = vmax.f32 %v1528, %v1530
        %1666 = vmax.xlane.f32.xlu0 %v1665
        %v1667 = vpop.xlane.xlu0 %1666
        %v1668 = vmax.f32 %v1534, %v1536
        %1669 = vmax.xlane.f32.xlu0 %v1668
        %v1670 = vpop.xlane.xlu0 %1669
        %v1671 = vmax.f32 %v1538, %v1540
        %1672 = vmax.xlane.f32.xlu0 %v1671
        %v1673 = vpop.xlane.xlu0 %1672
        %v1674 = vmax.f32 %v1544, %v1546
        %1675 = vmax.xlane.f32.xlu0 %v1674
        %v1676 = vpop.xlane.xlu0 %1675
        %v1677 = vmax.f32 %v1548, %v1550
        %1678 = vmax.xlane.f32.xlu0 %v1677
        %v1679 = vpop.xlane.xlu0 %1678
        %v1680 = vmax.f32 %v1554, %v1556
        %1681 = vmax.xlane.f32.xlu0 %v1680
        %v1682 = vpop.xlane.xlu0 %1681
        %v1683 = vmax.f32 %v1558, %v1560
        %1684 = vmax.xlane.f32.xlu0 %v1683
        %v1685 = vpop.xlane.xlu0 %1684
        %v1686 = vmax.f32 %v1564, %v1566
        %1687 = vmax.xlane.f32.xlu0 %v1686
        %v1688 = vpop.xlane.xlu0 %1687
        %v1689 = vmax.f32 %v1568, %v1570
        %1690 = vmax.xlane.f32.xlu0 %v1689
        %v1691 = vpop.xlane.xlu0 %1690
        %v1692 = vmax.f32 %v1574, %v1576
        %1693 = vmax.xlane.f32.xlu0 %v1692
        %v1694 = vpop.xlane.xlu0 %1693
        %v1695 = vmax.f32 %v1578, %v1580
        %1696 = vmax.xlane.f32.xlu0 %v1695
        %v1697 = vpop.xlane.xlu0 %1696
        %v1698 = vmax.f32 %v1584, %v1586
        %1699 = vmax.xlane.f32.xlu0 %v1698
        %v1700 = vpop.xlane.xlu0 %1699
        %v1701 = vmax.f32 %v1588, %v1590
        %1702 = vmax.xlane.f32.xlu0 %v1701
        %v1703 = vpop.xlane.xlu0 %1702
        %v1704 = vmax.f32 %v1594, %v1596
        %1705 = vmax.xlane.f32.xlu0 %v1704
        %v1706 = vpop.xlane.xlu0 %1705
        %v1707 = vmax.f32 %v1598, %v1600
        %1708 = vmax.xlane.f32.xlu0 %v1707
        %v1709 = vpop.xlane.xlu0 %1708
        %v1710 = vmax.f32 %v1604, %v1606
        %1711 = vmax.xlane.f32.xlu0 %v1710
        %v1712 = vpop.xlane.xlu0 %1711
        %v1713 = vmax.f32 %v1608, %v1610
        %1714 = vmax.xlane.f32.xlu0 %v1713
        %v1715 = vpop.xlane.xlu0 %1714
        %v1716 = vmax.f32 %v1614, %v1616
        %1717 = vmax.xlane.f32.xlu0 %v1716
        %v1718 = vpop.xlane.xlu0 %1717
        %v1719 = vmax.f32 %v1618, %v1620
        %1720 = vmax.xlane.f32.xlu0 %v1719
        %v1721 = vpop.xlane.xlu0 %1720
        %v1722 = vmax.f32 %v1624, %v1626
        %1723 = vmax.xlane.f32.xlu0 %v1722
        %v1724 = vpop.xlane.xlu0 %1723
        %v1725 = vmax.f32 %v1628, %v1630
        %1726 = vmax.xlane.f32.xlu0 %v1725
        %v1727 = vpop.xlane.xlu0 %1726
        %v1728 = vsub.f32 %v1474, %v1634
        %v1729 = vsub.f32 %v1476, %v1634
        %v1730 = vsub.f32 %v1478, %v1637
        %v1731 = vsub.f32 %v1480, %v1637
        %v1732 = vsub.f32 %v1484, %v1640
        %v1733 = vsub.f32 %v1486, %v1640
        %v1734 = vsub.f32 %v1488, %v1643
        %v1735 = vsub.f32 %v1490, %v1643
        %v1736 = vsub.f32 %v1494, %v1646
        %v1737 = vsub.f32 %v1496, %v1646
        %v1738 = vsub.f32 %v1498, %v1649
        %v1739 = vsub.f32 %v1500, %v1649
        %v1740 = vsub.f32 %v1504, %v1652
        %v1741 = vsub.f32 %v1506, %v1652
        %v1742 = vsub.f32 %v1508, %v1655
        %v1743 = vsub.f32 %v1510, %v1655
        %v1744 = vsub.f32 %v1514, %v1658
        %v1745 = vsub.f32 %v1516, %v1658
        %v1746 = vsub.f32 %v1518, %v1661
        %v1747 = vsub.f32 %v1520, %v1661
        %v1748 = vsub.f32 %v1524, %v1664
        %v1749 = vsub.f32 %v1526, %v1664
        %v1750 = vsub.f32 %v1528, %v1667
        %v1751 = vsub.f32 %v1530, %v1667
        %v1752 = vsub.f32 %v1534, %v1670
        %v1753 = vsub.f32 %v1536, %v1670
        %v1754 = vsub.f32 %v1538, %v1673
        %v1755 = vsub.f32 %v1540, %v1673
        %v1756 = vsub.f32 %v1544, %v1676
        %v1757 = vsub.f32 %v1546, %v1676
        %v1758 = vsub.f32 %v1548, %v1679
        %v1759 = vsub.f32 %v1550, %v1679
        %v1760 = vsub.f32 %v1554, %v1682
        %v1761 = vsub.f32 %v1556, %v1682
        %v1762 = vsub.f32 %v1558, %v1685
        %v1763 = vsub.f32 %v1560, %v1685
        %v1764 = vsub.f32 %v1564, %v1688
        %v1765 = vsub.f32 %v1566, %v1688
        %v1766 = vsub.f32 %v1568, %v1691
        %v1767 = vsub.f32 %v1570, %v1691
        %v1768 = vsub.f32 %v1574, %v1694
        %v1769 = vsub.f32 %v1576, %v1694
        %v1770 = vsub.f32 %v1578, %v1697
        %v1771 = vsub.f32 %v1580, %v1697
        %v1772 = vsub.f32 %v1584, %v1700
        %v1773 = vsub.f32 %v1586, %v1700
        %v1774 = vsub.f32 %v1588, %v1703
        %v1775 = vsub.f32 %v1590, %v1703
        %v1776 = vsub.f32 %v1594, %v1706
        %v1777 = vsub.f32 %v1596, %v1706
        %v1778 = vsub.f32 %v1598, %v1709
        %v1779 = vsub.f32 %v1600, %v1709
        %v1780 = vsub.f32 %v1604, %v1712
        %v1781 = vsub.f32 %v1606, %v1712
        %v1782 = vsub.f32 %v1608, %v1715
        %v1783 = vsub.f32 %v1610, %v1715
        %v1784 = vsub.f32 %v1614, %v1718
        %v1785 = vsub.f32 %v1616, %v1718
        %v1786 = vsub.f32 %v1618, %v1721
        %v1787 = vsub.f32 %v1620, %v1721
        %v1788 = vsub.f32 %v1624, %v1724
        %v1789 = vsub.f32 %v1626, %v1724
        %v1790 = vsub.f32 %v1628, %v1727
        %v1791 = vsub.f32 %v1630, %v1727
        %v1792 = vmul.f32 %v1728, 1.442695
        %v1793 = vpow.pop %v1792
        %v1794 = vmul.f32 %v1729, 1.442695
        %v1795 = vpow.pop %v1794
        %v1796 = vmul.f32 %v1730, 1.442695
        %v1797 = vpow.pop %v1796
        %v1798 = vmul.f32 %v1731, 1.442695
        %v1799 = vpow.pop %v1798
        %v1800 = vmul.f32 %v1732, 1.442695
        %v1801 = vpow.pop %v1800
        %v1802 = vmul.f32 %v1733, 1.442695
        %v1803 = vpow.pop %v1802
        %v1804 = vmul.f32 %v1734, 1.442695
        %v1805 = vpow.pop %v1804
        %v1806 = vmul.f32 %v1735, 1.442695
        %v1807 = vpow.pop %v1806
        %v1808 = vmul.f32 %v1736, 1.442695
        %v1809 = vpow.pop %v1808
        %v1810 = vmul.f32 %v1737, 1.442695
        %v1811 = vpow.pop %v1810
        %v1812 = vmul.f32 %v1738, 1.442695
        %v1813 = vpow.pop %v1812
        %v1814 = vmul.f32 %v1739, 1.442695
        %v1815 = vpow.pop %v1814
        %v1816 = vmul.f32 %v1740, 1.442695
        %v1817 = vpow.pop %v1816
        %v1818 = vmul.f32 %v1741, 1.442695
        %v1819 = vpow.pop %v1818
        %v1820 = vmul.f32 %v1742, 1.442695
        %v1821 = vpow.pop %v1820
        %v1822 = vmul.f32 %v1743, 1.442695
        %v1823 = vpow.pop %v1822
        %v1824 = vmul.f32 %v1744, 1.442695
        %v1825 = vpow.pop %v1824
        %v1826 = vmul.f32 %v1745, 1.442695
        %v1827 = vpow.pop %v1826
        %v1828 = vmul.f32 %v1746, 1.442695
        %v1829 = vpow.pop %v1828
        %v1830 = vmul.f32 %v1747, 1.442695
        %v1831 = vpow.pop %v1830
        %v1832 = vmul.f32 %v1748, 1.442695
        %v1833 = vpow.pop %v1832
        %v1834 = vmul.f32 %v1749, 1.442695
        %v1835 = vpow.pop %v1834
        %v1836 = vmul.f32 %v1750, 1.442695
        %v1837 = vpow.pop %v1836
        %v1838 = vmul.f32 %v1751, 1.442695
        %v1839 = vpow.pop %v1838
        %v1840 = vmul.f32 %v1752, 1.442695
        %v1841 = vpow.pop %v1840
        %v1842 = vmul.f32 %v1753, 1.442695
        %v1843 = vpow.pop %v1842
        %v1844 = vmul.f32 %v1754, 1.442695
        %v1845 = vpow.pop %v1844
        %v1846 = vmul.f32 %v1755, 1.442695
        %v1847 = vpow.pop %v1846
        %v1848 = vmul.f32 %v1756, 1.442695
        %v1849 = vpow.pop %v1848
        %v1850 = vmul.f32 %v1757, 1.442695
        %v1851 = vpow.pop %v1850
        %v1852 = vmul.f32 %v1758, 1.442695
        %v1853 = vpow.pop %v1852
        %v1854 = vmul.f32 %v1759, 1.442695
        %v1855 = vpow.pop %v1854
        %v1856 = vmul.f32 %v1760, 1.442695
        %v1857 = vpow.pop %v1856
        %v1858 = vmul.f32 %v1761, 1.442695
        %v1859 = vpow.pop %v1858
        %v1860 = vmul.f32 %v1762, 1.442695
        %v1861 = vpow.pop %v1860
        %v1862 = vmul.f32 %v1763, 1.442695
        %v1863 = vpow.pop %v1862
        %v1864 = vmul.f32 %v1764, 1.442695
        %v1865 = vpow.pop %v1864
        %v1866 = vmul.f32 %v1765, 1.442695
        %v1867 = vpow.pop %v1866
        %v1868 = vmul.f32 %v1766, 1.442695
        %v1869 = vpow.pop %v1868
        %v1870 = vmul.f32 %v1767, 1.442695
        %v1871 = vpow.pop %v1870
        %v1872 = vmul.f32 %v1768, 1.442695
        %v1873 = vpow.pop %v1872
        %v1874 = vmul.f32 %v1769, 1.442695
        %v1875 = vpow.pop %v1874
        %v1876 = vmul.f32 %v1770, 1.442695
        %v1877 = vpow.pop %v1876
        %v1878 = vmul.f32 %v1771, 1.442695
        %v1879 = vpow.pop %v1878
        %v1880 = vmul.f32 %v1772, 1.442695
        %v1881 = vpow.pop %v1880
        %v1882 = vmul.f32 %v1773, 1.442695
        %v1883 = vpow.pop %v1882
        %v1884 = vmul.f32 %v1774, 1.442695
        %v1885 = vpow.pop %v1884
        %v1886 = vmul.f32 %v1775, 1.442695
        %v1887 = vpow.pop %v1886
        %v1888 = vmul.f32 %v1776, 1.442695
        %v1889 = vpow.pop %v1888
        %v1890 = vmul.f32 %v1777, 1.442695
        %v1891 = vpow.pop %v1890
        %v1892 = vmul.f32 %v1778, 1.442695
        %v1893 = vpow.pop %v1892
        %v1894 = vmul.f32 %v1779, 1.442695
        %v1895 = vpow.pop %v1894
        %v1896 = vmul.f32 %v1780, 1.442695
        %v1897 = vpow.pop %v1896
        %v1898 = vmul.f32 %v1781, 1.442695
        %v1899 = vpow.pop %v1898
        %v1900 = vmul.f32 %v1782, 1.442695
        %v1901 = vpow.pop %v1900
        %v1902 = vmul.f32 %v1783, 1.442695
        %v1903 = vpow.pop %v1902
        %v1904 = vmul.f32 %v1784, 1.442695
        %v1905 = vpow.pop %v1904
        %v1906 = vmul.f32 %v1785, 1.442695
        %v1907 = vpow.pop %v1906
        %v1908 = vmul.f32 %v1786, 1.442695
        %v1909 = vpow.pop %v1908
        %v1910 = vmul.f32 %v1787, 1.442695
        %v1911 = vpow.pop %v1910
        %v1912 = vmul.f32 %v1788, 1.442695
        %v1913 = vpow.pop %v1912
        %v1914 = vmul.f32 %v1789, 1.442695
        %v1915 = vpow.pop %v1914
        %v1916 = vmul.f32 %v1790, 1.442695
        %v1917 = vpow.pop %v1916
        %v1918 = vmul.f32 %v1791, 1.442695
        %v1919 = vpow.pop %v1918
        %v1920 = vadd.f32 %v1793, %v1795
        %1921 = vadd.xlane.f32.xlu0 %v1920
        %v1922 = vpop.xlane.xlu0 %1921
        %v1923 = vadd.f32 %v1797, %v1799
        %1924 = vadd.xlane.f32.xlu0 %v1923
        %v1925 = vpop.xlane.xlu0 %1924
        %v1926 = vadd.f32 %v1801, %v1803
        %1927 = vadd.xlane.f32.xlu0 %v1926
        %v1928 = vpop.xlane.xlu0 %1927
        %v1929 = vadd.f32 %v1805, %v1807
        %1930 = vadd.xlane.f32.xlu0 %v1929
        %v1931 = vpop.xlane.xlu0 %1930
        %v1932 = vadd.f32 %v1809, %v1811
        %1933 = vadd.xlane.f32.xlu0 %v1932
        %v1934 = vpop.xlane.xlu0 %1933
        %v1935 = vadd.f32 %v1813, %v1815
        %1936 = vadd.xlane.f32.xlu0 %v1935
        %v1937 = vpop.xlane.xlu0 %1936
        %v1938 = vadd.f32 %v1817, %v1819
        %1939 = vadd.xlane.f32.xlu0 %v1938
        %v1940 = vpop.xlane.xlu0 %1939
        %v1941 = vadd.f32 %v1821, %v1823
        %1942 = vadd.xlane.f32.xlu0 %v1941
        %v1943 = vpop.xlane.xlu0 %1942
        %v1944 = vadd.f32 %v1825, %v1827
        %1945 = vadd.xlane.f32.xlu0 %v1944
        %v1946 = vpop.xlane.xlu0 %1945
        %v1947 = vadd.f32 %v1829, %v1831
        %1948 = vadd.xlane.f32.xlu0 %v1947
        %v1949 = vpop.xlane.xlu0 %1948
        %v1950 = vadd.f32 %v1833, %v1835
        %1951 = vadd.xlane.f32.xlu0 %v1950
        %v1952 = vpop.xlane.xlu0 %1951
        %v1953 = vadd.f32 %v1837, %v1839
        %1954 = vadd.xlane.f32.xlu0 %v1953
        %v1955 = vpop.xlane.xlu0 %1954
        %v1956 = vadd.f32 %v1841, %v1843
        %1957 = vadd.xlane.f32.xlu0 %v1956
        %v1958 = vpop.xlane.xlu0 %1957
        %v1959 = vadd.f32 %v1845, %v1847
        %1960 = vadd.xlane.f32.xlu0 %v1959
        %v1961 = vpop.xlane.xlu0 %1960
        %v1962 = vadd.f32 %v1849, %v1851
        %1963 = vadd.xlane.f32.xlu0 %v1962
        %v1964 = vpop.xlane.xlu0 %1963
        %v1965 = vadd.f32 %v1853, %v1855
        %1966 = vadd.xlane.f32.xlu0 %v1965
        %v1967 = vpop.xlane.xlu0 %1966
        %v1968 = vadd.f32 %v1857, %v1859
        %1969 = vadd.xlane.f32.xlu0 %v1968
        %v1970 = vpop.xlane.xlu0 %1969
        %v1971 = vadd.f32 %v1861, %v1863
        %1972 = vadd.xlane.f32.xlu0 %v1971
        %v1973 = vpop.xlane.xlu0 %1972
        %v1974 = vadd.f32 %v1865, %v1867
        %1975 = vadd.xlane.f32.xlu0 %v1974
        %v1976 = vpop.xlane.xlu0 %1975
        %v1977 = vadd.f32 %v1869, %v1871
        %1978 = vadd.xlane.f32.xlu0 %v1977
        %v1979 = vpop.xlane.xlu0 %1978
        %v1980 = vadd.f32 %v1873, %v1875
        %1981 = vadd.xlane.f32.xlu0 %v1980
        %v1982 = vpop.xlane.xlu0 %1981
        %v1983 = vadd.f32 %v1877, %v1879
        %1984 = vadd.xlane.f32.xlu0 %v1983
        %v1985 = vpop.xlane.xlu0 %1984
        %v1986 = vadd.f32 %v1881, %v1883
        %1987 = vadd.xlane.f32.xlu0 %v1986
        %v1988 = vpop.xlane.xlu0 %1987
        %v1989 = vadd.f32 %v1885, %v1887
        %1990 = vadd.xlane.f32.xlu0 %v1989
        %v1991 = vpop.xlane.xlu0 %1990
        %v1992 = vadd.f32 %v1889, %v1891
        %1993 = vadd.xlane.f32.xlu0 %v1992
        %v1994 = vpop.xlane.xlu0 %1993
        %v1995 = vadd.f32 %v1893, %v1895
        %1996 = vadd.xlane.f32.xlu0 %v1995
        %v1997 = vpop.xlane.xlu0 %1996
        %v1998 = vadd.f32 %v1897, %v1899
        %1999 = vadd.xlane.f32.xlu0 %v1998
        %v2000 = vpop.xlane.xlu0 %1999
        %v2001 = vadd.f32 %v1901, %v1903
        %2002 = vadd.xlane.f32.xlu0 %v2001
        %v2003 = vpop.xlane.xlu0 %2002
        %v2004 = vadd.f32 %v1905, %v1907
        %2005 = vadd.xlane.f32.xlu0 %v2004
        %v2006 = vpop.xlane.xlu0 %2005
        %v2007 = vadd.f32 %v1909, %v1911
        %2008 = vadd.xlane.f32.xlu0 %v2007
        %v2009 = vpop.xlane.xlu0 %2008
        %v2010 = vadd.f32 %v1913, %v1915
        %2011 = vadd.xlane.f32.xlu0 %v2010
        %v2012 = vpop.xlane.xlu0 %2011
        %v2013 = vadd.f32 %v1917, %v1919
        %2014 = vadd.xlane.f32.xlu0 %v2013
        %v2015 = vpop.xlane.xlu0 %2014
        %v2016 = vrcp.pop %v1922
        %v2017 = vrcp.pop %v1925
        %v2018 = vrcp.pop %v1928
        %v2019 = vrcp.pop %v1931
        %v2020 = vrcp.pop %v1934
        %v2021 = vrcp.pop %v1937
        %v2022 = vrcp.pop %v1940
        %v2023 = vrcp.pop %v1943
        %v2024 = vrcp.pop %v1946
        %v2025 = vrcp.pop %v1949
        %v2026 = vrcp.pop %v1952
        %v2027 = vrcp.pop %v1955
        %v2028 = vrcp.pop %v1958
        %v2029 = vrcp.pop %v1961
        %v2030 = vrcp.pop %v1964
        %v2031 = vrcp.pop %v1967
        %v2032 = vrcp.pop %v1970
        %v2033 = vrcp.pop %v1973
        %v2034 = vrcp.pop %v1976
        %v2035 = vrcp.pop %v1979
        %v2036 = vrcp.pop %v1982
        %v2037 = vrcp.pop %v1985
        %v2038 = vrcp.pop %v1988
        %v2039 = vrcp.pop %v1991
        %v2040 = vrcp.pop %v1994
        %v2041 = vrcp.pop %v1997
        %v2042 = vrcp.pop %v2000
        %v2043 = vrcp.pop %v2003
        %v2044 = vrcp.pop %v2006
        %v2045 = vrcp.pop %v2009
        %v2046 = vrcp.pop %v2012
        %v2047 = vrcp.pop %v2015
        %v2048 = vmul.f32 %v1793, %v2016
        %v2049 = vmul.f32 %v1795, %v2016
        %v2050 = vmul.f32 %v1797, %v2017
        %v2051 = vmul.f32 %v1799, %v2017
        %v2052 = vmul.f32 %v1801, %v2018
        %v2053 = vmul.f32 %v1803, %v2018
        %v2054 = vmul.f32 %v1805, %v2019
        %v2055 = vmul.f32 %v1807, %v2019
        %v2056 = vmul.f32 %v1809, %v2020
        %v2057 = vmul.f32 %v1811, %v2020
        %v2058 = vmul.f32 %v1813, %v2021
        %v2059 = vmul.f32 %v1815, %v2021
        %v2060 = vmul.f32 %v1817, %v2022
        %v2061 = vmul.f32 %v1819, %v2022
        %v2062 = vmul.f32 %v1821, %v2023
        %v2063 = vmul.f32 %v1823, %v2023
        %v2064 = vmul.f32 %v1825, %v2024
        %v2065 = vmul.f32 %v1827, %v2024
        %v2066 = vmul.f32 %v1829, %v2025
        %v2067 = vmul.f32 %v1831, %v2025
        %v2068 = vmul.f32 %v1833, %v2026
        %v2069 = vmul.f32 %v1835, %v2026
        %v2070 = vmul.f32 %v1837, %v2027
        %v2071 = vmul.f32 %v1839, %v2027
        %v2072 = vmul.f32 %v1841, %v2028
        %v2073 = vmul.f32 %v1843, %v2028
        %v2074 = vmul.f32 %v1845, %v2029
        %v2075 = vmul.f32 %v1847, %v2029
        %v2076 = vmul.f32 %v1849, %v2030
        %v2077 = vmul.f32 %v1851, %v2030
        %v2078 = vmul.f32 %v1853, %v2031
        %v2079 = vmul.f32 %v1855, %v2031
        %v2080 = vmul.f32 %v1857, %v2032
        %v2081 = vmul.f32 %v1859, %v2032
        %v2082 = vmul.f32 %v1861, %v2033
        %v2083 = vmul.f32 %v1863, %v2033
        %v2084 = vmul.f32 %v1865, %v2034
        %v2085 = vmul.f32 %v1867, %v2034
        %v2086 = vmul.f32 %v1869, %v2035
        %v2087 = vmul.f32 %v1871, %v2035
        %v2088 = vmul.f32 %v1873, %v2036
        %v2089 = vmul.f32 %v1875, %v2036
        %v2090 = vmul.f32 %v1877, %v2037
        %v2091 = vmul.f32 %v1879, %v2037
        %v2092 = vmul.f32 %v1881, %v2038
        %v2093 = vmul.f32 %v1883, %v2038
        %v2094 = vmul.f32 %v1885, %v2039
        %v2095 = vmul.f32 %v1887, %v2039
        %v2096 = vmul.f32 %v1889, %v2040
        %v2097 = vmul.f32 %v1891, %v2040
        %v2098 = vmul.f32 %v1893, %v2041
        %v2099 = vmul.f32 %v1895, %v2041
        %v2100 = vmul.f32 %v1897, %v2042
        %v2101 = vmul.f32 %v1899, %v2042
        %v2102 = vmul.f32 %v1901, %v2043
        %v2103 = vmul.f32 %v1903, %v2043
        %v2104 = vmul.f32 %v1905, %v2044
        %v2105 = vmul.f32 %v1907, %v2044
        %v2106 = vmul.f32 %v1909, %v2045
        %v2107 = vmul.f32 %v1911, %v2045
        %v2108 = vmul.f32 %v1913, %v2046
        %v2109 = vmul.f32 %v1915, %v2046
        %v2110 = vmul.f32 %v1917, %v2047
        %v2111 = vmul.f32 %v1919, %v2047
        %v2112 = vpack.c.bf16 %v2050, %v2048
        %v2113 = vpack.c.bf16 %v2051, %v2049
        %v2114 = vpack.c.bf16 %v2054, %v2052
        %v2115 = vpack.c.bf16 %v2055, %v2053
        %v2116 = vpack.c.bf16 %v2058, %v2056
        %v2117 = vpack.c.bf16 %v2059, %v2057
        %v2118 = vpack.c.bf16 %v2062, %v2060
        %v2119 = vpack.c.bf16 %v2063, %v2061
        %v2120 = vpack.c.bf16 %v2066, %v2064
        %v2121 = vpack.c.bf16 %v2067, %v2065
        %v2122 = vpack.c.bf16 %v2070, %v2068
        %v2123 = vpack.c.bf16 %v2071, %v2069
        %v2124 = vpack.c.bf16 %v2074, %v2072
        %v2125 = vpack.c.bf16 %v2075, %v2073
        %v2126 = vpack.c.bf16 %v2078, %v2076
        %v2127 = vpack.c.bf16 %v2079, %v2077
        %v2128 = vpack.c.bf16 %v2082, %v2080
        %v2129 = vpack.c.bf16 %v2083, %v2081
        %v2130 = vpack.c.bf16 %v2086, %v2084
        %v2131 = vpack.c.bf16 %v2087, %v2085
        %v2132 = vpack.c.bf16 %v2090, %v2088
        %v2133 = vpack.c.bf16 %v2091, %v2089
        %v2134 = vpack.c.bf16 %v2094, %v2092
        %v2135 = vpack.c.bf16 %v2095, %v2093
        %v2136 = vpack.c.bf16 %v2098, %v2096
        %v2137 = vpack.c.bf16 %v2099, %v2097
        %v2138 = vpack.c.bf16 %v2102, %v2100
        %v2139 = vpack.c.bf16 %v2103, %v2101
        %v2140 = vpack.c.bf16 %v2106, %v2104
        %v2141 = vpack.c.bf16 %v2107, %v2105
        %v2142 = vpack.c.bf16 %v2110, %v2108
        %v2143 = vpack.c.bf16 %v2111, %v2109
        %2144 = vmatprep.subr.bf16.mxu0 0
        %2145 = vmatpush1.bf16.msra.mxu0 %v1326
        %2146 = vmatprep.subr.bf16.mxu0 0
        %2147 = vmatpush1.bf16.msra.mxu0 %v1327
        %2148 = vmatprep.subr.bf16.mxu0 0
        %2149 = vmatpush1.bf16.msra.mxu0 %v1328
        %2150 = vmatprep.subr.bf16.mxu0 0
        %2151 = vmatpush1.bf16.msra.mxu0 %v1329
        %2152 = vmatprep.subr.bf16.mxu0 0
        %2153 = vmatpush1.bf16.msra.mxu0 %v1330
        %2154 = vmatprep.subr.bf16.mxu0 0
        %2155 = vmatpush1.bf16.msra.mxu0 %v1331
        %2156 = vmatprep.subr.bf16.mxu0 0
        %2157 = vmatpush1.bf16.msra.mxu0 %v1332
        %2158 = vmatprep.subr.bf16.mxu0 0
        %2159 = vmatpush1.bf16.msra.mxu0 %v1333
        %2160 = vmatprep.subr.bf16.mxu0 0
        %2161 = vmatpush1.bf16.msra.mxu0 %v1334
        %2162 = vmatprep.subr.bf16.mxu0 0
        %2163 = vmatpush1.bf16.msra.mxu0 %v1335
        %2164 = vmatprep.subr.bf16.mxu0 0
        %2165 = vmatpush1.bf16.msra.mxu0 %v1336
        %2166 = vmatprep.subr.bf16.mxu0 0
        %2167 = vmatpush1.bf16.msra.mxu0 %v1337
        %2168 = vmatprep.subr.bf16.mxu0 0
        %2169 = vmatpush1.bf16.msra.mxu0 %v1338
        %2170 = vmatprep.subr.bf16.mxu0 0
        %2171 = vmatpush1.bf16.msra.mxu0 %v1339
        %2172 = vmatprep.subr.bf16.mxu0 0
        %2173 = vmatpush1.bf16.msra.mxu0 %v1340
        %2174 = vmatprep.subr.bf16.mxu0 0
        %2175 = vmatpush1.bf16.msra.mxu0 %v1341
        %2176 = vmatprep.mubr.bf16.mxu0 %v2113
        %2177 = vmatmul.mubr.bf16.gmra.mrb[0].mxu0 %v2112
        %v2178 = vpop.f32.mrb[0].mxu0
        %v2179 = vadd.f32 0.0, %v2178
        %v2180 = vpop.f32.mrb[0].mxu0
        %v2181 = vpop.f32.mrb[0].mxu0
        %v2182 = vadd.f32 0.0, %v2181
        %v2183 = vpop.f32.mrb[0].mxu0
        %2184 = vmatprep.mubr.bf16.mxu0 %v2115
        %2185 = vmatmul.mubr.bf16.gmra.mrb[0].mxu0 %v2114
        %v2186 = vpop.f32.mrb[0].mxu0
        %v2187 = vadd.f32 0.0, %v2186
        %v2188 = vpop.f32.mrb[0].mxu0
        %v2189 = vpop.f32.mrb[0].mxu0
        %v2190 = vadd.f32 0.0, %v2189
        %v2191 = vpop.f32.mrb[0].mxu0
        %2192 = vmatprep.mubr.bf16.mxu0 %v2117
        %2193 = vmatmul.mubr.bf16.gmra.mrb[0].mxu0 %v2116
        %v2194 = vpop.f32.mrb[0].mxu0
        %v2195 = vadd.f32 0.0, %v2194
        %v2196 = vpop.f32.mrb[0].mxu0
        %v2197 = vpop.f32.mrb[0].mxu0
        %v2198 = vadd.f32 0.0, %v2197
        %v2199 = vpop.f32.mrb[0].mxu0
        %2200 = vmatprep.mubr.bf16.mxu0 %v2119
        %2201 = vmatmul.mubr.bf16.gmra.mrb[0].mxu0 %v2118
        %v2202 = vpop.f32.mrb[0].mxu0
        %v2203 = vadd.f32 0.0, %v2202
        %v2204 = vpop.f32.mrb[0].mxu0
        %v2205 = vpop.f32.mrb[0].mxu0
        %v2206 = vadd.f32 0.0, %v2205
        %v2207 = vpop.f32.mrb[0].mxu0
        %2208 = vmatprep.mubr.bf16.mxu0 %v2121
        %2209 = vmatmul.mubr.bf16.gmra.mrb[0].mxu0 %v2120
        %v2210 = vpop.f32.mrb[0].mxu0
        %v2211 = vadd.f32 0.0, %v2210
        %v2212 = vpop.f32.mrb[0].mxu0
        %v2213 = vpop.f32.mrb[0].mxu0
        %v2214 = vadd.f32 0.0, %v2213
        %v2215 = vpop.f32.mrb[0].mxu0
        %2216 = vmatprep.mubr.bf16.mxu0 %v2123
        %2217 = vmatmul.mubr.bf16.gmra.mrb[0].mxu0 %v2122
        %v2218 = vpop.f32.mrb[0].mxu0
        %v2219 = vadd.f32 0.0, %v2218
        %v2220 = vpop.f32.mrb[0].mxu0
        %v2221 = vpop.f32.mrb[0].mxu0
        %v2222 = vadd.f32 0.0, %v2221
        %v2223 = vpop.f32.mrb[0].mxu0
        %2224 = vmatprep.mubr.bf16.mxu0 %v2125
        %2225 = vmatmul.mubr.bf16.gmra.mrb[0].mxu0 %v2124
        %v2226 = vpop.f32.mrb[0].mxu0
        %v2227 = vadd.f32 0.0, %v2226
        %v2228 = vpop.f32.mrb[0].mxu0
        %v2229 = vpop.f32.mrb[0].mxu0
        %v2230 = vadd.f32 0.0, %v2229
        %v2231 = vpop.f32.mrb[0].mxu0
        %2232 = vmatprep.mubr.bf16.mxu0 %v2127
        %2233 = vmatmul.mubr.bf16.gmra.mrb[0].mxu0 %v2126
        %v2234 = vpop.f32.mrb[0].mxu0
        %v2235 = vadd.f32 0.0, %v2234
        %v2236 = vpop.f32.mrb[0].mxu0
        %v2237 = vpop.f32.mrb[0].mxu0
        %v2238 = vadd.f32 0.0, %v2237
        %v2239 = vpop.f32.mrb[0].mxu0
        %2240 = vmatprep.mubr.bf16.mxu0 %v2129
        %2241 = vmatmul.mubr.bf16.gmra.mrb[0].mxu0 %v2128
        %v2242 = vpop.f32.mrb[0].mxu0
        %v2243 = vadd.f32 0.0, %v2242
        %v2244 = vpop.f32.mrb[0].mxu0
        %v2245 = vpop.f32.mrb[0].mxu0
        %v2246 = vadd.f32 0.0, %v2245
        %v2247 = vpop.f32.mrb[0].mxu0
        %2248 = vmatprep.mubr.bf16.mxu0 %v2131
        %2249 = vmatmul.mubr.bf16.gmra.mrb[0].mxu0 %v2130
        %v2250 = vpop.f32.mrb[0].mxu0
        %v2251 = vadd.f32 0.0, %v2250
        %v2252 = vpop.f32.mrb[0].mxu0
        %v2253 = vpop.f32.mrb[0].mxu0
        %v2254 = vadd.f32 0.0, %v2253
        %v2255 = vpop.f32.mrb[0].mxu0
        %2256 = vmatprep.mubr.bf16.mxu0 %v2133
        %2257 = vmatmul.mubr.bf16.gmra.mrb[0].mxu0 %v2132
        %v2258 = vpop.f32.mrb[0].mxu0
        %v2259 = vadd.f32 0.0, %v2258
        %v2260 = vpop.f32.mrb[0].mxu0
        %v2261 = vpop.f32.mrb[0].mxu0
        %v2262 = vadd.f32 0.0, %v2261
        %v2263 = vpop.f32.mrb[0].mxu0
        %2264 = vmatprep.mubr.bf16.mxu0 %v2135
        %2265 = vmatmul.mubr.bf16.gmra.mrb[0].mxu0 %v2134
        %v2266 = vpop.f32.mrb[0].mxu0
        %v2267 = vadd.f32 0.0, %v2266
        %v2268 = vpop.f32.mrb[0].mxu0
        %v2269 = vpop.f32.mrb[0].mxu0
        %v2270 = vadd.f32 0.0, %v2269
        %v2271 = vpop.f32.mrb[0].mxu0
        %2272 = vmatprep.mubr.bf16.mxu0 %v2137
        %2273 = vmatmul.mubr.bf16.gmra.mrb[0].mxu0 %v2136
        %v2274 = vpop.f32.mrb[0].mxu0
        %v2275 = vadd.f32 0.0, %v2274
        %v2276 = vpop.f32.mrb[0].mxu0
        %v2277 = vpop.f32.mrb[0].mxu0
        %v2278 = vadd.f32 0.0, %v2277
        %v2279 = vpop.f32.mrb[0].mxu0
        %2280 = vmatprep.mubr.bf16.mxu0 %v2139
        %2281 = vmatmul.mubr.bf16.gmra.mrb[0].mxu0 %v2138
        %v2282 = vpop.f32.mrb[0].mxu0
        %v2283 = vadd.f32 0.0, %v2282
        %v2284 = vpop.f32.mrb[0].mxu0
        %v2285 = vpop.f32.mrb[0].mxu0
        %v2286 = vadd.f32 0.0, %v2285
        %v2287 = vpop.f32.mrb[0].mxu0
        %2288 = vmatprep.mubr.bf16.mxu0 %v2141
        %2289 = vmatmul.mubr.bf16.gmra.mrb[0].mxu0 %v2140
        %v2290 = vpop.f32.mrb[0].mxu0
        %v2291 = vadd.f32 0.0, %v2290
        %v2292 = vpop.f32.mrb[0].mxu0
        %v2293 = vpop.f32.mrb[0].mxu0
        %v2294 = vadd.f32 0.0, %v2293
        %v2295 = vpop.f32.mrb[0].mxu0
        %2296 = vmatprep.mubr.bf16.mxu0 %v2143
        %2297 = vmatmul.mubr.bf16.gmra.mrb[0].mxu0 %v2142
        %v2298 = vpop.f32.mrb[0].mxu0
        %v2299 = vadd.f32 0.0, %v2298
        %v2300 = vpop.f32.mrb[0].mxu0
        %v2301 = vpop.f32.mrb[0].mxu0
        %v2302 = vadd.f32 0.0, %v2301
        %v2303 = vpop.f32.mrb[0].mxu0
        %2304 = vdwg.mxu0
        %v2305 = vld [vmem:[%s7] sm:$0xf]
        %v2306 = vld [vmem:[%s7 + $0x4] sm:$0xf]
        %v2307 = vld [vmem:[%s7 + $0x8] sm:$0xf]
        %v2308 = vld [vmem:[%s7 + $0xc] sm:$0xf]
        %v2309 = vpack.c.bf16 %v2182, %v2179
        %v2310 = vpack.c.bf16 %v2190, %v2187
        %v2311 = vpack.c.bf16 %v2198, %v2195
        %v2312 = vpack.c.bf16 %v2206, %v2203
        %v2313 = vpack.c.bf16 %v2214, %v2211
        %v2314 = vpack.c.bf16 %v2222, %v2219
        %v2315 = vpack.c.bf16 %v2230, %v2227
        %v2316 = vpack.c.bf16 %v2238, %v2235
        %v2317 = vpack.c.bf16 %v2246, %v2243
        %v2318 = vpack.c.bf16 %v2254, %v2251
        %v2319 = vpack.c.bf16 %v2262, %v2259
        %v2320 = vpack.c.bf16 %v2270, %v2267
        %v2321 = vpack.c.bf16 %v2278, %v2275
        %v2322 = vpack.c.bf16 %v2286, %v2283
        %v2323 = vpack.c.bf16 %v2294, %v2291
        %v2324 = vpack.c.bf16 %v2302, %v2299
        %2341 = vrot.lane.b32.xlu0 %v1294, 120
        %v2342 = vpop.permute.xlu0 %2341
        %2343 = vrot.lane.b32.xlu0 %v1295, 120
        %v2344 = vpop.permute.xlu0 %2343
        %2345 = vrot.lane.b32.xlu0 %v1296, 120
        %v2346 = vpop.permute.xlu0 %2345
        %2347 = vrot.lane.b32.xlu0 %v1297, 120
        %v2348 = vpop.permute.xlu0 %2347
        %2349 = vrot.lane.b32.xlu0 %v1298, 120
        %v2350 = vpop.permute.xlu0 %2349
        %2351 = vrot.lane.b32.xlu0 %v1299, 120
        %v2352 = vpop.permute.xlu0 %2351
        %2353 = vrot.lane.b32.xlu0 %v1300, 120
        %v2354 = vpop.permute.xlu0 %2353
        %2355 = vrot.lane.b32.xlu0 %v1301, 120
        %v2356 = vpop.permute.xlu0 %2355
        %2357 = vrot.lane.b32.xlu0 %v1302, 120
        %v2358 = vpop.permute.xlu0 %2357
        %2359 = vrot.lane.b32.xlu0 %v1303, 120
        %v2360 = vpop.permute.xlu0 %2359
        %2361 = vrot.lane.b32.xlu0 %v1304, 120
        %v2362 = vpop.permute.xlu0 %2361
        %2363 = vrot.lane.b32.xlu0 %v1305, 120
        %v2364 = vpop.permute.xlu0 %2363
        %2365 = vrot.lane.b32.xlu0 %v1306, 120
        %v2366 = vpop.permute.xlu0 %2365
        %2367 = vrot.lane.b32.xlu0 %v1307, 120
        %v2368 = vpop.permute.xlu0 %2367
        %2369 = vrot.lane.b32.xlu0 %v1308, 120
        %v2370 = vpop.permute.xlu0 %2369
        %2371 = vrot.lane.b32.xlu0 %v1309, 120
        %v2372 = vpop.permute.xlu0 %2371
        %2389 = vrot.lane.b32.xlu0 %v1310, 120
        %v2390 = vpop.permute.xlu0 %2389
        %2391 = vrot.lane.b32.xlu0 %v1311, 120
        %v2392 = vpop.permute.xlu0 %2391
        %2393 = vrot.lane.b32.xlu0 %v1312, 120
        %v2394 = vpop.permute.xlu0 %2393
        %2395 = vrot.lane.b32.xlu0 %v1313, 120
        %v2396 = vpop.permute.xlu0 %2395
        %2397 = vrot.lane.b32.xlu0 %v1314, 120
        %v2398 = vpop.permute.xlu0 %2397
        %2399 = vrot.lane.b32.xlu0 %v1315, 120
        %v2400 = vpop.permute.xlu0 %2399
        %2401 = vrot.lane.b32.xlu0 %v1316, 120
        %v2402 = vpop.permute.xlu0 %2401
        %2403 = vrot.lane.b32.xlu0 %v1317, 120
        %v2404 = vpop.permute.xlu0 %2403
        %2405 = vrot.lane.b32.xlu0 %v1318, 120
        %v2406 = vpop.permute.xlu0 %2405
        %2407 = vrot.lane.b32.xlu0 %v1319, 120
        %v2408 = vpop.permute.xlu0 %2407
        %2409 = vrot.lane.b32.xlu0 %v1320, 120
        %v2410 = vpop.permute.xlu0 %2409
        %2411 = vrot.lane.b32.xlu0 %v1321, 120
        %v2412 = vpop.permute.xlu0 %2411
        %2413 = vrot.lane.b32.xlu0 %v1322, 120
        %v2414 = vpop.permute.xlu0 %2413
        %2415 = vrot.lane.b32.xlu0 %v1323, 120
        %v2416 = vpop.permute.xlu0 %2415
        %2417 = vrot.lane.b32.xlu0 %v1324, 120
        %v2418 = vpop.permute.xlu0 %2417
        %2419 = vrot.lane.b32.xlu0 %v1325, 120
        %v2420 = vpop.permute.xlu0 %2419
        %v2422 = vsel %vm1342, %v2342, 0
        %v2425 = vsel %vm1342, %v2344, 0
        %v2428 = vsel %vm1342, %v2346, 0
        %v2431 = vsel %vm1342, %v2348, 0
        %v2434 = vsel %vm1342, %v2350, 0
        %v2437 = vsel %vm1342, %v2352, 0
        %v2440 = vsel %vm1342, %v2354, 0
        %v2443 = vsel %vm1342, %v2356, 0
        %v2446 = vsel %vm1342, %v2358, 0
        %v2449 = vsel %vm1342, %v2360, 0
        %v2452 = vsel %vm1342, %v2362, 0
        %v2455 = vsel %vm1342, %v2364, 0
        %v2458 = vsel %vm1342, %v2366, 0
        %v2461 = vsel %vm1342, %v2368, 0
        %v2464 = vsel %vm1342, %v2370, 0
        %v2467 = vsel %vm1342, %v2372, 0
        %v2470 = vsel %vm1342, %v2390, 0
        %v2473 = vsel %vm1342, %v2392, 0
        %v2476 = vsel %vm1342, %v2394, 0
        %v2479 = vsel %vm1342, %v2396, 0
        %v2482 = vsel %vm1342, %v2398, 0
        %v2485 = vsel %vm1342, %v2400, 0
        %v2488 = vsel %vm1342, %v2402, 0
        %v2491 = vsel %vm1342, %v2404, 0
        %v2494 = vsel %vm1342, %v2406, 0
        %v2497 = vsel %vm1342, %v2408, 0
        %v2500 = vsel %vm1342, %v2410, 0
        %v2503 = vsel %vm1342, %v2412, 0
        %v2506 = vsel %vm1342, %v2414, 0
        %v2509 = vsel %vm1342, %v2416, 0
        %v2512 = vsel %vm1342, %v2418, 0
        %v2515 = vsel %vm1342, %v2420, 0
        %2517 = vmatprep.subr.bf16.mxu0 0
        %2518 = vmatpush1.bf16.xpose.msra.mxu0 %v2470
        %2519 = vmatprep.subr.bf16.mxu0 0
        %2520 = vmatpush1.bf16.xpose.msra.mxu0 %v2473
        %2521 = vmatprep.subr.bf16.mxu0 0
        %2522 = vmatpush1.bf16.xpose.msra.mxu0 %v2476
        %2523 = vmatprep.subr.bf16.mxu0 0
        %2524 = vmatpush1.bf16.xpose.msra.mxu0 %v2479
        %2525 = vmatprep.subr.bf16.mxu0 0
        %2526 = vmatpush1.bf16.xpose.msra.mxu0 %v2482
        %2527 = vmatprep.subr.bf16.mxu0 0
        %2528 = vmatpush1.bf16.xpose.msra.mxu0 %v2485
        %2529 = vmatprep.subr.bf16.mxu0 0
        %2530 = vmatpush1.bf16.xpose.msra.mxu0 %v2488
        %2531 = vmatprep.subr.bf16.mxu0 0
        %2532 = vmatpush1.bf16.xpose.msra.mxu0 %v2491
        %2533 = vmatprep.subr.bf16.mxu0 0
        %2534 = vmatpush1.bf16.xpose.msra.mxu0 %v2494
        %2535 = vmatprep.subr.bf16.mxu0 0
        %2536 = vmatpush1.bf16.xpose.msra.mxu0 %v2497
        %2537 = vmatprep.subr.bf16.mxu0 0
        %2538 = vmatpush1.bf16.xpose.msra.mxu0 %v2500
        %2539 = vmatprep.subr.bf16.mxu0 0
        %2540 = vmatpush1.bf16.xpose.msra.mxu0 %v2503
        %2541 = vmatprep.subr.bf16.mxu0 0
        %2542 = vmatpush1.bf16.xpose.msra.mxu0 %v2506
        %2543 = vmatprep.subr.bf16.mxu0 0
        %2544 = vmatpush1.bf16.xpose.msra.mxu0 %v2509
        %2545 = vmatprep.subr.bf16.mxu0 0
        %2546 = vmatpush1.bf16.xpose.msra.mxu0 %v2512
        %2547 = vmatprep.subr.bf16.mxu0 0
        %2548 = vmatpush1.bf16.xpose.msra.mxu0 %v2515
        %2549 = vmatprep.mubr.bf16.mxu0 0
        %2550 = vmatmul.mubr.bf16.gmra.mrb[0].mxu0 %v2422
        %v2551 = vpop.f32.mrb[0].mxu0
        %v2552 = vadd.f32 0.0, %v2551
        %v2553 = vpop.f32.mrb[0].mxu0
        %v2554 = vadd.f32 0.0, %v2553
        %v2555 = vpop.f32.mrb[0].mxu0
        %v2556 = vadd.f32 0.0, %v2555
        %v2557 = vpop.f32.mrb[0].mxu0
        %v2558 = vadd.f32 0.0, %v2557
        %2559 = vmatprep.mubr.bf16.mxu0 0
        %2560 = vmatmul.mubr.bf16.gmra.mrb[0].mxu0 %v2425
        %v2561 = vpop.f32.mrb[0].mxu0
        %v2562 = vadd.f32 0.0, %v2561
        %v2563 = vpop.f32.mrb[0].mxu0
        %v2564 = vadd.f32 0.0, %v2563
        %v2565 = vpop.f32.mrb[0].mxu0
        %v2566 = vadd.f32 0.0, %v2565
        %v2567 = vpop.f32.mrb[0].mxu0
        %v2568 = vadd.f32 0.0, %v2567
        %2569 = vmatprep.mubr.bf16.mxu0 0
        %2570 = vmatmul.mubr.bf16.gmra.mrb[0].mxu0 %v2428
        %v2571 = vpop.f32.mrb[0].mxu0
        %v2572 = vadd.f32 0.0, %v2571
        %v2573 = vpop.f32.mrb[0].mxu0
        %v2574 = vadd.f32 0.0, %v2573
        %v2575 = vpop.f32.mrb[0].mxu0
        %v2576 = vadd.f32 0.0, %v2575
        %v2577 = vpop.f32.mrb[0].mxu0
        %v2578 = vadd.f32 0.0, %v2577
        %2579 = vmatprep.mubr.bf16.mxu0 0
        %2580 = vmatmul.mubr.bf16.gmra.mrb[0].mxu0 %v2431
        %v2581 = vpop.f32.mrb[0].mxu0
        %v2582 = vadd.f32 0.0, %v2581
        %v2583 = vpop.f32.mrb[0].mxu0
        %v2584 = vadd.f32 0.0, %v2583
        %v2585 = vpop.f32.mrb[0].mxu0
        %v2586 = vadd.f32 0.0, %v2585
        %v2587 = vpop.f32.mrb[0].mxu0
        %v2588 = vadd.f32 0.0, %v2587
        %2589 = vmatprep.mubr.bf16.mxu0 0
        %2590 = vmatmul.mubr.bf16.gmra.mrb[0].mxu0 %v2434
        %v2591 = vpop.f32.mrb[0].mxu0
        %v2592 = vadd.f32 0.0, %v2591
        %v2593 = vpop.f32.mrb[0].mxu0
        %v2594 = vadd.f32 0.0, %v2593
        %v2595 = vpop.f32.mrb[0].mxu0
        %v2596 = vadd.f32 0.0, %v2595
        %v2597 = vpop.f32.mrb[0].mxu0
        %v2598 = vadd.f32 0.0, %v2597
        %2599 = vmatprep.mubr.bf16.mxu0 0
        %2600 = vmatmul.mubr.bf16.gmra.mrb[0].mxu0 %v2437
        %v2601 = vpop.f32.mrb[0].mxu0
        %v2602 = vadd.f32 0.0, %v2601
        %v2603 = vpop.f32.mrb[0].mxu0
        %v2604 = vadd.f32 0.0, %v2603
        %v2605 = vpop.f32.mrb[0].mxu0
        %v2606 = vadd.f32 0.0, %v2605
        %v2607 = vpop.f32.mrb[0].mxu0
        %v2608 = vadd.f32 0.0, %v2607
        %2609 = vmatprep.mubr.bf16.mxu0 0
        %2610 = vmatmul.mubr.bf16.gmra.mrb[0].mxu0 %v2440
        %v2611 = vpop.f32.mrb[0].mxu0
        %v2612 = vadd.f32 0.0, %v2611
        %v2613 = vpop.f32.mrb[0].mxu0
        %v2614 = vadd.f32 0.0, %v2613
        %v2615 = vpop.f32.mrb[0].mxu0
        %v2616 = vadd.f32 0.0, %v2615
        %v2617 = vpop.f32.mrb[0].mxu0
        %v2618 = vadd.f32 0.0, %v2617
        %2619 = vmatprep.mubr.bf16.mxu0 0
        %2620 = vmatmul.mubr.bf16.gmra.mrb[0].mxu0 %v2443
        %v2621 = vpop.f32.mrb[0].mxu0
        %v2622 = vadd.f32 0.0, %v2621
        %v2623 = vpop.f32.mrb[0].mxu0
        %v2624 = vadd.f32 0.0, %v2623
        %v2625 = vpop.f32.mrb[0].mxu0
        %v2626 = vadd.f32 0.0, %v2625
        %v2627 = vpop.f32.mrb[0].mxu0
        %v2628 = vadd.f32 0.0, %v2627
        %2629 = vmatprep.mubr.bf16.mxu0 0
        %2630 = vmatmul.mubr.bf16.gmra.mrb[0].mxu0 %v2446
        %v2631 = vpop.f32.mrb[0].mxu0
        %v2632 = vadd.f32 0.0, %v2631
        %v2633 = vpop.f32.mrb[0].mxu0
        %v2634 = vadd.f32 0.0, %v2633
        %v2635 = vpop.f32.mrb[0].mxu0
        %v2636 = vadd.f32 0.0, %v2635
        %v2637 = vpop.f32.mrb[0].mxu0
        %v2638 = vadd.f32 0.0, %v2637
        %2639 = vmatprep.mubr.bf16.mxu0 0
        %2640 = vmatmul.mubr.bf16.gmra.mrb[0].mxu0 %v2449
        %v2641 = vpop.f32.mrb[0].mxu0
        %v2642 = vadd.f32 0.0, %v2641
        %v2643 = vpop.f32.mrb[0].mxu0
        %v2644 = vadd.f32 0.0, %v2643
        %v2645 = vpop.f32.mrb[0].mxu0
        %v2646 = vadd.f32 0.0, %v2645
        %v2647 = vpop.f32.mrb[0].mxu0
        %v2648 = vadd.f32 0.0, %v2647
        %2649 = vmatprep.mubr.bf16.mxu0 0
        %2650 = vmatmul.mubr.bf16.gmra.mrb[0].mxu0 %v2452
        %v2651 = vpop.f32.mrb[0].mxu0
        %v2652 = vadd.f32 0.0, %v2651
        %v2653 = vpop.f32.mrb[0].mxu0
        %v2654 = vadd.f32 0.0, %v2653
        %v2655 = vpop.f32.mrb[0].mxu0
        %v2656 = vadd.f32 0.0, %v2655
        %v2657 = vpop.f32.mrb[0].mxu0
        %v2658 = vadd.f32 0.0, %v2657
        %2659 = vmatprep.mubr.bf16.mxu0 0
        %2660 = vmatmul.mubr.bf16.gmra.mrb[0].mxu0 %v2455
        %v2661 = vpop.f32.mrb[0].mxu0
        %v2662 = vadd.f32 0.0, %v2661
        %v2663 = vpop.f32.mrb[0].mxu0
        %v2664 = vadd.f32 0.0, %v2663
        %v2665 = vpop.f32.mrb[0].mxu0
        %v2666 = vadd.f32 0.0, %v2665
        %v2667 = vpop.f32.mrb[0].mxu0
        %v2668 = vadd.f32 0.0, %v2667
        %2669 = vmatprep.mubr.bf16.mxu0 0
        %2670 = vmatmul.mubr.bf16.gmra.mrb[0].mxu0 %v2458
        %v2671 = vpop.f32.mrb[0].mxu0
        %v2672 = vadd.f32 0.0, %v2671
        %v2673 = vpop.f32.mrb[0].mxu0
        %v2674 = vadd.f32 0.0, %v2673
        %v2675 = vpop.f32.mrb[0].mxu0
        %v2676 = vadd.f32 0.0, %v2675
        %v2677 = vpop.f32.mrb[0].mxu0
        %v2678 = vadd.f32 0.0, %v2677
        %2679 = vmatprep.mubr.bf16.mxu0 0
        %2680 = vmatmul.mubr.bf16.gmra.mrb[0].mxu0 %v2461
        %v2681 = vpop.f32.mrb[0].mxu0
        %v2682 = vadd.f32 0.0, %v2681
        %v2683 = vpop.f32.mrb[0].mxu0
        %v2684 = vadd.f32 0.0, %v2683
        %v2685 = vpop.f32.mrb[0].mxu0
        %v2686 = vadd.f32 0.0, %v2685
        %v2687 = vpop.f32.mrb[0].mxu0
        %v2688 = vadd.f32 0.0, %v2687
        %2689 = vmatprep.mubr.bf16.mxu0 0
        %2690 = vmatmul.mubr.bf16.gmra.mrb[0].mxu0 %v2464
        %v2691 = vpop.f32.mrb[0].mxu0
        %v2692 = vadd.f32 0.0, %v2691
        %v2693 = vpop.f32.mrb[0].mxu0
        %v2694 = vadd.f32 0.0, %v2693
        %v2695 = vpop.f32.mrb[0].mxu0
        %v2696 = vadd.f32 0.0, %v2695
        %v2697 = vpop.f32.mrb[0].mxu0
        %v2698 = vadd.f32 0.0, %v2697
        %2699 = vmatprep.mubr.bf16.mxu0 0
        %2700 = vmatmul.mubr.bf16.gmra.mrb[0].mxu0 %v2467
        %v2701 = vpop.f32.mrb[0].mxu0
        %v2702 = vadd.f32 0.0, %v2701
        %v2703 = vpop.f32.mrb[0].mxu0
        %v2704 = vadd.f32 0.0, %v2703
        %v2705 = vpop.f32.mrb[0].mxu0
        %v2706 = vadd.f32 0.0, %v2705
        %v2707 = vpop.f32.mrb[0].mxu0
        %v2708 = vadd.f32 0.0, %v2707
        %2709 = vdwg.mxu0
        %v2710 = vmax.f32 %v2552, %v2554
        %2711 = vmax.xlane.f32.xlu0 %v2710
        %v2712 = vpop.xlane.xlu0 %2711
        %v2713 = vmax.f32 %v2556, %v2558
        %2714 = vmax.xlane.f32.xlu0 %v2713
        %v2715 = vpop.xlane.xlu0 %2714
        %v2716 = vmax.f32 %v2562, %v2564
        %2717 = vmax.xlane.f32.xlu0 %v2716
        %v2718 = vpop.xlane.xlu0 %2717
        %v2719 = vmax.f32 %v2566, %v2568
        %2720 = vmax.xlane.f32.xlu0 %v2719
        %v2721 = vpop.xlane.xlu0 %2720
        %v2722 = vmax.f32 %v2572, %v2574
        %2723 = vmax.xlane.f32.xlu0 %v2722
        %v2724 = vpop.xlane.xlu0 %2723
        %v2725 = vmax.f32 %v2576, %v2578
        %2726 = vmax.xlane.f32.xlu0 %v2725
        %v2727 = vpop.xlane.xlu0 %2726
        %v2728 = vmax.f32 %v2582, %v2584
        %2729 = vmax.xlane.f32.xlu0 %v2728
        %v2730 = vpop.xlane.xlu0 %2729
        %v2731 = vmax.f32 %v2586, %v2588
        %2732 = vmax.xlane.f32.xlu0 %v2731
        %v2733 = vpop.xlane.xlu0 %2732
        %v2734 = vmax.f32 %v2592, %v2594
        %2735 = vmax.xlane.f32.xlu0 %v2734
        %v2736 = vpop.xlane.xlu0 %2735
        %v2737 = vmax.f32 %v2596, %v2598
        %2738 = vmax.xlane.f32.xlu0 %v2737
        %v2739 = vpop.xlane.xlu0 %2738
        %v2740 = vmax.f32 %v2602, %v2604
        %2741 = vmax.xlane.f32.xlu0 %v2740
        %v2742 = vpop.xlane.xlu0 %2741
        %v2743 = vmax.f32 %v2606, %v2608
        %2744 = vmax.xlane.f32.xlu0 %v2743
        %v2745 = vpop.xlane.xlu0 %2744
        %v2746 = vmax.f32 %v2612, %v2614
        %2747 = vmax.xlane.f32.xlu0 %v2746
        %v2748 = vpop.xlane.xlu0 %2747
        %v2749 = vmax.f32 %v2616, %v2618
        %2750 = vmax.xlane.f32.xlu0 %v2749
        %v2751 = vpop.xlane.xlu0 %2750
        %v2752 = vmax.f32 %v2622, %v2624
        %2753 = vmax.xlane.f32.xlu0 %v2752
        %v2754 = vpop.xlane.xlu0 %2753
        %v2755 = vmax.f32 %v2626, %v2628
        %2756 = vmax.xlane.f32.xlu0 %v2755
        %v2757 = vpop.xlane.xlu0 %2756
        %v2758 = vmax.f32 %v2632, %v2634
        %2759 = vmax.xlane.f32.xlu0 %v2758
        %v2760 = vpop.xlane.xlu0 %2759
        %v2761 = vmax.f32 %v2636, %v2638
        %2762 = vmax.xlane.f32.xlu0 %v2761
        %v2763 = vpop.xlane.xlu0 %2762
        %v2764 = vmax.f32 %v2642, %v2644
        %2765 = vmax.xlane.f32.xlu0 %v2764
        %v2766 = vpop.xlane.xlu0 %2765
        %v2767 = vmax.f32 %v2646, %v2648
        %2768 = vmax.xlane.f32.xlu0 %v2767
        %v2769 = vpop.xlane.xlu0 %2768
        %v2770 = vmax.f32 %v2652, %v2654
        %2771 = vmax.xlane.f32.xlu0 %v2770
        %v2772 = vpop.xlane.xlu0 %2771
        %v2773 = vmax.f32 %v2656, %v2658
        %2774 = vmax.xlane.f32.xlu0 %v2773
        %v2775 = vpop.xlane.xlu0 %2774
        %v2776 = vmax.f32 %v2662, %v2664
        %2777 = vmax.xlane.f32.xlu0 %v2776
        %v2778 = vpop.xlane.xlu0 %2777
        %v2779 = vmax.f32 %v2666, %v2668
        %2780 = vmax.xlane.f32.xlu0 %v2779
        %v2781 = vpop.xlane.xlu0 %2780
        %v2782 = vmax.f32 %v2672, %v2674
        %2783 = vmax.xlane.f32.xlu0 %v2782
        %v2784 = vpop.xlane.xlu0 %2783
        %v2785 = vmax.f32 %v2676, %v2678
        %2786 = vmax.xlane.f32.xlu0 %v2785
        %v2787 = vpop.xlane.xlu0 %2786
        %v2788 = vmax.f32 %v2682, %v2684
        %2789 = vmax.xlane.f32.xlu0 %v2788
        %v2790 = vpop.xlane.xlu0 %2789
        %v2791 = vmax.f32 %v2686, %v2688
        %2792 = vmax.xlane.f32.xlu0 %v2791
        %v2793 = vpop.xlane.xlu0 %2792
        %v2794 = vmax.f32 %v2692, %v2694
        %2795 = vmax.xlane.f32.xlu0 %v2794
        %v2796 = vpop.xlane.xlu0 %2795
        %v2797 = vmax.f32 %v2696, %v2698
        %2798 = vmax.xlane.f32.xlu0 %v2797
        %v2799 = vpop.xlane.xlu0 %2798
        %v2800 = vmax.f32 %v2702, %v2704
        %2801 = vmax.xlane.f32.xlu0 %v2800
        %v2802 = vpop.xlane.xlu0 %2801
        %v2803 = vmax.f32 %v2706, %v2708
        %2804 = vmax.xlane.f32.xlu0 %v2803
        %v2805 = vpop.xlane.xlu0 %2804
        %v2806 = vsub.f32 %v2552, %v2712
        %v2807 = vsub.f32 %v2554, %v2712
        %v2808 = vsub.f32 %v2556, %v2715
        %v2809 = vsub.f32 %v2558, %v2715
        %v2810 = vsub.f32 %v2562, %v2718
        %v2811 = vsub.f32 %v2564, %v2718
        %v2812 = vsub.f32 %v2566, %v2721
        %v2813 = vsub.f32 %v2568, %v2721
        %v2814 = vsub.f32 %v2572, %v2724
        %v2815 = vsub.f32 %v2574, %v2724
        %v2816 = vsub.f32 %v2576, %v2727
        %v2817 = vsub.f32 %v2578, %v2727
        %v2818 = vsub.f32 %v2582, %v2730
        %v2819 = vsub.f32 %v2584, %v2730
        %v2820 = vsub.f32 %v2586, %v2733
        %v2821 = vsub.f32 %v2588, %v2733
        %v2822 = vsub.f32 %v2592, %v2736
        %v2823 = vsub.f32 %v2594, %v2736
        %v2824 = vsub.f32 %v2596, %v2739
        %v2825 = vsub.f32 %v2598, %v2739
        %v2826 = vsub.f32 %v2602, %v2742
        %v2827 = vsub.f32 %v2604, %v2742
        %v2828 = vsub.f32 %v2606, %v2745
        %v2829 = vsub.f32 %v2608, %v2745
        %v2830 = vsub.f32 %v2612, %v2748
        %v2831 = vsub.f32 %v2614, %v2748
        %v2832 = vsub.f32 %v2616, %v2751
        %v2833 = vsub.f32 %v2618, %v2751
        %v2834 = vsub.f32 %v2622, %v2754
        %v2835 = vsub.f32 %v2624, %v2754
        %v2836 = vsub.f32 %v2626, %v2757
        %v2837 = vsub.f32 %v2628, %v2757
        %v2838 = vsub.f32 %v2632, %v2760
        %v2839 = vsub.f32 %v2634, %v2760
        %v2840 = vsub.f32 %v2636, %v2763
        %v2841 = vsub.f32 %v2638, %v2763
        %v2842 = vsub.f32 %v2642, %v2766
        %v2843 = vsub.f32 %v2644, %v2766
        %v2844 = vsub.f32 %v2646, %v2769
        %v2845 = vsub.f32 %v2648, %v2769
        %v2846 = vsub.f32 %v2652, %v2772
        %v2847 = vsub.f32 %v2654, %v2772
        %v2848 = vsub.f32 %v2656, %v2775
        %v2849 = vsub.f32 %v2658, %v2775
        %v2850 = vsub.f32 %v2662, %v2778
        %v2851 = vsub.f32 %v2664, %v2778
        %v2852 = vsub.f32 %v2666, %v2781
        %v2853 = vsub.f32 %v2668, %v2781
        %v2854 = vsub.f32 %v2672, %v2784
        %v2855 = vsub.f32 %v2674, %v2784
        %v2856 = vsub.f32 %v2676, %v2787
        %v2857 = vsub.f32 %v2678, %v2787
        %v2858 = vsub.f32 %v2682, %v2790
        %v2859 = vsub.f32 %v2684, %v2790
        %v2860 = vsub.f32 %v2686, %v2793
        %v2861 = vsub.f32 %v2688, %v2793
        %v2862 = vsub.f32 %v2692, %v2796
        %v2863 = vsub.f32 %v2694, %v2796
        %v2864 = vsub.f32 %v2696, %v2799
        %v2865 = vsub.f32 %v2698, %v2799
        %v2866 = vsub.f32 %v2702, %v2802
        %v2867 = vsub.f32 %v2704, %v2802
        %v2868 = vsub.f32 %v2706, %v2805
        %v2869 = vsub.f32 %v2708, %v2805
        %v2870 = vmul.f32 %v2806, 1.442695
        %v2871 = vpow.pop %v2870
        %v2872 = vmul.f32 %v2807, 1.442695
        %v2873 = vpow.pop %v2872
        %v2874 = vmul.f32 %v2808, 1.442695
        %v2875 = vpow.pop %v2874
        %v2876 = vmul.f32 %v2809, 1.442695
        %v2877 = vpow.pop %v2876
        %v2878 = vmul.f32 %v2810, 1.442695
        %v2879 = vpow.pop %v2878
        %v2880 = vmul.f32 %v2811, 1.442695
        %v2881 = vpow.pop %v2880
        %v2882 = vmul.f32 %v2812, 1.442695
        %v2883 = vpow.pop %v2882
        %v2884 = vmul.f32 %v2813, 1.442695
        %v2885 = vpow.pop %v2884
        %v2886 = vmul.f32 %v2814, 1.442695
        %v2887 = vpow.pop %v2886
        %v2888 = vmul.f32 %v2815, 1.442695
        %v2889 = vpow.pop %v2888
        %v2890 = vmul.f32 %v2816, 1.442695
        %v2891 = vpow.pop %v2890
        %v2892 = vmul.f32 %v2817, 1.442695
        %v2893 = vpow.pop %v2892
        %v2894 = vmul.f32 %v2818, 1.442695
        %v2895 = vpow.pop %v2894
        %v2896 = vmul.f32 %v2819, 1.442695
        %v2897 = vpow.pop %v2896
        %v2898 = vmul.f32 %v2820, 1.442695
        %v2899 = vpow.pop %v2898
        %v2900 = vmul.f32 %v2821, 1.442695
        %v2901 = vpow.pop %v2900
        %v2902 = vmul.f32 %v2822, 1.442695
        %v2903 = vpow.pop %v2902
        %v2904 = vmul.f32 %v2823, 1.442695
        %v2905 = vpow.pop %v2904
        %v2906 = vmul.f32 %v2824, 1.442695
        %v2907 = vpow.pop %v2906
        %v2908 = vmul.f32 %v2825, 1.442695
        %v2909 = vpow.pop %v2908
        %v2910 = vmul.f32 %v2826, 1.442695
        %v2911 = vpow.pop %v2910
        %v2912 = vmul.f32 %v2827, 1.442695
        %v2913 = vpow.pop %v2912
        %v2914 = vmul.f32 %v2828, 1.442695
        %v2915 = vpow.pop %v2914
        %v2916 = vmul.f32 %v2829, 1.442695
        %v2917 = vpow.pop %v2916
        %v2918 = vmul.f32 %v2830, 1.442695
        %v2919 = vpow.pop %v2918
        %v2920 = vmul.f32 %v2831, 1.442695
        %v2921 = vpow.pop %v2920
        %v2922 = vmul.f32 %v2832, 1.442695
        %v2923 = vpow.pop %v2922
        %v2924 = vmul.f32 %v2833, 1.442695
        %v2925 = vpow.pop %v2924
        %v2926 = vmul.f32 %v2834, 1.442695
        %v2927 = vpow.pop %v2926
        %v2928 = vmul.f32 %v2835, 1.442695
        %v2929 = vpow.pop %v2928
        %v2930 = vmul.f32 %v2836, 1.442695
        %v2931 = vpow.pop %v2930
        %v2932 = vmul.f32 %v2837, 1.442695
        %v2933 = vpow.pop %v2932
        %v2934 = vmul.f32 %v2838, 1.442695
        %v2935 = vpow.pop %v2934
        %v2936 = vmul.f32 %v2839, 1.442695
        %v2937 = vpow.pop %v2936
        %v2938 = vmul.f32 %v2840, 1.442695
        %v2939 = vpow.pop %v2938
        %v2940 = vmul.f32 %v2841, 1.442695
        %v2941 = vpow.pop %v2940
        %v2942 = vmul.f32 %v2842, 1.442695
        %v2943 = vpow.pop %v2942
        %v2944 = vmul.f32 %v2843, 1.442695
        %v2945 = vpow.pop %v2944
        %v2946 = vmul.f32 %v2844, 1.442695
        %v2947 = vpow.pop %v2946
        %v2948 = vmul.f32 %v2845, 1.442695
        %v2949 = vpow.pop %v2948
        %v2950 = vmul.f32 %v2846, 1.442695
        %v2951 = vpow.pop %v2950
        %v2952 = vmul.f32 %v2847, 1.442695
        %v2953 = vpow.pop %v2952
        %v2954 = vmul.f32 %v2848, 1.442695
        %v2955 = vpow.pop %v2954
        %v2956 = vmul.f32 %v2849, 1.442695
        %v2957 = vpow.pop %v2956
        %v2958 = vmul.f32 %v2850, 1.442695
        %v2959 = vpow.pop %v2958
        %v2960 = vmul.f32 %v2851, 1.442695
        %v2961 = vpow.pop %v2960
        %v2962 = vmul.f32 %v2852, 1.442695
        %v2963 = vpow.pop %v2962
        %v2964 = vmul.f32 %v2853, 1.442695
        %v2965 = vpow.pop %v2964
        %v2966 = vmul.f32 %v2854, 1.442695
        %v2967 = vpow.pop %v2966
        %v2968 = vmul.f32 %v2855, 1.442695
        %v2969 = vpow.pop %v2968
        %v2970 = vmul.f32 %v2856, 1.442695
        %v2971 = vpow.pop %v2970
        %v2972 = vmul.f32 %v2857, 1.442695
        %v2973 = vpow.pop %v2972
        %v2974 = vmul.f32 %v2858, 1.442695
        %v2975 = vpow.pop %v2974
        %v2976 = vmul.f32 %v2859, 1.442695
        %v2977 = vpow.pop %v2976
        %v2978 = vmul.f32 %v2860, 1.442695
        %v2979 = vpow.pop %v2978
        %v2980 = vmul.f32 %v2861, 1.442695
        %v2981 = vpow.pop %v2980
        %v2982 = vmul.f32 %v2862, 1.442695
        %v2983 = vpow.pop %v2982
        %v2984 = vmul.f32 %v2863, 1.442695
        %v2985 = vpow.pop %v2984
        %v2986 = vmul.f32 %v2864, 1.442695
        %v2987 = vpow.pop %v2986
        %v2988 = vmul.f32 %v2865, 1.442695
        %v2989 = vpow.pop %v2988
        %v2990 = vmul.f32 %v2866, 1.442695
        %v2991 = vpow.pop %v2990
        %v2992 = vmul.f32 %v2867, 1.442695
        %v2993 = vpow.pop %v2992
        %v2994 = vmul.f32 %v2868, 1.442695
        %v2995 = vpow.pop %v2994
        %v2996 = vmul.f32 %v2869, 1.442695
        %v2997 = vpow.pop %v2996
        %v2998 = vadd.f32 %v2871, %v2873
        %2999 = vadd.xlane.f32.xlu0 %v2998
        %v3000 = vpop.xlane.xlu0 %2999
        %v3001 = vadd.f32 %v2875, %v2877
        %3002 = vadd.xlane.f32.xlu0 %v3001
        %v3003 = vpop.xlane.xlu0 %3002
        %v3004 = vadd.f32 %v2879, %v2881
        %3005 = vadd.xlane.f32.xlu0 %v3004
        %v3006 = vpop.xlane.xlu0 %3005
        %v3007 = vadd.f32 %v2883, %v2885
        %3008 = vadd.xlane.f32.xlu0 %v3007
        %v3009 = vpop.xlane.xlu0 %3008
        %v3010 = vadd.f32 %v2887, %v2889
        %3011 = vadd.xlane.f32.xlu0 %v3010
        %v3012 = vpop.xlane.xlu0 %3011
        %v3013 = vadd.f32 %v2891, %v2893
        %3014 = vadd.xlane.f32.xlu0 %v3013
        %v3015 = vpop.xlane.xlu0 %3014
        %v3016 = vadd.f32 %v2895, %v2897
        %3017 = vadd.xlane.f32.xlu0 %v3016
        %v3018 = vpop.xlane.xlu0 %3017
        %v3019 = vadd.f32 %v2899, %v2901
        %3020 = vadd.xlane.f32.xlu0 %v3019
        %v3021 = vpop.xlane.xlu0 %3020
        %v3022 = vadd.f32 %v2903, %v2905
        %3023 = vadd.xlane.f32.xlu0 %v3022
        %v3024 = vpop.xlane.xlu0 %3023
        %v3025 = vadd.f32 %v2907, %v2909
        %3026 = vadd.xlane.f32.xlu0 %v3025
        %v3027 = vpop.xlane.xlu0 %3026
        %v3028 = vadd.f32 %v2911, %v2913
        %3029 = vadd.xlane.f32.xlu0 %v3028
        %v3030 = vpop.xlane.xlu0 %3029
        %v3031 = vadd.f32 %v2915, %v2917
        %3032 = vadd.xlane.f32.xlu0 %v3031
        %v3033 = vpop.xlane.xlu0 %3032
        %v3034 = vadd.f32 %v2919, %v2921
        %3035 = vadd.xlane.f32.xlu0 %v3034
        %v3036 = vpop.xlane.xlu0 %3035
        %v3037 = vadd.f32 %v2923, %v2925
        %3038 = vadd.xlane.f32.xlu0 %v3037
        %v3039 = vpop.xlane.xlu0 %3038
        %v3040 = vadd.f32 %v2927, %v2929
        %3041 = vadd.xlane.f32.xlu0 %v3040
        %v3042 = vpop.xlane.xlu0 %3041
        %v3043 = vadd.f32 %v2931, %v2933
        %3044 = vadd.xlane.f32.xlu0 %v3043
        %v3045 = vpop.xlane.xlu0 %3044
        %v3046 = vadd.f32 %v2935, %v2937
        %3047 = vadd.xlane.f32.xlu0 %v3046
        %v3048 = vpop.xlane.xlu0 %3047
        %v3049 = vadd.f32 %v2939, %v2941
        %3050 = vadd.xlane.f32.xlu0 %v3049
        %v3051 = vpop.xlane.xlu0 %3050
        %v3052 = vadd.f32 %v2943, %v2945
        %3053 = vadd.xlane.f32.xlu0 %v3052
        %v3054 = vpop.xlane.xlu0 %3053
        %v3055 = vadd.f32 %v2947, %v2949
        %3056 = vadd.xlane.f32.xlu0 %v3055
        %v3057 = vpop.xlane.xlu0 %3056
        %v3058 = vadd.f32 %v2951, %v2953
        %3059 = vadd.xlane.f32.xlu0 %v3058
        %v3060 = vpop.xlane.xlu0 %3059
        %v3061 = vadd.f32 %v2955, %v2957
        %3062 = vadd.xlane.f32.xlu0 %v3061
        %v3063 = vpop.xlane.xlu0 %3062
        %v3064 = vadd.f32 %v2959, %v2961
        %3065 = vadd.xlane.f32.xlu0 %v3064
        %v3066 = vpop.xlane.xlu0 %3065
        %v3067 = vadd.f32 %v2963, %v2965
        %3068 = vadd.xlane.f32.xlu0 %v3067
        %v3069 = vpop.xlane.xlu0 %3068
        %v3070 = vadd.f32 %v2967, %v2969
        %3071 = vadd.xlane.f32.xlu0 %v3070
        %v3072 = vpop.xlane.xlu0 %3071
        %v3073 = vadd.f32 %v2971, %v2973
        %3074 = vadd.xlane.f32.xlu0 %v3073
        %v3075 = vpop.xlane.xlu0 %3074
        %v3076 = vadd.f32 %v2975, %v2977
        %3077 = vadd.xlane.f32.xlu0 %v3076
        %v3078 = vpop.xlane.xlu0 %3077
        %v3079 = vadd.f32 %v2979, %v2981
        %3080 = vadd.xlane.f32.xlu0 %v3079
        %v3081 = vpop.xlane.xlu0 %3080
        %v3082 = vadd.f32 %v2983, %v2985
        %3083 = vadd.xlane.f32.xlu0 %v3082
        %v3084 = vpop.xlane.xlu0 %3083
        %v3085 = vadd.f32 %v2987, %v2989
        %3086 = vadd.xlane.f32.xlu0 %v3085
        %v3087 = vpop.xlane.xlu0 %3086
        %v3088 = vadd.f32 %v2991, %v2993
        %3089 = vadd.xlane.f32.xlu0 %v3088
        %v3090 = vpop.xlane.xlu0 %3089
        %v3091 = vadd.f32 %v2995, %v2997
        %3092 = vadd.xlane.f32.xlu0 %v3091
        %v3093 = vpop.xlane.xlu0 %3092
        %v3094 = vrcp.pop %v3000
        %v3095 = vrcp.pop %v3003
        %v3096 = vrcp.pop %v3006
        %v3097 = vrcp.pop %v3009
        %v3098 = vrcp.pop %v3012
        %v3099 = vrcp.pop %v3015
        %v3100 = vrcp.pop %v3018
        %v3101 = vrcp.pop %v3021
        %v3102 = vrcp.pop %v3024
        %v3103 = vrcp.pop %v3027
        %v3104 = vrcp.pop %v3030
        %v3105 = vrcp.pop %v3033
        %v3106 = vrcp.pop %v3036
        %v3107 = vrcp.pop %v3039
        %v3108 = vrcp.pop %v3042
        %v3109 = vrcp.pop %v3045
        %v3110 = vrcp.pop %v3048
        %v3111 = vrcp.pop %v3051
        %v3112 = vrcp.pop %v3054
        %v3113 = vrcp.pop %v3057
        %v3114 = vrcp.pop %v3060
        %v3115 = vrcp.pop %v3063
        %v3116 = vrcp.pop %v3066
        %v3117 = vrcp.pop %v3069
        %v3118 = vrcp.pop %v3072
        %v3119 = vrcp.pop %v3075
        %v3120 = vrcp.pop %v3078
        %v3121 = vrcp.pop %v3081
        %v3122 = vrcp.pop %v3084
        %v3123 = vrcp.pop %v3087
        %v3124 = vrcp.pop %v3090
        %v3125 = vrcp.pop %v3093
        %v3126 = vmul.f32 %v2871, %v3094
        %v3127 = vmul.f32 %v2873, %v3094
        %v3128 = vmul.f32 %v2875, %v3095
        %v3129 = vmul.f32 %v2877, %v3095
        %v3130 = vmul.f32 %v2879, %v3096
        %v3131 = vmul.f32 %v2881, %v3096
        %v3132 = vmul.f32 %v2883, %v3097
        %v3133 = vmul.f32 %v2885, %v3097
        %v3134 = vmul.f32 %v2887, %v3098
        %v3135 = vmul.f32 %v2889, %v3098
        %v3136 = vmul.f32 %v2891, %v3099
        %v3137 = vmul.f32 %v2893, %v3099
        %v3138 = vmul.f32 %v2895, %v3100
        %v3139 = vmul.f32 %v2897, %v3100
        %v3140 = vmul.f32 %v2899, %v3101
        %v3141 = vmul.f32 %v2901, %v3101
        %v3142 = vmul.f32 %v2903, %v3102
        %v3143 = vmul.f32 %v2905, %v3102
        %v3144 = vmul.f32 %v2907, %v3103
        %v3145 = vmul.f32 %v2909, %v3103
        %v3146 = vmul.f32 %v2911, %v3104
        %v3147 = vmul.f32 %v2913, %v3104
        %v3148 = vmul.f32 %v2915, %v3105
        %v3149 = vmul.f32 %v2917, %v3105
        %v3150 = vmul.f32 %v2919, %v3106
        %v3151 = vmul.f32 %v2921, %v3106
        %v3152 = vmul.f32 %v2923, %v3107
        %v3153 = vmul.f32 %v2925, %v3107
        %v3154 = vmul.f32 %v2927, %v3108
        %v3155 = vmul.f32 %v2929, %v3108
        %v3156 = vmul.f32 %v2931, %v3109
        %v3157 = vmul.f32 %v2933, %v3109
        %v3158 = vmul.f32 %v2935, %v3110
        %v3159 = vmul.f32 %v2937, %v3110
        %v3160 = vmul.f32 %v2939, %v3111
        %v3161 = vmul.f32 %v2941, %v3111
        %v3162 = vmul.f32 %v2943, %v3112
        %v3163 = vmul.f32 %v2945, %v3112
        %v3164 = vmul.f32 %v2947, %v3113
        %v3165 = vmul.f32 %v2949, %v3113
        %v3166 = vmul.f32 %v2951, %v3114
        %v3167 = vmul.f32 %v2953, %v3114
        %v3168 = vmul.f32 %v2955, %v3115
        %v3169 = vmul.f32 %v2957, %v3115
        %v3170 = vmul.f32 %v2959, %v3116
        %v3171 = vmul.f32 %v2961, %v3116
        %v3172 = vmul.f32 %v2963, %v3117
        %v3173 = vmul.f32 %v2965, %v3117
        %v3174 = vmul.f32 %v2967, %v3118
        %v3175 = vmul.f32 %v2969, %v3118
        %v3176 = vmul.f32 %v2971, %v3119
        %v3177 = vmul.f32 %v2973, %v3119
        %v3178 = vmul.f32 %v2975, %v3120
        %v3179 = vmul.f32 %v2977, %v3120
        %v3180 = vmul.f32 %v2979, %v3121
        %v3181 = vmul.f32 %v2981, %v3121
        %v3182 = vmul.f32 %v2983, %v3122
        %v3183 = vmul.f32 %v2985, %v3122
        %v3184 = vmul.f32 %v2987, %v3123
        %v3185 = vmul.f32 %v2989, %v3123
        %v3186 = vmul.f32 %v2991, %v3124
        %v3187 = vmul.f32 %v2993, %v3124
        %v3188 = vmul.f32 %v2995, %v3125
        %v3189 = vmul.f32 %v2997, %v3125
        %v3190 = vpack.c.bf16 %v3128, %v3126
        %v3191 = vpack.c.bf16 %v3129, %v3127
        %v3192 = vpack.c.bf16 %v3132, %v3130
        %v3193 = vpack.c.bf16 %v3133, %v3131
        %v3194 = vpack.c.bf16 %v3136, %v3134
        %v3195 = vpack.c.bf16 %v3137, %v3135
        %v3196 = vpack.c.bf16 %v3140, %v3138
        %v3197 = vpack.c.bf16 %v3141, %v3139
        %v3198 = vpack.c.bf16 %v3144, %v3142
        %v3199 = vpack.c.bf16 %v3145, %v3143
        %v3200 = vpack.c.bf16 %v3148, %v3146
        %v3201 = vpack.c.bf16 %v3149, %v3147
        %v3202 = vpack.c.bf16 %v3152, %v3150
        %v3203 = vpack.c.bf16 %v3153, %v3151
        %v3204 = vpack.c.bf16 %v3156, %v3154
        %v3205 = vpack.c.bf16 %v3157, %v3155
        %v3206 = vpack.c.bf16 %v3160, %v3158
        %v3207 = vpack.c.bf16 %v3161, %v3159
        %v3208 = vpack.c.bf16 %v3164, %v3162
        %v3209 = vpack.c.bf16 %v3165, %v3163
        %v3210 = vpack.c.bf16 %v3168, %v3166
        %v3211 = vpack.c.bf16 %v3169, %v3167
        %v3212 = vpack.c.bf16 %v3172, %v3170
        %v3213 = vpack.c.bf16 %v3173, %v3171
        %v3214 = vpack.c.bf16 %v3176, %v3174
        %v3215 = vpack.c.bf16 %v3177, %v3175
        %v3216 = vpack.c.bf16 %v3180, %v3178
        %v3217 = vpack.c.bf16 %v3181, %v3179
        %v3218 = vpack.c.bf16 %v3184, %v3182
        %v3219 = vpack.c.bf16 %v3185, %v3183
        %v3220 = vpack.c.bf16 %v3188, %v3186
        %v3221 = vpack.c.bf16 %v3189, %v3187
        %3238 = vrot.lane.b32.xlu0 %v1326, 120
        %v3239 = vpop.permute.xlu0 %3238
        %3240 = vrot.lane.b32.xlu0 %v1327, 120
        %v3241 = vpop.permute.xlu0 %3240
        %3242 = vrot.lane.b32.xlu0 %v1328, 120
        %v3243 = vpop.permute.xlu0 %3242
        %3244 = vrot.lane.b32.xlu0 %v1329, 120
        %v3245 = vpop.permute.xlu0 %3244
        %3246 = vrot.lane.b32.xlu0 %v1330, 120
        %v3247 = vpop.permute.xlu0 %3246
        %3248 = vrot.lane.b32.xlu0 %v1331, 120
        %v3249 = vpop.permute.xlu0 %3248
        %3250 = vrot.lane.b32.xlu0 %v1332, 120
        %v3251 = vpop.permute.xlu0 %3250
        %3252 = vrot.lane.b32.xlu0 %v1333, 120
        %v3253 = vpop.permute.xlu0 %3252
        %3254 = vrot.lane.b32.xlu0 %v1334, 120
        %v3255 = vpop.permute.xlu0 %3254
        %3256 = vrot.lane.b32.xlu0 %v1335, 120
        %v3257 = vpop.permute.xlu0 %3256
        %3258 = vrot.lane.b32.xlu0 %v1336, 120
        %v3259 = vpop.permute.xlu0 %3258
        %3260 = vrot.lane.b32.xlu0 %v1337, 120
        %v3261 = vpop.permute.xlu0 %3260
        %3262 = vrot.lane.b32.xlu0 %v1338, 120
        %v3263 = vpop.permute.xlu0 %3262
        %3264 = vrot.lane.b32.xlu0 %v1339, 120
        %v3265 = vpop.permute.xlu0 %3264
        %3266 = vrot.lane.b32.xlu0 %v1340, 120
        %v3267 = vpop.permute.xlu0 %3266
        %3268 = vrot.lane.b32.xlu0 %v1341, 120
        %v3269 = vpop.permute.xlu0 %3268
        %3286 = vmatprep.subr.bf16.mxu0 0
        %3287 = vmatpush1.bf16.msra.mxu0 %v3239
        %3288 = vmatprep.subr.bf16.mxu0 0
        %3289 = vmatpush1.bf16.msra.mxu0 %v3241
        %3290 = vmatprep.subr.bf16.mxu0 0
        %3291 = vmatpush1.bf16.msra.mxu0 %v3243
        %3292 = vmatprep.subr.bf16.mxu0 0
        %3293 = vmatpush1.bf16.msra.mxu0 %v3245
        %3294 = vmatprep.subr.bf16.mxu0 0
        %3295 = vmatpush1.bf16.msra.mxu0 %v3247
        %3296 = vmatprep.subr.bf16.mxu0 0
        %3297 = vmatpush1.bf16.msra.mxu0 %v3249
        %3298 = vmatprep.subr.bf16.mxu0 0
        %3299 = vmatpush1.bf16.msra.mxu0 %v3251
        %3300 = vmatprep.subr.bf16.mxu0 0
        %3301 = vmatpush1.bf16.msra.mxu0 %v3253
        %3302 = vmatprep.subr.bf16.mxu0 0
        %3303 = vmatpush1.bf16.msra.mxu0 %v3255
        %3304 = vmatprep.subr.bf16.mxu0 0
        %3305 = vmatpush1.bf16.msra.mxu0 %v3257
        %3306 = vmatprep.subr.bf16.mxu0 0
        %3307 = vmatpush1.bf16.msra.mxu0 %v3259
        %3308 = vmatprep.subr.bf16.mxu0 0
        %3309 = vmatpush1.bf16.msra.mxu0 %v3261
        %3310 = vmatprep.subr.bf16.mxu0 0
        %3311 = vmatpush1.bf16.msra.mxu0 %v3263
        %3312 = vmatprep.subr.bf16.mxu0 0
        %3313 = vmatpush1.bf16.msra.mxu0 %v3265
        %3314 = vmatprep.subr.bf16.mxu0 0
        %3315 = vmatpush1.bf16.msra.mxu0 %v3267
        %3316 = vmatprep.subr.bf16.mxu0 0
        %3317 = vmatpush1.bf16.msra.mxu0 %v3269
        %3318 = vmatprep.mubr.bf16.mxu0 %v3191
        %3319 = vmatmul.mubr.bf16.gmra.mrb[0].mxu0 %v3190
        %v3320 = vpop.f32.mrb[0].mxu0
        %v3321 = vadd.f32 0.0, %v3320
        %v3322 = vpop.f32.mrb[0].mxu0
        %v3323 = vpop.f32.mrb[0].mxu0
        %v3324 = vadd.f32 0.0, %v3323
        %v3325 = vpop.f32.mrb[0].mxu0
        %3326 = vmatprep.mubr.bf16.mxu0 %v3193
        %3327 = vmatmul.mubr.bf16.gmra.mrb[0].mxu0 %v3192
        %v3328 = vpop.f32.mrb[0].mxu0
        %v3329 = vadd.f32 0.0, %v3328
        %v3330 = vpop.f32.mrb[0].mxu0
        %v3331 = vpop.f32.mrb[0].mxu0
        %v3332 = vadd.f32 0.0, %v3331
        %v3333 = vpop.f32.mrb[0].mxu0
        %3334 = vmatprep.mubr.bf16.mxu0 %v3195
        %3335 = vmatmul.mubr.bf16.gmra.mrb[0].mxu0 %v3194
        %v3336 = vpop.f32.mrb[0].mxu0
        %v3337 = vadd.f32 0.0, %v3336
        %v3338 = vpop.f32.mrb[0].mxu0
        %v3339 = vpop.f32.mrb[0].mxu0
        %v3340 = vadd.f32 0.0, %v3339
        %v3341 = vpop.f32.mrb[0].mxu0
        %3342 = vmatprep.mubr.bf16.mxu0 %v3197
        %3343 = vmatmul.mubr.bf16.gmra.mrb[0].mxu0 %v3196
        %v3344 = vpop.f32.mrb[0].mxu0
        %v3345 = vadd.f32 0.0, %v3344
        %v3346 = vpop.f32.mrb[0].mxu0
        %v3347 = vpop.f32.mrb[0].mxu0
        %v3348 = vadd.f32 0.0, %v3347
        %v3349 = vpop.f32.mrb[0].mxu0
        %3350 = vmatprep.mubr.bf16.mxu0 %v3199
        %3351 = vmatmul.mubr.bf16.gmra.mrb[0].mxu0 %v3198
        %v3352 = vpop.f32.mrb[0].mxu0
        %v3353 = vadd.f32 0.0, %v3352
        %v3354 = vpop.f32.mrb[0].mxu0
        %v3355 = vpop.f32.mrb[0].mxu0
        %v3356 = vadd.f32 0.0, %v3355
        %v3357 = vpop.f32.mrb[0].mxu0
        %3358 = vmatprep.mubr.bf16.mxu0 %v3201
        %3359 = vmatmul.mubr.bf16.gmra.mrb[0].mxu0 %v3200
        %v3360 = vpop.f32.mrb[0].mxu0
        %v3361 = vadd.f32 0.0, %v3360
        %v3362 = vpop.f32.mrb[0].mxu0
        %v3363 = vpop.f32.mrb[0].mxu0
        %v3364 = vadd.f32 0.0, %v3363
        %v3365 = vpop.f32.mrb[0].mxu0
        %3366 = vmatprep.mubr.bf16.mxu0 %v3203
        %3367 = vmatmul.mubr.bf16.gmra.mrb[0].mxu0 %v3202
        %v3368 = vpop.f32.mrb[0].mxu0
        %v3369 = vadd.f32 0.0, %v3368
        %v3370 = vpop.f32.mrb[0].mxu0
        %v3371 = vpop.f32.mrb[0].mxu0
        %v3372 = vadd.f32 0.0, %v3371
        %v3373 = vpop.f32.mrb[0].mxu0
        %3374 = vmatprep.mubr.bf16.mxu0 %v3205
        %3375 = vmatmul.mubr.bf16.gmra.mrb[0].mxu0 %v3204
        %v3376 = vpop.f32.mrb[0].mxu0
        %v3377 = vadd.f32 0.0, %v3376
        %v3378 = vpop.f32.mrb[0].mxu0
        %v3379 = vpop.f32.mrb[0].mxu0
        %v3380 = vadd.f32 0.0, %v3379
        %v3381 = vpop.f32.mrb[0].mxu0
        %3382 = vmatprep.mubr.bf16.mxu0 %v3207
        %3383 = vmatmul.mubr.bf16.gmra.mrb[0].mxu0 %v3206
        %v3384 = vpop.f32.mrb[0].mxu0
        %v3385 = vadd.f32 0.0, %v3384
        %v3386 = vpop.f32.mrb[0].mxu0
        %v3387 = vpop.f32.mrb[0].mxu0
        %v3388 = vadd.f32 0.0, %v3387
        %v3389 = vpop.f32.mrb[0].mxu0
        %3390 = vmatprep.mubr.bf16.mxu0 %v3209
        %3391 = vmatmul.mubr.bf16.gmra.mrb[0].mxu0 %v3208
        %v3392 = vpop.f32.mrb[0].mxu0
        %v3393 = vadd.f32 0.0, %v3392
        %v3394 = vpop.f32.mrb[0].mxu0
        %v3395 = vpop.f32.mrb[0].mxu0
        %v3396 = vadd.f32 0.0, %v3395
        %v3397 = vpop.f32.mrb[0].mxu0
        %3398 = vmatprep.mubr.bf16.mxu0 %v3211
        %3399 = vmatmul.mubr.bf16.gmra.mrb[0].mxu0 %v3210
        %v3400 = vpop.f32.mrb[0].mxu0
        %v3401 = vadd.f32 0.0, %v3400
        %v3402 = vpop.f32.mrb[0].mxu0
        %v3403 = vpop.f32.mrb[0].mxu0
        %v3404 = vadd.f32 0.0, %v3403
        %v3405 = vpop.f32.mrb[0].mxu0
        %3406 = vmatprep.mubr.bf16.mxu0 %v3213
        %3407 = vmatmul.mubr.bf16.gmra.mrb[0].mxu0 %v3212
        %v3408 = vpop.f32.mrb[0].mxu0
        %v3409 = vadd.f32 0.0, %v3408
        %v3410 = vpop.f32.mrb[0].mxu0
        %v3411 = vpop.f32.mrb[0].mxu0
        %v3412 = vadd.f32 0.0, %v3411
        %v3413 = vpop.f32.mrb[0].mxu0
        %3414 = vmatprep.mubr.bf16.mxu0 %v3215
        %3415 = vmatmul.mubr.bf16.gmra.mrb[0].mxu0 %v3214
        %v3416 = vpop.f32.mrb[0].mxu0
        %v3417 = vadd.f32 0.0, %v3416
        %v3418 = vpop.f32.mrb[0].mxu0
        %v3419 = vpop.f32.mrb[0].mxu0
        %v3420 = vadd.f32 0.0, %v3419
        %v3421 = vpop.f32.mrb[0].mxu0
        %3422 = vmatprep.mubr.bf16.mxu0 %v3217
        %3423 = vmatmul.mubr.bf16.gmra.mrb[0].mxu0 %v3216
        %v3424 = vpop.f32.mrb[0].mxu0
        %v3425 = vadd.f32 0.0, %v3424
        %v3426 = vpop.f32.mrb[0].mxu0
        %v3427 = vpop.f32.mrb[0].mxu0
        %v3428 = vadd.f32 0.0, %v3427
        %v3429 = vpop.f32.mrb[0].mxu0
        %3430 = vmatprep.mubr.bf16.mxu0 %v3219
        %3431 = vmatmul.mubr.bf16.gmra.mrb[0].mxu0 %v3218
        %v3432 = vpop.f32.mrb[0].mxu0
        %v3433 = vadd.f32 0.0, %v3432
        %v3434 = vpop.f32.mrb[0].mxu0
        %v3435 = vpop.f32.mrb[0].mxu0
        %v3436 = vadd.f32 0.0, %v3435
        %v3437 = vpop.f32.mrb[0].mxu0
        %3438 = vmatprep.mubr.bf16.mxu0 %v3221
        %3439 = vmatmul.mubr.bf16.gmra.mrb[0].mxu0 %v3220
        %v3440 = vpop.f32.mrb[0].mxu0
        %v3441 = vadd.f32 0.0, %v3440
        %v3442 = vpop.f32.mrb[0].mxu0
        %v3443 = vpop.f32.mrb[0].mxu0
        %v3444 = vadd.f32 0.0, %v3443
        %v3445 = vpop.f32.mrb[0].mxu0
        %3446 = vdwg.mxu0
        %s3447 = scalar_lea.vmem %s7, 16
        %v3448 = vld [vmem:[%s3447] sm:$0xf]
        %v3449 = vld [vmem:[%s3447 + $0x4] sm:$0xf]
        %v3450 = vld [vmem:[%s3447 + $0x8] sm:$0xf]
        %v3451 = vld [vmem:[%s3447 + $0xc] sm:$0xf]
        %v3452 = vpack.c.bf16 %v3324, %v3321
        %v3453 = vpack.c.bf16 %v3332, %v3329
        %v3454 = vpack.c.bf16 %v3340, %v3337
        %v3455 = vpack.c.bf16 %v3348, %v3345
        %v3456 = vpack.c.bf16 %v3356, %v3353
        %v3457 = vpack.c.bf16 %v3364, %v3361
        %v3458 = vpack.c.bf16 %v3372, %v3369
        %v3459 = vpack.c.bf16 %v3380, %v3377
        %v3460 = vpack.c.bf16 %v3388, %v3385
        %v3461 = vpack.c.bf16 %v3396, %v3393
        %v3462 = vpack.c.bf16 %v3404, %v3401
        %v3463 = vpack.c.bf16 %v3412, %v3409
        %v3464 = vpack.c.bf16 %v3420, %v3417
        %v3465 = vpack.c.bf16 %v3428, %v3425
        %v3466 = vpack.c.bf16 %v3436, %v3433
        %v3467 = vpack.c.bf16 %v3444, %v3441
        %v3472 = vunpack.c.l.b16 %v3448
        %v3473 = vunpack.c.l.b16 %v3449
        %v3474 = vunpack.c.l.b16 %v3450
        %v3475 = vunpack.c.l.b16 %v3451
        %v3476 = vpack.c.b16 %v3473, %v3472
        %v3477 = vpack.c.b16 %v3475, %v3474
        %v3479 = vsel %vm1342, %v3476, 0
        %v3482 = vsel %vm1342, %v3477, 0
        %v3485 = vsel %vm1342, %v3452, 0
        %v3488 = vsel %vm1342, %v3453, 0
        %v3491 = vsel %vm1342, %v3454, 0
        %v3494 = vsel %vm1342, %v3455, 0
        %v3497 = vsel %vm1342, %v3456, 0
        %v3500 = vsel %vm1342, %v3457, 0
        %v3503 = vsel %vm1342, %v3458, 0
        %v3506 = vsel %vm1342, %v3459, 0
        %v3509 = vsel %vm1342, %v3460, 0
        %v3512 = vsel %vm1342, %v3461, 0
        %v3515 = vsel %vm1342, %v3462, 0
        %v3518 = vsel %vm1342, %v3463, 0
        %v3521 = vsel %vm1342, %v3464, 0
        %v3524 = vsel %vm1342, %v3465, 0
        %v3527 = vsel %vm1342, %v3466, 0
        %v3530 = vsel %vm1342, %v3467, 0
        %3532 = vmatprep.subr.bf16.mxu0 0
        %3533 = vmatpush1.bf16.xpose.msra.mxu0 %v3485
        %3534 = vmatprep.subr.bf16.mxu0 0
        %3535 = vmatpush1.bf16.xpose.msra.mxu0 %v3488
        %3536 = vmatprep.subr.bf16.mxu0 0
        %3537 = vmatpush1.bf16.xpose.msra.mxu0 %v3491
        %3538 = vmatprep.subr.bf16.mxu0 0
        %3539 = vmatpush1.bf16.xpose.msra.mxu0 %v3494
        %3540 = vmatprep.subr.bf16.mxu0 0
        %3541 = vmatpush1.bf16.xpose.msra.mxu0 %v3497
        %3542 = vmatprep.subr.bf16.mxu0 0
        %3543 = vmatpush1.bf16.xpose.msra.mxu0 %v3500
        %3544 = vmatprep.subr.bf16.mxu0 0
        %3545 = vmatpush1.bf16.xpose.msra.mxu0 %v3503
        %3546 = vmatprep.subr.bf16.mxu0 0
        %3547 = vmatpush1.bf16.xpose.msra.mxu0 %v3506
        %3548 = vmatprep.subr.bf16.mxu0 0
        %3549 = vmatpush1.bf16.xpose.msra.mxu0 %v3509
        %3550 = vmatprep.subr.bf16.mxu0 0
        %3551 = vmatpush1.bf16.xpose.msra.mxu0 %v3512
        %3552 = vmatprep.subr.bf16.mxu0 0
        %3553 = vmatpush1.bf16.xpose.msra.mxu0 %v3515
        %3554 = vmatprep.subr.bf16.mxu0 0
        %3555 = vmatpush1.bf16.xpose.msra.mxu0 %v3518
        %3556 = vmatprep.subr.bf16.mxu0 0
        %3557 = vmatpush1.bf16.xpose.msra.mxu0 %v3521
        %3558 = vmatprep.subr.bf16.mxu0 0
        %3559 = vmatpush1.bf16.xpose.msra.mxu0 %v3524
        %3560 = vmatprep.subr.bf16.mxu0 0
        %3561 = vmatpush1.bf16.xpose.msra.mxu0 %v3527
        %3562 = vmatprep.subr.bf16.mxu0 0
        %3563 = vmatpush1.bf16.xpose.msra.mxu0 %v3530
        %3564 = vmatprep.mubr.bf16.mxu0 0
        %3565 = vmatmul.mubr.bf16.gmra.mrb[0].mxu0 %v3479
        %v3566 = vpop.f32.mrb[0].mxu0
        %v3567 = vadd.f32 0.0, %v3566
        %v3568 = vpop.f32.mrb[0].mxu0
        %v3569 = vadd.f32 0.0, %v3568
        %v3570 = vpop.f32.mrb[0].mxu0
        %v3571 = vadd.f32 0.0, %v3570
        %v3572 = vpop.f32.mrb[0].mxu0
        %v3573 = vadd.f32 0.0, %v3572
        %3574 = vmatprep.mubr.bf16.mxu0 0
        %3575 = vmatmul.mubr.bf16.gmra.mrb[0].mxu0 %v3482
        %v3576 = vpop.f32.mrb[0].mxu0
        %v3577 = vadd.f32 0.0, %v3576
        %v3578 = vpop.f32.mrb[0].mxu0
        %v3579 = vadd.f32 0.0, %v3578
        %v3580 = vpop.f32.mrb[0].mxu0
        %v3581 = vadd.f32 0.0, %v3580
        %v3582 = vpop.f32.mrb[0].mxu0
        %v3583 = vadd.f32 0.0, %v3582
        %3584 = vdwg.mxu0
        %v3589 = vunpack.c.l.b16 %v2305
        %v3590 = vunpack.c.l.b16 %v2306
        %v3591 = vunpack.c.l.b16 %v2307
        %v3592 = vunpack.c.l.b16 %v2308
        %v3593 = vpack.c.b16 %v3590, %v3589
        %v3594 = vpack.c.b16 %v3592, %v3591
        %v3596 = vsel %vm1342, %v3593, 0
        %v3599 = vsel %vm1342, %v3594, 0
        %v3602 = vsel %vm1342, %v2309, 0
        %v3605 = vsel %vm1342, %v2310, 0
        %v3608 = vsel %vm1342, %v2311, 0
        %v3611 = vsel %vm1342, %v2312, 0
        %v3614 = vsel %vm1342, %v2313, 0
        %v3617 = vsel %vm1342, %v2314, 0
        %v3620 = vsel %vm1342, %v2315, 0
        %v3623 = vsel %vm1342, %v2316, 0
        %v3626 = vsel %vm1342, %v2317, 0
        %v3629 = vsel %vm1342, %v2318, 0
        %v3632 = vsel %vm1342, %v2319, 0
        %v3635 = vsel %vm1342, %v2320, 0
        %v3638 = vsel %vm1342, %v2321, 0
        %v3641 = vsel %vm1342, %v2322, 0
        %v3644 = vsel %vm1342, %v2323, 0
        %v3647 = vsel %vm1342, %v2324, 0
        %3649 = vmatprep.subr.bf16.mxu0 0
        %3650 = vmatpush1.bf16.xpose.msra.mxu0 %v3602
        %3651 = vmatprep.subr.bf16.mxu0 0
        %3652 = vmatpush1.bf16.xpose.msra.mxu0 %v3605
        %3653 = vmatprep.subr.bf16.mxu0 0
        %3654 = vmatpush1.bf16.xpose.msra.mxu0 %v3608
        %3655 = vmatprep.subr.bf16.mxu0 0
        %3656 = vmatpush1.bf16.xpose.msra.mxu0 %v3611
        %3657 = vmatprep.subr.bf16.mxu0 0
        %3658 = vmatpush1.bf16.xpose.msra.mxu0 %v3614
        %3659 = vmatprep.subr.bf16.mxu0 0
        %3660 = vmatpush1.bf16.xpose.msra.mxu0 %v3617
        %3661 = vmatprep.subr.bf16.mxu0 0
        %3662 = vmatpush1.bf16.xpose.msra.mxu0 %v3620
        %3663 = vmatprep.subr.bf16.mxu0 0
        %3664 = vmatpush1.bf16.xpose.msra.mxu0 %v3623
        %3665 = vmatprep.subr.bf16.mxu0 0
        %3666 = vmatpush1.bf16.xpose.msra.mxu0 %v3626
        %3667 = vmatprep.subr.bf16.mxu0 0
        %3668 = vmatpush1.bf16.xpose.msra.mxu0 %v3629
        %3669 = vmatprep.subr.bf16.mxu0 0
        %3670 = vmatpush1.bf16.xpose.msra.mxu0 %v3632
        %3671 = vmatprep.subr.bf16.mxu0 0
        %3672 = vmatpush1.bf16.xpose.msra.mxu0 %v3635
        %3673 = vmatprep.subr.bf16.mxu0 0
        %3674 = vmatpush1.bf16.xpose.msra.mxu0 %v3638
        %3675 = vmatprep.subr.bf16.mxu0 0
        %3676 = vmatpush1.bf16.xpose.msra.mxu0 %v3641
        %3677 = vmatprep.subr.bf16.mxu0 0
        %3678 = vmatpush1.bf16.xpose.msra.mxu0 %v3644
        %3679 = vmatprep.subr.bf16.mxu0 0
        %3680 = vmatpush1.bf16.xpose.msra.mxu0 %v3647
        %3681 = vmatprep.mubr.bf16.mxu0 0
        %3682 = vmatmul.mubr.bf16.gmra.mrb[0].mxu0 %v3596
        %v3683 = vpop.f32.mrb[0].mxu0
        %v3684 = vadd.f32 %v3567, %v3683
        %v3685 = vpop.f32.mrb[0].mxu0
        %v3686 = vadd.f32 %v3569, %v3685
        %v3687 = vpop.f32.mrb[0].mxu0
        %v3688 = vadd.f32 %v3571, %v3687
        %v3689 = vpop.f32.mrb[0].mxu0
        %v3690 = vadd.f32 %v3573, %v3689
        %3691 = vmatprep.mubr.bf16.mxu0 0
        %3692 = vmatmul.mubr.bf16.gmra.mrb[0].mxu0 %v3599
        %v3693 = vpop.f32.mrb[0].mxu0
        %v3694 = vadd.f32 %v3577, %v3693
        %v3695 = vpop.f32.mrb[0].mxu0
        %v3696 = vadd.f32 %v3579, %v3695
        %v3697 = vpop.f32.mrb[0].mxu0
        %v3698 = vadd.f32 %v3581, %v3697
        %v3699 = vpop.f32.mrb[0].mxu0
        %v3700 = vadd.f32 %v3583, %v3699
        %3701 = vdwg.mxu0
        %3702 = vrot.lane.b32.xlu0 %v1294, 112
        %v3703 = vpop.permute.xlu0 %3702
        %3704 = vrot.lane.b32.xlu0 %v1295, 112
        %v3705 = vpop.permute.xlu0 %3704
        %3706 = vrot.lane.b32.xlu0 %v1296, 112
        %v3707 = vpop.permute.xlu0 %3706
        %3708 = vrot.lane.b32.xlu0 %v1297, 112
        %v3709 = vpop.permute.xlu0 %3708
        %3710 = vrot.lane.b32.xlu0 %v1298, 112
        %v3711 = vpop.permute.xlu0 %3710
        %3712 = vrot.lane.b32.xlu0 %v1299, 112
        %v3713 = vpop.permute.xlu0 %3712
        %3714 = vrot.lane.b32.xlu0 %v1300, 112
        %v3715 = vpop.permute.xlu0 %3714
        %3716 = vrot.lane.b32.xlu0 %v1301, 112
        %v3717 = vpop.permute.xlu0 %3716
        %3718 = vrot.lane.b32.xlu0 %v1302, 112
        %v3719 = vpop.permute.xlu0 %3718
        %3720 = vrot.lane.b32.xlu0 %v1303, 112
        %v3721 = vpop.permute.xlu0 %3720
        %3722 = vrot.lane.b32.xlu0 %v1304, 112
        %v3723 = vpop.permute.xlu0 %3722
        %3724 = vrot.lane.b32.xlu0 %v1305, 112
        %v3725 = vpop.permute.xlu0 %3724
        %3726 = vrot.lane.b32.xlu0 %v1306, 112
        %v3727 = vpop.permute.xlu0 %3726
        %3728 = vrot.lane.b32.xlu0 %v1307, 112
        %v3729 = vpop.permute.xlu0 %3728
        %3730 = vrot.lane.b32.xlu0 %v1308, 112
        %v3731 = vpop.permute.xlu0 %3730
        %3732 = vrot.lane.b32.xlu0 %v1309, 112
        %v3733 = vpop.permute.xlu0 %3732
        %3734 = vrot.lane.b32.xlu0 %v1310, 112
        %v3735 = vpop.permute.xlu0 %3734
        %3736 = vrot.lane.b32.xlu0 %v1311, 112
        %v3737 = vpop.permute.xlu0 %3736
        %3738 = vrot.lane.b32.xlu0 %v1312, 112
        %v3739 = vpop.permute.xlu0 %3738
        %3740 = vrot.lane.b32.xlu0 %v1313, 112
        %v3741 = vpop.permute.xlu0 %3740
        %3742 = vrot.lane.b32.xlu0 %v1314, 112
        %v3743 = vpop.permute.xlu0 %3742
        %3744 = vrot.lane.b32.xlu0 %v1315, 112
        %v3745 = vpop.permute.xlu0 %3744
        %3746 = vrot.lane.b32.xlu0 %v1316, 112
        %v3747 = vpop.permute.xlu0 %3746
        %3748 = vrot.lane.b32.xlu0 %v1317, 112
        %v3749 = vpop.permute.xlu0 %3748
        %3750 = vrot.lane.b32.xlu0 %v1318, 112
        %v3751 = vpop.permute.xlu0 %3750
        %3752 = vrot.lane.b32.xlu0 %v1319, 112
        %v3753 = vpop.permute.xlu0 %3752
        %3754 = vrot.lane.b32.xlu0 %v1320, 112
        %v3755 = vpop.permute.xlu0 %3754
        %3756 = vrot.lane.b32.xlu0 %v1321, 112
        %v3757 = vpop.permute.xlu0 %3756
        %3758 = vrot.lane.b32.xlu0 %v1322, 112
        %v3759 = vpop.permute.xlu0 %3758
        %3760 = vrot.lane.b32.xlu0 %v1323, 112
        %v3761 = vpop.permute.xlu0 %3760
        %3762 = vrot.lane.b32.xlu0 %v1324, 112
        %v3763 = vpop.permute.xlu0 %3762
        %3764 = vrot.lane.b32.xlu0 %v1325, 112
        %v3765 = vpop.permute.xlu0 %3764
        %v3767 = vsel %vm1342, %v3703, 0
        %v3770 = vsel %vm1342, %v3705, 0
        %v3773 = vsel %vm1342, %v3707, 0
        %v3776 = vsel %vm1342, %v3709, 0
        %v3779 = vsel %vm1342, %v3711, 0
        %v3782 = vsel %vm1342, %v3713, 0
        %v3785 = vsel %vm1342, %v3715, 0
        %v3788 = vsel %vm1342, %v3717, 0
        %v3791 = vsel %vm1342, %v3719, 0
        %v3794 = vsel %vm1342, %v3721, 0
        %v3797 = vsel %vm1342, %v3723, 0
        %v3800 = vsel %vm1342, %v3725, 0
        %v3803 = vsel %vm1342, %v3727, 0
        %v3806 = vsel %vm1342, %v3729, 0
        %v3809 = vsel %vm1342, %v3731, 0
        %v3812 = vsel %vm1342, %v3733, 0
        %v3815 = vsel %vm1342, %v3735, 0
        %v3818 = vsel %vm1342, %v3737, 0
        %v3821 = vsel %vm1342, %v3739, 0
        %v3824 = vsel %vm1342, %v3741, 0
        %v3827 = vsel %vm1342, %v3743, 0
        %v3830 = vsel %vm1342, %v3745, 0
        %v3833 = vsel %vm1342, %v3747, 0
        %v3836 = vsel %vm1342, %v3749, 0
        %v3839 = vsel %vm1342, %v3751, 0
        %v3842 = vsel %vm1342, %v3753, 0
        %v3845 = vsel %vm1342, %v3755, 0
        %v3848 = vsel %vm1342, %v3757, 0
        %v3851 = vsel %vm1342, %v3759, 0
        %v3854 = vsel %vm1342, %v3761, 0
        %v3857 = vsel %vm1342, %v3763, 0
        %v3860 = vsel %vm1342, %v3765, 0
        %3862 = vmatprep.subr.bf16.mxu0 0
        %3863 = vmatpush1.bf16.xpose.msra.mxu0 %v3815
        %3864 = vmatprep.subr.bf16.mxu0 0
        %3865 = vmatpush1.bf16.xpose.msra.mxu0 %v3818
        %3866 = vmatprep.subr.bf16.mxu0 0
        %3867 = vmatpush1.bf16.xpose.msra.mxu0 %v3821
        %3868 = vmatprep.subr.bf16.mxu0 0
        %3869 = vmatpush1.bf16.xpose.msra.mxu0 %v3824
        %3870 = vmatprep.subr.bf16.mxu0 0
        %3871 = vmatpush1.bf16.xpose.msra.mxu0 %v3827
        %3872 = vmatprep.subr.bf16.mxu0 0
        %3873 = vmatpush1.bf16.xpose.msra.mxu0 %v3830
        %3874 = vmatprep.subr.bf16.mxu0 0
        %3875 = vmatpush1.bf16.xpose.msra.mxu0 %v3833
        %3876 = vmatprep.subr.bf16.mxu0 0
        %3877 = vmatpush1.bf16.xpose.msra.mxu0 %v3836
        %3878 = vmatprep.subr.bf16.mxu0 0
        %3879 = vmatpush1.bf16.xpose.msra.mxu0 %v3839
        %3880 = vmatprep.subr.bf16.mxu0 0
        %3881 = vmatpush1.bf16.xpose.msra.mxu0 %v3842
        %3882 = vmatprep.subr.bf16.mxu0 0
        %3883 = vmatpush1.bf16.xpose.msra.mxu0 %v3845
        %3884 = vmatprep.subr.bf16.mxu0 0
        %3885 = vmatpush1.bf16.xpose.msra.mxu0 %v3848
        %3886 = vmatprep.subr.bf16.mxu0 0
        %3887 = vmatpush1.bf16.xpose.msra.mxu0 %v3851
        %3888 = vmatprep.subr.bf16.mxu0 0
        %3889 = vmatpush1.bf16.xpose.msra.mxu0 %v3854
        %3890 = vmatprep.subr.bf16.mxu0 0
        %3891 = vmatpush1.bf16.xpose.msra.mxu0 %v3857
        %3892 = vmatprep.subr.bf16.mxu0 0
        %3893 = vmatpush1.bf16.xpose.msra.mxu0 %v3860
        %3894 = vmatprep.mubr.bf16.mxu0 0
        %3895 = vmatmul.mubr.bf16.gmra.mrb[0].mxu0 %v3767
        %v3896 = vpop.f32.mrb[0].mxu0
        %v3897 = vadd.f32 0.0, %v3896
        %v3898 = vpop.f32.mrb[0].mxu0
        %v3899 = vadd.f32 0.0, %v3898
        %v3900 = vpop.f32.mrb[0].mxu0
        %v3901 = vadd.f32 0.0, %v3900
        %v3902 = vpop.f32.mrb[0].mxu0
        %v3903 = vadd.f32 0.0, %v3902
        %3904 = vmatprep.mubr.bf16.mxu0 0
        %3905 = vmatmul.mubr.bf16.gmra.mrb[0].mxu0 %v3770
        %v3906 = vpop.f32.mrb[0].mxu0
        %v3907 = vadd.f32 0.0, %v3906
        %v3908 = vpop.f32.mrb[0].mxu0
        %v3909 = vadd.f32 0.0, %v3908
        %v3910 = vpop.f32.mrb[0].mxu0
        %v3911 = vadd.f32 0.0, %v3910
        %v3912 = vpop.f32.mrb[0].mxu0
        %v3913 = vadd.f32 0.0, %v3912
        %3914 = vmatprep.mubr.bf16.mxu0 0
        %3915 = vmatmul.mubr.bf16.gmra.mrb[0].mxu0 %v3773
        %v3916 = vpop.f32.mrb[0].mxu0
        %v3917 = vadd.f32 0.0, %v3916
        %v3918 = vpop.f32.mrb[0].mxu0
        %v3919 = vadd.f32 0.0, %v3918
        %v3920 = vpop.f32.mrb[0].mxu0
        %v3921 = vadd.f32 0.0, %v3920
        %v3922 = vpop.f32.mrb[0].mxu0
        %v3923 = vadd.f32 0.0, %v3922
        %3924 = vmatprep.mubr.bf16.mxu0 0
        %3925 = vmatmul.mubr.bf16.gmra.mrb[0].mxu0 %v3776
        %v3926 = vpop.f32.mrb[0].mxu0
        %v3927 = vadd.f32 0.0, %v3926
        %v3928 = vpop.f32.mrb[0].mxu0
        %v3929 = vadd.f32 0.0, %v3928
        %v3930 = vpop.f32.mrb[0].mxu0
        %v3931 = vadd.f32 0.0, %v3930
        %v3932 = vpop.f32.mrb[0].mxu0
        %v3933 = vadd.f32 0.0, %v3932
        %3934 = vmatprep.mubr.bf16.mxu0 0
        %3935 = vmatmul.mubr.bf16.gmra.mrb[0].mxu0 %v3779
        %v3936 = vpop.f32.mrb[0].mxu0
        %v3937 = vadd.f32 0.0, %v3936
        %v3938 = vpop.f32.mrb[0].mxu0
        %v3939 = vadd.f32 0.0, %v3938
        %v3940 = vpop.f32.mrb[0].mxu0
        %v3941 = vadd.f32 0.0, %v3940
        %v3942 = vpop.f32.mrb[0].mxu0
        %v3943 = vadd.f32 0.0, %v3942
        %3944 = vmatprep.mubr.bf16.mxu0 0
        %3945 = vmatmul.mubr.bf16.gmra.mrb[0].mxu0 %v3782
        %v3946 = vpop.f32.mrb[0].mxu0
        %v3947 = vadd.f32 0.0, %v3946
        %v3948 = vpop.f32.mrb[0].mxu0
        %v3949 = vadd.f32 0.0, %v3948
        %v3950 = vpop.f32.mrb[0].mxu0
        %v3951 = vadd.f32 0.0, %v3950
        %v3952 = vpop.f32.mrb[0].mxu0
        %v3953 = vadd.f32 0.0, %v3952
        %3954 = vmatprep.mubr.bf16.mxu0 0
        %3955 = vmatmul.mubr.bf16.gmra.mrb[0].mxu0 %v3785
        %v3956 = vpop.f32.mrb[0].mxu0
        %v3957 = vadd.f32 0.0, %v3956
        %v3958 = vpop.f32.mrb[0].mxu0
        %v3959 = vadd.f32 0.0, %v3958
        %v3960 = vpop.f32.mrb[0].mxu0
        %v3961 = vadd.f32 0.0, %v3960
        %v3962 = vpop.f32.mrb[0].mxu0
        %v3963 = vadd.f32 0.0, %v3962
        %3964 = vmatprep.mubr.bf16.mxu0 0
        %3965 = vmatmul.mubr.bf16.gmra.mrb[0].mxu0 %v3788
        %v3966 = vpop.f32.mrb[0].mxu0
        %v3967 = vadd.f32 0.0, %v3966
        %v3968 = vpop.f32.mrb[0].mxu0
        %v3969 = vadd.f32 0.0, %v3968
        %v3970 = vpop.f32.mrb[0].mxu0
        %v3971 = vadd.f32 0.0, %v3970
        %v3972 = vpop.f32.mrb[0].mxu0
        %v3973 = vadd.f32 0.0, %v3972
        %3974 = vmatprep.mubr.bf16.mxu0 0
        %3975 = vmatmul.mubr.bf16.gmra.mrb[0].mxu0 %v3791
        %v3976 = vpop.f32.mrb[0].mxu0
        %v3977 = vadd.f32 0.0, %v3976
        %v3978 = vpop.f32.mrb[0].mxu0
        %v3979 = vadd.f32 0.0, %v3978
        %v3980 = vpop.f32.mrb[0].mxu0
        %v3981 = vadd.f32 0.0, %v3980
        %v3982 = vpop.f32.mrb[0].mxu0
        %v3983 = vadd.f32 0.0, %v3982
        %3984 = vmatprep.mubr.bf16.mxu0 0
        %3985 = vmatmul.mubr.bf16.gmra.mrb[0].mxu0 %v3794
        %v3986 = vpop.f32.mrb[0].mxu0
        %v3987 = vadd.f32 0.0, %v3986
        %v3988 = vpop.f32.mrb[0].mxu0
        %v3989 = vadd.f32 0.0, %v3988
        %v3990 = vpop.f32.mrb[0].mxu0
        %v3991 = vadd.f32 0.0, %v3990
        %v3992 = vpop.f32.mrb[0].mxu0
        %v3993 = vadd.f32 0.0, %v3992
        %3994 = vmatprep.mubr.bf16.mxu0 0
        %3995 = vmatmul.mubr.bf16.gmra.mrb[0].mxu0 %v3797
        %v3996 = vpop.f32.mrb[0].mxu0
        %v3997 = vadd.f32 0.0, %v3996
        %v3998 = vpop.f32.mrb[0].mxu0
        %v3999 = vadd.f32 0.0, %v3998
        %v4000 = vpop.f32.mrb[0].mxu0
        %v4001 = vadd.f32 0.0, %v4000
        %v4002 = vpop.f32.mrb[0].mxu0
        %v4003 = vadd.f32 0.0, %v4002
        %4004 = vmatprep.mubr.bf16.mxu0 0
        %4005 = vmatmul.mubr.bf16.gmra.mrb[0].mxu0 %v3800
        %v4006 = vpop.f32.mrb[0].mxu0
        %v4007 = vadd.f32 0.0, %v4006
        %v4008 = vpop.f32.mrb[0].mxu0
        %v4009 = vadd.f32 0.0, %v4008
        %v4010 = vpop.f32.mrb[0].mxu0
        %v4011 = vadd.f32 0.0, %v4010
        %v4012 = vpop.f32.mrb[0].mxu0
        %v4013 = vadd.f32 0.0, %v4012
        %4014 = vmatprep.mubr.bf16.mxu0 0
        %4015 = vmatmul.mubr.bf16.gmra.mrb[0].mxu0 %v3803
        %v4016 = vpop.f32.mrb[0].mxu0
        %v4017 = vadd.f32 0.0, %v4016
        %v4018 = vpop.f32.mrb[0].mxu0
        %v4019 = vadd.f32 0.0, %v4018
        %v4020 = vpop.f32.mrb[0].mxu0
        %v4021 = vadd.f32 0.0, %v4020
        %v4022 = vpop.f32.mrb[0].mxu0
        %v4023 = vadd.f32 0.0, %v4022
        %4024 = vmatprep.mubr.bf16.mxu0 0
        %4025 = vmatmul.mubr.bf16.gmra.mrb[0].mxu0 %v3806
        %v4026 = vpop.f32.mrb[0].mxu0
        %v4027 = vadd.f32 0.0, %v4026
        %v4028 = vpop.f32.mrb[0].mxu0
        %v4029 = vadd.f32 0.0, %v4028
        %v4030 = vpop.f32.mrb[0].mxu0
        %v4031 = vadd.f32 0.0, %v4030
        %v4032 = vpop.f32.mrb[0].mxu0
        %v4033 = vadd.f32 0.0, %v4032
        %4034 = vmatprep.mubr.bf16.mxu0 0
        %4035 = vmatmul.mubr.bf16.gmra.mrb[0].mxu0 %v3809
        %v4036 = vpop.f32.mrb[0].mxu0
        %v4037 = vadd.f32 0.0, %v4036
        %v4038 = vpop.f32.mrb[0].mxu0
        %v4039 = vadd.f32 0.0, %v4038
        %v4040 = vpop.f32.mrb[0].mxu0
        %v4041 = vadd.f32 0.0, %v4040
        %v4042 = vpop.f32.mrb[0].mxu0
        %v4043 = vadd.f32 0.0, %v4042
        %4044 = vmatprep.mubr.bf16.mxu0 0
        %4045 = vmatmul.mubr.bf16.gmra.mrb[0].mxu0 %v3812
        %v4046 = vpop.f32.mrb[0].mxu0
        %v4047 = vadd.f32 0.0, %v4046
        %v4048 = vpop.f32.mrb[0].mxu0
        %v4049 = vadd.f32 0.0, %v4048
        %v4050 = vpop.f32.mrb[0].mxu0
        %v4051 = vadd.f32 0.0, %v4050
        %v4052 = vpop.f32.mrb[0].mxu0
        %v4053 = vadd.f32 0.0, %v4052
        %4054 = vdwg.mxu0
        %v4055 = vmax.f32 %v3897, %v3899
        %4056 = vmax.xlane.f32.xlu0 %v4055
        %v4057 = vpop.xlane.xlu0 %4056
        %v4058 = vmax.f32 %v3901, %v3903
        %4059 = vmax.xlane.f32.xlu0 %v4058
        %v4060 = vpop.xlane.xlu0 %4059
        %v4061 = vmax.f32 %v3907, %v3909
        %4062 = vmax.xlane.f32.xlu0 %v4061
        %v4063 = vpop.xlane.xlu0 %4062
        %v4064 = vmax.f32 %v3911, %v3913
        %4065 = vmax.xlane.f32.xlu0 %v4064
        %v4066 = vpop.xlane.xlu0 %4065
        %v4067 = vmax.f32 %v3917, %v3919
        %4068 = vmax.xlane.f32.xlu0 %v4067
        %v4069 = vpop.xlane.xlu0 %4068
        %v4070 = vmax.f32 %v3921, %v3923
        %4071 = vmax.xlane.f32.xlu0 %v4070
        %v4072 = vpop.xlane.xlu0 %4071
        %v4073 = vmax.f32 %v3927, %v3929
        %4074 = vmax.xlane.f32.xlu0 %v4073
        %v4075 = vpop.xlane.xlu0 %4074
        %v4076 = vmax.f32 %v3931, %v3933
        %4077 = vmax.xlane.f32.xlu0 %v4076
        %v4078 = vpop.xlane.xlu0 %4077
        %v4079 = vmax.f32 %v3937, %v3939
        %4080 = vmax.xlane.f32.xlu0 %v4079
        %v4081 = vpop.xlane.xlu0 %4080
        %v4082 = vmax.f32 %v3941, %v3943
        %4083 = vmax.xlane.f32.xlu0 %v4082
        %v4084 = vpop.xlane.xlu0 %4083
        %v4085 = vmax.f32 %v3947, %v3949
        %4086 = vmax.xlane.f32.xlu0 %v4085
        %v4087 = vpop.xlane.xlu0 %4086
        %v4088 = vmax.f32 %v3951, %v3953
        %4089 = vmax.xlane.f32.xlu0 %v4088
        %v4090 = vpop.xlane.xlu0 %4089
        %v4091 = vmax.f32 %v3957, %v3959
        %4092 = vmax.xlane.f32.xlu0 %v4091
        %v4093 = vpop.xlane.xlu0 %4092
        %v4094 = vmax.f32 %v3961, %v3963
        %4095 = vmax.xlane.f32.xlu0 %v4094
        %v4096 = vpop.xlane.xlu0 %4095
        %v4097 = vmax.f32 %v3967, %v3969
        %4098 = vmax.xlane.f32.xlu0 %v4097
        %v4099 = vpop.xlane.xlu0 %4098
        %v4100 = vmax.f32 %v3971, %v3973
        %4101 = vmax.xlane.f32.xlu0 %v4100
        %v4102 = vpop.xlane.xlu0 %4101
        %v4103 = vmax.f32 %v3977, %v3979
        %4104 = vmax.xlane.f32.xlu0 %v4103
        %v4105 = vpop.xlane.xlu0 %4104
        %v4106 = vmax.f32 %v3981, %v3983
        %4107 = vmax.xlane.f32.xlu0 %v4106
        %v4108 = vpop.xlane.xlu0 %4107
        %v4109 = vmax.f32 %v3987, %v3989
        %4110 = vmax.xlane.f32.xlu0 %v4109
        %v4111 = vpop.xlane.xlu0 %4110
        %v4112 = vmax.f32 %v3991, %v3993
        %4113 = vmax.xlane.f32.xlu0 %v4112
        %v4114 = vpop.xlane.xlu0 %4113
        %v4115 = vmax.f32 %v3997, %v3999
        %4116 = vmax.xlane.f32.xlu0 %v4115
        %v4117 = vpop.xlane.xlu0 %4116
        %v4118 = vmax.f32 %v4001, %v4003
        %4119 = vmax.xlane.f32.xlu0 %v4118
        %v4120 = vpop.xlane.xlu0 %4119
        %v4121 = vmax.f32 %v4007, %v4009
        %4122 = vmax.xlane.f32.xlu0 %v4121
        %v4123 = vpop.xlane.xlu0 %4122
        %v4124 = vmax.f32 %v4011, %v4013
        %4125 = vmax.xlane.f32.xlu0 %v4124
        %v4126 = vpop.xlane.xlu0 %4125
        %v4127 = vmax.f32 %v4017, %v4019
        %4128 = vmax.xlane.f32.xlu0 %v4127
        %v4129 = vpop.xlane.xlu0 %4128
        %v4130 = vmax.f32 %v4021, %v4023
        %4131 = vmax.xlane.f32.xlu0 %v4130
        %v4132 = vpop.xlane.xlu0 %4131
        %v4133 = vmax.f32 %v4027, %v4029
        %4134 = vmax.xlane.f32.xlu0 %v4133
        %v4135 = vpop.xlane.xlu0 %4134
        %v4136 = vmax.f32 %v4031, %v4033
        %4137 = vmax.xlane.f32.xlu0 %v4136
        %v4138 = vpop.xlane.xlu0 %4137
        %v4139 = vmax.f32 %v4037, %v4039
        %4140 = vmax.xlane.f32.xlu0 %v4139
        %v4141 = vpop.xlane.xlu0 %4140
        %v4142 = vmax.f32 %v4041, %v4043
        %4143 = vmax.xlane.f32.xlu0 %v4142
        %v4144 = vpop.xlane.xlu0 %4143
        %v4145 = vmax.f32 %v4047, %v4049
        %4146 = vmax.xlane.f32.xlu0 %v4145
        %v4147 = vpop.xlane.xlu0 %4146
        %v4148 = vmax.f32 %v4051, %v4053
        %4149 = vmax.xlane.f32.xlu0 %v4148
        %v4150 = vpop.xlane.xlu0 %4149
        %v4151 = vsub.f32 %v3897, %v4057
        %v4152 = vsub.f32 %v3899, %v4057
        %v4153 = vsub.f32 %v3901, %v4060
        %v4154 = vsub.f32 %v3903, %v4060
        %v4155 = vsub.f32 %v3907, %v4063
        %v4156 = vsub.f32 %v3909, %v4063
        %v4157 = vsub.f32 %v3911, %v4066
        %v4158 = vsub.f32 %v3913, %v4066
        %v4159 = vsub.f32 %v3917, %v4069
        %v4160 = vsub.f32 %v3919, %v4069
        %v4161 = vsub.f32 %v3921, %v4072
        %v4162 = vsub.f32 %v3923, %v4072
        %v4163 = vsub.f32 %v3927, %v4075
        %v4164 = vsub.f32 %v3929, %v4075
        %v4165 = vsub.f32 %v3931, %v4078
        %v4166 = vsub.f32 %v3933, %v4078
        %v4167 = vsub.f32 %v3937, %v4081
        %v4168 = vsub.f32 %v3939, %v4081
        %v4169 = vsub.f32 %v3941, %v4084
        %v4170 = vsub.f32 %v3943, %v4084
        %v4171 = vsub.f32 %v3947, %v4087
        %v4172 = vsub.f32 %v3949, %v4087
        %v4173 = vsub.f32 %v3951, %v4090
        %v4174 = vsub.f32 %v3953, %v4090
        %v4175 = vsub.f32 %v3957, %v4093
        %v4176 = vsub.f32 %v3959, %v4093
        %v4177 = vsub.f32 %v3961, %v4096
        %v4178 = vsub.f32 %v3963, %v4096
        %v4179 = vsub.f32 %v3967, %v4099
        %v4180 = vsub.f32 %v3969, %v4099
        %v4181 = vsub.f32 %v3971, %v4102
        %v4182 = vsub.f32 %v3973, %v4102
        %v4183 = vsub.f32 %v3977, %v4105
        %v4184 = vsub.f32 %v3979, %v4105
        %v4185 = vsub.f32 %v3981, %v4108
        %v4186 = vsub.f32 %v3983, %v4108
        %v4187 = vsub.f32 %v3987, %v4111
        %v4188 = vsub.f32 %v3989, %v4111
        %v4189 = vsub.f32 %v3991, %v4114
        %v4190 = vsub.f32 %v3993, %v4114
        %v4191 = vsub.f32 %v3997, %v4117
        %v4192 = vsub.f32 %v3999, %v4117
        %v4193 = vsub.f32 %v4001, %v4120
        %v4194 = vsub.f32 %v4003, %v4120
        %v4195 = vsub.f32 %v4007, %v4123
        %v4196 = vsub.f32 %v4009, %v4123
        %v4197 = vsub.f32 %v4011, %v4126
        %v4198 = vsub.f32 %v4013, %v4126
        %v4199 = vsub.f32 %v4017, %v4129
        %v4200 = vsub.f32 %v4019, %v4129
        %v4201 = vsub.f32 %v4021, %v4132
        %v4202 = vsub.f32 %v4023, %v4132
        %v4203 = vsub.f32 %v4027, %v4135
        %v4204 = vsub.f32 %v4029, %v4135
        %v4205 = vsub.f32 %v4031, %v4138
        %v4206 = vsub.f32 %v4033, %v4138
        %v4207 = vsub.f32 %v4037, %v4141
        %v4208 = vsub.f32 %v4039, %v4141
        %v4209 = vsub.f32 %v4041, %v4144
        %v4210 = vsub.f32 %v4043, %v4144
        %v4211 = vsub.f32 %v4047, %v4147
        %v4212 = vsub.f32 %v4049, %v4147
        %v4213 = vsub.f32 %v4051, %v4150
        %v4214 = vsub.f32 %v4053, %v4150
        %v4215 = vmul.f32 %v4151, 1.442695
        %v4216 = vpow.pop %v4215
        %v4217 = vmul.f32 %v4152, 1.442695
        %v4218 = vpow.pop %v4217
        %v4219 = vmul.f32 %v4153, 1.442695
        %v4220 = vpow.pop %v4219
        %v4221 = vmul.f32 %v4154, 1.442695
        %v4222 = vpow.pop %v4221
        %v4223 = vmul.f32 %v4155, 1.442695
        %v4224 = vpow.pop %v4223
        %v4225 = vmul.f32 %v4156, 1.442695
        %v4226 = vpow.pop %v4225
        %v4227 = vmul.f32 %v4157, 1.442695
        %v4228 = vpow.pop %v4227
        %v4229 = vmul.f32 %v4158, 1.442695
        %v4230 = vpow.pop %v4229
        %v4231 = vmul.f32 %v4159, 1.442695
        %v4232 = vpow.pop %v4231
        %v4233 = vmul.f32 %v4160, 1.442695
        %v4234 = vpow.pop %v4233
        %v4235 = vmul.f32 %v4161, 1.442695
        %v4236 = vpow.pop %v4235
        %v4237 = vmul.f32 %v4162, 1.442695
        %v4238 = vpow.pop %v4237
        %v4239 = vmul.f32 %v4163, 1.442695
        %v4240 = vpow.pop %v4239
        %v4241 = vmul.f32 %v4164, 1.442695
        %v4242 = vpow.pop %v4241
        %v4243 = vmul.f32 %v4165, 1.442695
        %v4244 = vpow.pop %v4243
        %v4245 = vmul.f32 %v4166, 1.442695
        %v4246 = vpow.pop %v4245
        %v4247 = vmul.f32 %v4167, 1.442695
        %v4248 = vpow.pop %v4247
        %v4249 = vmul.f32 %v4168, 1.442695
        %v4250 = vpow.pop %v4249
        %v4251 = vmul.f32 %v4169, 1.442695
        %v4252 = vpow.pop %v4251
        %v4253 = vmul.f32 %v4170, 1.442695
        %v4254 = vpow.pop %v4253
        %v4255 = vmul.f32 %v4171, 1.442695
        %v4256 = vpow.pop %v4255
        %v4257 = vmul.f32 %v4172, 1.442695
        %v4258 = vpow.pop %v4257
        %v4259 = vmul.f32 %v4173, 1.442695
        %v4260 = vpow.pop %v4259
        %v4261 = vmul.f32 %v4174, 1.442695
        %v4262 = vpow.pop %v4261
        %v4263 = vmul.f32 %v4175, 1.442695
        %v4264 = vpow.pop %v4263
        %v4265 = vmul.f32 %v4176, 1.442695
        %v4266 = vpow.pop %v4265
        %v4267 = vmul.f32 %v4177, 1.442695
        %v4268 = vpow.pop %v4267
        %v4269 = vmul.f32 %v4178, 1.442695
        %v4270 = vpow.pop %v4269
        %v4271 = vmul.f32 %v4179, 1.442695
        %v4272 = vpow.pop %v4271
        %v4273 = vmul.f32 %v4180, 1.442695
        %v4274 = vpow.pop %v4273
        %v4275 = vmul.f32 %v4181, 1.442695
        %v4276 = vpow.pop %v4275
        %v4277 = vmul.f32 %v4182, 1.442695
        %v4278 = vpow.pop %v4277
        %v4279 = vmul.f32 %v4183, 1.442695
        %v4280 = vpow.pop %v4279
        %v4281 = vmul.f32 %v4184, 1.442695
        %v4282 = vpow.pop %v4281
        %v4283 = vmul.f32 %v4185, 1.442695
        %v4284 = vpow.pop %v4283
        %v4285 = vmul.f32 %v4186, 1.442695
        %v4286 = vpow.pop %v4285
        %v4287 = vmul.f32 %v4187, 1.442695
        %v4288 = vpow.pop %v4287
        %v4289 = vmul.f32 %v4188, 1.442695
        %v4290 = vpow.pop %v4289
        %v4291 = vmul.f32 %v4189, 1.442695
        %v4292 = vpow.pop %v4291
        %v4293 = vmul.f32 %v4190, 1.442695
        %v4294 = vpow.pop %v4293
        %v4295 = vmul.f32 %v4191, 1.442695
        %v4296 = vpow.pop %v4295
        %v4297 = vmul.f32 %v4192, 1.442695
        %v4298 = vpow.pop %v4297
        %v4299 = vmul.f32 %v4193, 1.442695
        %v4300 = vpow.pop %v4299
        %v4301 = vmul.f32 %v4194, 1.442695
        %v4302 = vpow.pop %v4301
        %v4303 = vmul.f32 %v4195, 1.442695
        %v4304 = vpow.pop %v4303
        %v4305 = vmul.f32 %v4196, 1.442695
        %v4306 = vpow.pop %v4305
        %v4307 = vmul.f32 %v4197, 1.442695
        %v4308 = vpow.pop %v4307
        %v4309 = vmul.f32 %v4198, 1.442695
        %v4310 = vpow.pop %v4309
        %v4311 = vmul.f32 %v4199, 1.442695
        %v4312 = vpow.pop %v4311
        %v4313 = vmul.f32 %v4200, 1.442695
        %v4314 = vpow.pop %v4313
        %v4315 = vmul.f32 %v4201, 1.442695
        %v4316 = vpow.pop %v4315
        %v4317 = vmul.f32 %v4202, 1.442695
        %v4318 = vpow.pop %v4317
        %v4319 = vmul.f32 %v4203, 1.442695
        %v4320 = vpow.pop %v4319
        %v4321 = vmul.f32 %v4204, 1.442695
        %v4322 = vpow.pop %v4321
        %v4323 = vmul.f32 %v4205, 1.442695
        %v4324 = vpow.pop %v4323
        %v4325 = vmul.f32 %v4206, 1.442695
        %v4326 = vpow.pop %v4325
        %v4327 = vmul.f32 %v4207, 1.442695
        %v4328 = vpow.pop %v4327
        %v4329 = vmul.f32 %v4208, 1.442695
        %v4330 = vpow.pop %v4329
        %v4331 = vmul.f32 %v4209, 1.442695
        %v4332 = vpow.pop %v4331
        %v4333 = vmul.f32 %v4210, 1.442695
        %v4334 = vpow.pop %v4333
        %v4335 = vmul.f32 %v4211, 1.442695
        %v4336 = vpow.pop %v4335
        %v4337 = vmul.f32 %v4212, 1.442695
        %v4338 = vpow.pop %v4337
        %v4339 = vmul.f32 %v4213, 1.442695
        %v4340 = vpow.pop %v4339
        %v4341 = vmul.f32 %v4214, 1.442695
        %v4342 = vpow.pop %v4341
        %v4343 = vadd.f32 %v4216, %v4218
        %4344 = vadd.xlane.f32.xlu0 %v4343
        %v4345 = vpop.xlane.xlu0 %4344
        %v4346 = vadd.f32 %v4220, %v4222
        %4347 = vadd.xlane.f32.xlu0 %v4346
        %v4348 = vpop.xlane.xlu0 %4347
        %v4349 = vadd.f32 %v4224, %v4226
        %4350 = vadd.xlane.f32.xlu0 %v4349
        %v4351 = vpop.xlane.xlu0 %4350
        %v4352 = vadd.f32 %v4228, %v4230
        %4353 = vadd.xlane.f32.xlu0 %v4352
        %v4354 = vpop.xlane.xlu0 %4353
        %v4355 = vadd.f32 %v4232, %v4234
        %4356 = vadd.xlane.f32.xlu0 %v4355
        %v4357 = vpop.xlane.xlu0 %4356
        %v4358 = vadd.f32 %v4236, %v4238
        %4359 = vadd.xlane.f32.xlu0 %v4358
        %v4360 = vpop.xlane.xlu0 %4359
        %v4361 = vadd.f32 %v4240, %v4242
        %4362 = vadd.xlane.f32.xlu0 %v4361
        %v4363 = vpop.xlane.xlu0 %4362
        %v4364 = vadd.f32 %v4244, %v4246
        %4365 = vadd.xlane.f32.xlu0 %v4364
        %v4366 = vpop.xlane.xlu0 %4365
        %v4367 = vadd.f32 %v4248, %v4250
        %4368 = vadd.xlane.f32.xlu0 %v4367
        %v4369 = vpop.xlane.xlu0 %4368
        %v4370 = vadd.f32 %v4252, %v4254
        %4371 = vadd.xlane.f32.xlu0 %v4370
        %v4372 = vpop.xlane.xlu0 %4371
        %v4373 = vadd.f32 %v4256, %v4258
        %4374 = vadd.xlane.f32.xlu0 %v4373
        %v4375 = vpop.xlane.xlu0 %4374
        %v4376 = vadd.f32 %v4260, %v4262
        %4377 = vadd.xlane.f32.xlu0 %v4376
        %v4378 = vpop.xlane.xlu0 %4377
        %v4379 = vadd.f32 %v4264, %v4266
        %4380 = vadd.xlane.f32.xlu0 %v4379
        %v4381 = vpop.xlane.xlu0 %4380
        %v4382 = vadd.f32 %v4268, %v4270
        %4383 = vadd.xlane.f32.xlu0 %v4382
        %v4384 = vpop.xlane.xlu0 %4383
        %v4385 = vadd.f32 %v4272, %v4274
        %4386 = vadd.xlane.f32.xlu0 %v4385
        %v4387 = vpop.xlane.xlu0 %4386
        %v4388 = vadd.f32 %v4276, %v4278
        %4389 = vadd.xlane.f32.xlu0 %v4388
        %v4390 = vpop.xlane.xlu0 %4389
        %v4391 = vadd.f32 %v4280, %v4282
        %4392 = vadd.xlane.f32.xlu0 %v4391
        %v4393 = vpop.xlane.xlu0 %4392
        %v4394 = vadd.f32 %v4284, %v4286
        %4395 = vadd.xlane.f32.xlu0 %v4394
        %v4396 = vpop.xlane.xlu0 %4395
        %v4397 = vadd.f32 %v4288, %v4290
        %4398 = vadd.xlane.f32.xlu0 %v4397
        %v4399 = vpop.xlane.xlu0 %4398
        %v4400 = vadd.f32 %v4292, %v4294
        %4401 = vadd.xlane.f32.xlu0 %v4400
        %v4402 = vpop.xlane.xlu0 %4401
        %v4403 = vadd.f32 %v4296, %v4298
        %4404 = vadd.xlane.f32.xlu0 %v4403
        %v4405 = vpop.xlane.xlu0 %4404
        %v4406 = vadd.f32 %v4300, %v4302
        %4407 = vadd.xlane.f32.xlu0 %v4406
        %v4408 = vpop.xlane.xlu0 %4407
        %v4409 = vadd.f32 %v4304, %v4306
        %4410 = vadd.xlane.f32.xlu0 %v4409
        %v4411 = vpop.xlane.xlu0 %4410
        %v4412 = vadd.f32 %v4308, %v4310
        %4413 = vadd.xlane.f32.xlu0 %v4412
        %v4414 = vpop.xlane.xlu0 %4413
        %v4415 = vadd.f32 %v4312, %v4314
        %4416 = vadd.xlane.f32.xlu0 %v4415
        %v4417 = vpop.xlane.xlu0 %4416
        %v4418 = vadd.f32 %v4316, %v4318
        %4419 = vadd.xlane.f32.xlu0 %v4418
        %v4420 = vpop.xlane.xlu0 %4419
        %v4421 = vadd.f32 %v4320, %v4322
        %4422 = vadd.xlane.f32.xlu0 %v4421
        %v4423 = vpop.xlane.xlu0 %4422
        %v4424 = vadd.f32 %v4324, %v4326
        %4425 = vadd.xlane.f32.xlu0 %v4424
        %v4426 = vpop.xlane.xlu0 %4425
        %v4427 = vadd.f32 %v4328, %v4330
        %4428 = vadd.xlane.f32.xlu0 %v4427
        %v4429 = vpop.xlane.xlu0 %4428
        %v4430 = vadd.f32 %v4332, %v4334
        %4431 = vadd.xlane.f32.xlu0 %v4430
        %v4432 = vpop.xlane.xlu0 %4431
        %v4433 = vadd.f32 %v4336, %v4338
        %4434 = vadd.xlane.f32.xlu0 %v4433
        %v4435 = vpop.xlane.xlu0 %4434
        %v4436 = vadd.f32 %v4340, %v4342
        %4437 = vadd.xlane.f32.xlu0 %v4436
        %v4438 = vpop.xlane.xlu0 %4437
        %v4439 = vrcp.pop %v4345
        %v4440 = vrcp.pop %v4348
        %v4441 = vrcp.pop %v4351
        %v4442 = vrcp.pop %v4354
        %v4443 = vrcp.pop %v4357
        %v4444 = vrcp.pop %v4360
        %v4445 = vrcp.pop %v4363
        %v4446 = vrcp.pop %v4366
        %v4447 = vrcp.pop %v4369
        %v4448 = vrcp.pop %v4372
        %v4449 = vrcp.pop %v4375
        %v4450 = vrcp.pop %v4378
        %v4451 = vrcp.pop %v4381
        %v4452 = vrcp.pop %v4384
        %v4453 = vrcp.pop %v4387
        %v4454 = vrcp.pop %v4390
        %v4455 = vrcp.pop %v4393
        %v4456 = vrcp.pop %v4396
        %v4457 = vrcp.pop %v4399
        %v4458 = vrcp.pop %v4402
        %v4459 = vrcp.pop %v4405
        %v4460 = vrcp.pop %v4408
        %v4461 = vrcp.pop %v4411
        %v4462 = vrcp.pop %v4414
        %v4463 = vrcp.pop %v4417
        %v4464 = vrcp.pop %v4420
        %v4465 = vrcp.pop %v4423
        %v4466 = vrcp.pop %v4426
        %v4467 = vrcp.pop %v4429
        %v4468 = vrcp.pop %v4432
        %v4469 = vrcp.pop %v4435
        %v4470 = vrcp.pop %v4438
        %v4471 = vmul.f32 %v4216, %v4439
        %v4472 = vmul.f32 %v4218, %v4439
        %v4473 = vmul.f32 %v4220, %v4440
        %v4474 = vmul.f32 %v4222, %v4440
        %v4475 = vmul.f32 %v4224, %v4441
        %v4476 = vmul.f32 %v4226, %v4441
        %v4477 = vmul.f32 %v4228, %v4442
        %v4478 = vmul.f32 %v4230, %v4442
        %v4479 = vmul.f32 %v4232, %v4443
        %v4480 = vmul.f32 %v4234, %v4443
        %v4481 = vmul.f32 %v4236, %v4444
        %v4482 = vmul.f32 %v4238, %v4444
        %v4483 = vmul.f32 %v4240, %v4445
        %v4484 = vmul.f32 %v4242, %v4445
        %v4485 = vmul.f32 %v4244, %v4446
        %v4486 = vmul.f32 %v4246, %v4446
        %v4487 = vmul.f32 %v4248, %v4447
        %v4488 = vmul.f32 %v4250, %v4447
        %v4489 = vmul.f32 %v4252, %v4448
        %v4490 = vmul.f32 %v4254, %v4448
        %v4491 = vmul.f32 %v4256, %v4449
        %v4492 = vmul.f32 %v4258, %v4449
        %v4493 = vmul.f32 %v4260, %v4450
        %v4494 = vmul.f32 %v4262, %v4450
        %v4495 = vmul.f32 %v4264, %v4451
        %v4496 = vmul.f32 %v4266, %v4451
        %v4497 = vmul.f32 %v4268, %v4452
        %v4498 = vmul.f32 %v4270, %v4452
        %v4499 = vmul.f32 %v4272, %v4453
        %v4500 = vmul.f32 %v4274, %v4453
        %v4501 = vmul.f32 %v4276, %v4454
        %v4502 = vmul.f32 %v4278, %v4454
        %v4503 = vmul.f32 %v4280, %v4455
        %v4504 = vmul.f32 %v4282, %v4455
        %v4505 = vmul.f32 %v4284, %v4456
        %v4506 = vmul.f32 %v4286, %v4456
        %v4507 = vmul.f32 %v4288, %v4457
        %v4508 = vmul.f32 %v4290, %v4457
        %v4509 = vmul.f32 %v4292, %v4458
        %v4510 = vmul.f32 %v4294, %v4458
        %v4511 = vmul.f32 %v4296, %v4459
        %v4512 = vmul.f32 %v4298, %v4459
        %v4513 = vmul.f32 %v4300, %v4460
        %v4514 = vmul.f32 %v4302, %v4460
        %v4515 = vmul.f32 %v4304, %v4461
        %v4516 = vmul.f32 %v4306, %v4461
        %v4517 = vmul.f32 %v4308, %v4462
        %v4518 = vmul.f32 %v4310, %v4462
        %v4519 = vmul.f32 %v4312, %v4463
        %v4520 = vmul.f32 %v4314, %v4463
        %v4521 = vmul.f32 %v4316, %v4464
        %v4522 = vmul.f32 %v4318, %v4464
        %v4523 = vmul.f32 %v4320, %v4465
        %v4524 = vmul.f32 %v4322, %v4465
        %v4525 = vmul.f32 %v4324, %v4466
        %v4526 = vmul.f32 %v4326, %v4466
        %v4527 = vmul.f32 %v4328, %v4467
        %v4528 = vmul.f32 %v4330, %v4467
        %v4529 = vmul.f32 %v4332, %v4468
        %v4530 = vmul.f32 %v4334, %v4468
        %v4531 = vmul.f32 %v4336, %v4469
        %v4532 = vmul.f32 %v4338, %v4469
        %v4533 = vmul.f32 %v4340, %v4470
        %v4534 = vmul.f32 %v4342, %v4470
        %v4535 = vpack.c.bf16 %v4473, %v4471
        %v4536 = vpack.c.bf16 %v4474, %v4472
        %v4537 = vpack.c.bf16 %v4477, %v4475
        %v4538 = vpack.c.bf16 %v4478, %v4476
        %v4539 = vpack.c.bf16 %v4481, %v4479
        %v4540 = vpack.c.bf16 %v4482, %v4480
        %v4541 = vpack.c.bf16 %v4485, %v4483
        %v4542 = vpack.c.bf16 %v4486, %v4484
        %v4543 = vpack.c.bf16 %v4489, %v4487
        %v4544 = vpack.c.bf16 %v4490, %v4488
        %v4545 = vpack.c.bf16 %v4493, %v4491
        %v4546 = vpack.c.bf16 %v4494, %v4492
        %v4547 = vpack.c.bf16 %v4497, %v4495
        %v4548 = vpack.c.bf16 %v4498, %v4496
        %v4549 = vpack.c.bf16 %v4501, %v4499
        %v4550 = vpack.c.bf16 %v4502, %v4500
        %v4551 = vpack.c.bf16 %v4505, %v4503
        %v4552 = vpack.c.bf16 %v4506, %v4504
        %v4553 = vpack.c.bf16 %v4509, %v4507
        %v4554 = vpack.c.bf16 %v4510, %v4508
        %v4555 = vpack.c.bf16 %v4513, %v4511
        %v4556 = vpack.c.bf16 %v4514, %v4512
        %v4557 = vpack.c.bf16 %v4517, %v4515
        %v4558 = vpack.c.bf16 %v4518, %v4516
        %v4559 = vpack.c.bf16 %v4521, %v4519
        %v4560 = vpack.c.bf16 %v4522, %v4520
        %v4561 = vpack.c.bf16 %v4525, %v4523
        %v4562 = vpack.c.bf16 %v4526, %v4524
        %v4563 = vpack.c.bf16 %v4529, %v4527
        %v4564 = vpack.c.bf16 %v4530, %v4528
        %v4565 = vpack.c.bf16 %v4533, %v4531
        %v4566 = vpack.c.bf16 %v4534, %v4532
        %4567 = vrot.lane.b32.xlu0 %v1326, 112
        %v4568 = vpop.permute.xlu0 %4567
        %4569 = vrot.lane.b32.xlu0 %v1327, 112
        %v4570 = vpop.permute.xlu0 %4569
        %4571 = vrot.lane.b32.xlu0 %v1328, 112
        %v4572 = vpop.permute.xlu0 %4571
        %4573 = vrot.lane.b32.xlu0 %v1329, 112
        %v4574 = vpop.permute.xlu0 %4573
        %4575 = vrot.lane.b32.xlu0 %v1330, 112
        %v4576 = vpop.permute.xlu0 %4575
        %4577 = vrot.lane.b32.xlu0 %v1331, 112
        %v4578 = vpop.permute.xlu0 %4577
        %4579 = vrot.lane.b32.xlu0 %v1332, 112
        %v4580 = vpop.permute.xlu0 %4579
        %4581 = vrot.lane.b32.xlu0 %v1333, 112
        %v4582 = vpop.permute.xlu0 %4581
        %4583 = vrot.lane.b32.xlu0 %v1334, 112
        %v4584 = vpop.permute.xlu0 %4583
        %4585 = vrot.lane.b32.xlu0 %v1335, 112
        %v4586 = vpop.permute.xlu0 %4585
        %4587 = vrot.lane.b32.xlu0 %v1336, 112
        %v4588 = vpop.permute.xlu0 %4587
        %4589 = vrot.lane.b32.xlu0 %v1337, 112
        %v4590 = vpop.permute.xlu0 %4589
        %4591 = vrot.lane.b32.xlu0 %v1338, 112
        %v4592 = vpop.permute.xlu0 %4591
        %4593 = vrot.lane.b32.xlu0 %v1339, 112
        %v4594 = vpop.permute.xlu0 %4593
        %4595 = vrot.lane.b32.xlu0 %v1340, 112
        %v4596 = vpop.permute.xlu0 %4595
        %4597 = vrot.lane.b32.xlu0 %v1341, 112
        %v4598 = vpop.permute.xlu0 %4597
        %4615 = vmatprep.subr.bf16.mxu0 0
        %4616 = vmatpush1.bf16.msra.mxu0 %v4568
        %4617 = vmatprep.subr.bf16.mxu0 0
        %4618 = vmatpush1.bf16.msra.mxu0 %v4570
        %4619 = vmatprep.subr.bf16.mxu0 0
        %4620 = vmatpush1.bf16.msra.mxu0 %v4572
        %4621 = vmatprep.subr.bf16.mxu0 0
        %4622 = vmatpush1.bf16.msra.mxu0 %v4574
        %4623 = vmatprep.subr.bf16.mxu0 0
        %4624 = vmatpush1.bf16.msra.mxu0 %v4576
        %4625 = vmatprep.subr.bf16.mxu0 0
        %4626 = vmatpush1.bf16.msra.mxu0 %v4578
        %4627 = vmatprep.subr.bf16.mxu0 0
        %4628 = vmatpush1.bf16.msra.mxu0 %v4580
        %4629 = vmatprep.subr.bf16.mxu0 0
        %4630 = vmatpush1.bf16.msra.mxu0 %v4582
        %4631 = vmatprep.subr.bf16.mxu0 0
        %4632 = vmatpush1.bf16.msra.mxu0 %v4584
        %4633 = vmatprep.subr.bf16.mxu0 0
        %4634 = vmatpush1.bf16.msra.mxu0 %v4586
        %4635 = vmatprep.subr.bf16.mxu0 0
        %4636 = vmatpush1.bf16.msra.mxu0 %v4588
        %4637 = vmatprep.subr.bf16.mxu0 0
        %4638 = vmatpush1.bf16.msra.mxu0 %v4590
        %4639 = vmatprep.subr.bf16.mxu0 0
        %4640 = vmatpush1.bf16.msra.mxu0 %v4592
        %4641 = vmatprep.subr.bf16.mxu0 0
        %4642 = vmatpush1.bf16.msra.mxu0 %v4594
        %4643 = vmatprep.subr.bf16.mxu0 0
        %4644 = vmatpush1.bf16.msra.mxu0 %v4596
        %4645 = vmatprep.subr.bf16.mxu0 0
        %4646 = vmatpush1.bf16.msra.mxu0 %v4598
        %4647 = vmatprep.mubr.bf16.mxu0 %v4536
        %4648 = vmatmul.mubr.bf16.gmra.mrb[0].mxu0 %v4535
        %v4649 = vpop.f32.mrb[0].mxu0
        %v4650 = vadd.f32 0.0, %v4649
        %v4651 = vpop.f32.mrb[0].mxu0
        %v4652 = vpop.f32.mrb[0].mxu0
        %v4653 = vadd.f32 0.0, %v4652
        %v4654 = vpop.f32.mrb[0].mxu0
        %4655 = vmatprep.mubr.bf16.mxu0 %v4538
        %4656 = vmatmul.mubr.bf16.gmra.mrb[0].mxu0 %v4537
        %v4657 = vpop.f32.mrb[0].mxu0
        %v4658 = vadd.f32 0.0, %v4657
        %v4659 = vpop.f32.mrb[0].mxu0
        %v4660 = vpop.f32.mrb[0].mxu0
        %v4661 = vadd.f32 0.0, %v4660
        %v4662 = vpop.f32.mrb[0].mxu0
        %4663 = vmatprep.mubr.bf16.mxu0 %v4540
        %4664 = vmatmul.mubr.bf16.gmra.mrb[0].mxu0 %v4539
        %v4665 = vpop.f32.mrb[0].mxu0
        %v4666 = vadd.f32 0.0, %v4665
        %v4667 = vpop.f32.mrb[0].mxu0
        %v4668 = vpop.f32.mrb[0].mxu0
        %v4669 = vadd.f32 0.0, %v4668
        %v4670 = vpop.f32.mrb[0].mxu0
        %4671 = vmatprep.mubr.bf16.mxu0 %v4542
        %4672 = vmatmul.mubr.bf16.gmra.mrb[0].mxu0 %v4541
        %v4673 = vpop.f32.mrb[0].mxu0
        %v4674 = vadd.f32 0.0, %v4673
        %v4675 = vpop.f32.mrb[0].mxu0
        %v4676 = vpop.f32.mrb[0].mxu0
        %v4677 = vadd.f32 0.0, %v4676
        %v4678 = vpop.f32.mrb[0].mxu0
        %4679 = vmatprep.mubr.bf16.mxu0 %v4544
        %4680 = vmatmul.mubr.bf16.gmra.mrb[0].mxu0 %v4543
        %v4681 = vpop.f32.mrb[0].mxu0
        %v4682 = vadd.f32 0.0, %v4681
        %v4683 = vpop.f32.mrb[0].mxu0
        %v4684 = vpop.f32.mrb[0].mxu0
        %v4685 = vadd.f32 0.0, %v4684
        %v4686 = vpop.f32.mrb[0].mxu0
        %4687 = vmatprep.mubr.bf16.mxu0 %v4546
        %4688 = vmatmul.mubr.bf16.gmra.mrb[0].mxu0 %v4545
        %v4689 = vpop.f32.mrb[0].mxu0
        %v4690 = vadd.f32 0.0, %v4689
        %v4691 = vpop.f32.mrb[0].mxu0
        %v4692 = vpop.f32.mrb[0].mxu0
        %v4693 = vadd.f32 0.0, %v4692
        %v4694 = vpop.f32.mrb[0].mxu0
        %4695 = vmatprep.mubr.bf16.mxu0 %v4548
        %4696 = vmatmul.mubr.bf16.gmra.mrb[0].mxu0 %v4547
        %v4697 = vpop.f32.mrb[0].mxu0
        %v4698 = vadd.f32 0.0, %v4697
        %v4699 = vpop.f32.mrb[0].mxu0
        %v4700 = vpop.f32.mrb[0].mxu0
        %v4701 = vadd.f32 0.0, %v4700
        %v4702 = vpop.f32.mrb[0].mxu0
        %4703 = vmatprep.mubr.bf16.mxu0 %v4550
        %4704 = vmatmul.mubr.bf16.gmra.mrb[0].mxu0 %v4549
        %v4705 = vpop.f32.mrb[0].mxu0
        %v4706 = vadd.f32 0.0, %v4705
        %v4707 = vpop.f32.mrb[0].mxu0
        %v4708 = vpop.f32.mrb[0].mxu0
        %v4709 = vadd.f32 0.0, %v4708
        %v4710 = vpop.f32.mrb[0].mxu0
        %4711 = vmatprep.mubr.bf16.mxu0 %v4552
        %4712 = vmatmul.mubr.bf16.gmra.mrb[0].mxu0 %v4551
        %v4713 = vpop.f32.mrb[0].mxu0
        %v4714 = vadd.f32 0.0, %v4713
        %v4715 = vpop.f32.mrb[0].mxu0
        %v4716 = vpop.f32.mrb[0].mxu0
        %v4717 = vadd.f32 0.0, %v4716
        %v4718 = vpop.f32.mrb[0].mxu0
        %4719 = vmatprep.mubr.bf16.mxu0 %v4554
        %4720 = vmatmul.mubr.bf16.gmra.mrb[0].mxu0 %v4553
        %v4721 = vpop.f32.mrb[0].mxu0
        %v4722 = vadd.f32 0.0, %v4721
        %v4723 = vpop.f32.mrb[0].mxu0
        %v4724 = vpop.f32.mrb[0].mxu0
        %v4725 = vadd.f32 0.0, %v4724
        %v4726 = vpop.f32.mrb[0].mxu0
        %4727 = vmatprep.mubr.bf16.mxu0 %v4556
        %4728 = vmatmul.mubr.bf16.gmra.mrb[0].mxu0 %v4555
        %v4729 = vpop.f32.mrb[0].mxu0
        %v4730 = vadd.f32 0.0, %v4729
        %v4731 = vpop.f32.mrb[0].mxu0
        %v4732 = vpop.f32.mrb[0].mxu0
        %v4733 = vadd.f32 0.0, %v4732
        %v4734 = vpop.f32.mrb[0].mxu0
        %4735 = vmatprep.mubr.bf16.mxu0 %v4558
        %4736 = vmatmul.mubr.bf16.gmra.mrb[0].mxu0 %v4557
        %v4737 = vpop.f32.mrb[0].mxu0
        %v4738 = vadd.f32 0.0, %v4737
        %v4739 = vpop.f32.mrb[0].mxu0
        %v4740 = vpop.f32.mrb[0].mxu0
        %v4741 = vadd.f32 0.0, %v4740
        %v4742 = vpop.f32.mrb[0].mxu0
        %4743 = vmatprep.mubr.bf16.mxu0 %v4560
        %4744 = vmatmul.mubr.bf16.gmra.mrb[0].mxu0 %v4559
        %v4745 = vpop.f32.mrb[0].mxu0
        %v4746 = vadd.f32 0.0, %v4745
        %v4747 = vpop.f32.mrb[0].mxu0
        %v4748 = vpop.f32.mrb[0].mxu0
        %v4749 = vadd.f32 0.0, %v4748
        %v4750 = vpop.f32.mrb[0].mxu0
        %4751 = vmatprep.mubr.bf16.mxu0 %v4562
        %4752 = vmatmul.mubr.bf16.gmra.mrb[0].mxu0 %v4561
        %v4753 = vpop.f32.mrb[0].mxu0
        %v4754 = vadd.f32 0.0, %v4753
        %v4755 = vpop.f32.mrb[0].mxu0
        %v4756 = vpop.f32.mrb[0].mxu0
        %v4757 = vadd.f32 0.0, %v4756
        %v4758 = vpop.f32.mrb[0].mxu0
        %4759 = vmatprep.mubr.bf16.mxu0 %v4564
        %4760 = vmatmul.mubr.bf16.gmra.mrb[0].mxu0 %v4563
        %v4761 = vpop.f32.mrb[0].mxu0
        %v4762 = vadd.f32 0.0, %v4761
        %v4763 = vpop.f32.mrb[0].mxu0
        %v4764 = vpop.f32.mrb[0].mxu0
        %v4765 = vadd.f32 0.0, %v4764
        %v4766 = vpop.f32.mrb[0].mxu0
        %4767 = vmatprep.mubr.bf16.mxu0 %v4566
        %4768 = vmatmul.mubr.bf16.gmra.mrb[0].mxu0 %v4565
        %v4769 = vpop.f32.mrb[0].mxu0
        %v4770 = vadd.f32 0.0, %v4769
        %v4771 = vpop.f32.mrb[0].mxu0
        %v4772 = vpop.f32.mrb[0].mxu0
        %v4773 = vadd.f32 0.0, %v4772
        %v4774 = vpop.f32.mrb[0].mxu0
        %4775 = vdwg.mxu0
        %s4776 = scalar_lea.vmem %s7, 32
        %v4777 = vld [vmem:[%s4776] sm:$0xf]
        %v4778 = vld [vmem:[%s4776 + $0x4] sm:$0xf]
        %v4779 = vld [vmem:[%s4776 + $0x8] sm:$0xf]
        %v4780 = vld [vmem:[%s4776 + $0xc] sm:$0xf]
        %v4781 = vpack.c.bf16 %v4653, %v4650
        %v4782 = vpack.c.bf16 %v4661, %v4658
        %v4783 = vpack.c.bf16 %v4669, %v4666
        %v4784 = vpack.c.bf16 %v4677, %v4674
        %v4785 = vpack.c.bf16 %v4685, %v4682
        %v4786 = vpack.c.bf16 %v4693, %v4690
        %v4787 = vpack.c.bf16 %v4701, %v4698
        %v4788 = vpack.c.bf16 %v4709, %v4706
        %v4789 = vpack.c.bf16 %v4717, %v4714
        %v4790 = vpack.c.bf16 %v4725, %v4722
        %v4791 = vpack.c.bf16 %v4733, %v4730
        %v4792 = vpack.c.bf16 %v4741, %v4738
        %v4793 = vpack.c.bf16 %v4749, %v4746
        %v4794 = vpack.c.bf16 %v4757, %v4754
        %v4795 = vpack.c.bf16 %v4765, %v4762
        %v4796 = vpack.c.bf16 %v4773, %v4770
        %v4801 = vunpack.c.l.b16 %v4777
        %v4802 = vunpack.c.l.b16 %v4778
        %v4803 = vunpack.c.l.b16 %v4779
        %v4804 = vunpack.c.l.b16 %v4780
        %v4805 = vpack.c.b16 %v4802, %v4801
        %v4806 = vpack.c.b16 %v4804, %v4803
        %v4808 = vsel %vm1342, %v4805, 0
        %v4811 = vsel %vm1342, %v4806, 0
        %v4814 = vsel %vm1342, %v4781, 0
        %v4817 = vsel %vm1342, %v4782, 0
        %v4820 = vsel %vm1342, %v4783, 0
        %v4823 = vsel %vm1342, %v4784, 0
        %v4826 = vsel %vm1342, %v4785, 0
        %v4829 = vsel %vm1342, %v4786, 0
        %v4832 = vsel %vm1342, %v4787, 0
        %v4835 = vsel %vm1342, %v4788, 0
        %v4838 = vsel %vm1342, %v4789, 0
        %v4841 = vsel %vm1342, %v4790, 0
        %v4844 = vsel %vm1342, %v4791, 0
        %v4847 = vsel %vm1342, %v4792, 0
        %v4850 = vsel %vm1342, %v4793, 0
        %v4853 = vsel %vm1342, %v4794, 0
        %v4856 = vsel %vm1342, %v4795, 0
        %v4859 = vsel %vm1342, %v4796, 0
        %4861 = vmatprep.subr.bf16.mxu0 0
        %4862 = vmatpush1.bf16.xpose.msra.mxu0 %v4814
        %4863 = vmatprep.subr.bf16.mxu0 0
        %4864 = vmatpush1.bf16.xpose.msra.mxu0 %v4817
        %4865 = vmatprep.subr.bf16.mxu0 0
        %4866 = vmatpush1.bf16.xpose.msra.mxu0 %v4820
        %4867 = vmatprep.subr.bf16.mxu0 0
        %4868 = vmatpush1.bf16.xpose.msra.mxu0 %v4823
        %4869 = vmatprep.subr.bf16.mxu0 0
        %4870 = vmatpush1.bf16.xpose.msra.mxu0 %v4826
        %4871 = vmatprep.subr.bf16.mxu0 0
        %4872 = vmatpush1.bf16.xpose.msra.mxu0 %v4829
        %4873 = vmatprep.subr.bf16.mxu0 0
        %4874 = vmatpush1.bf16.xpose.msra.mxu0 %v4832
        %4875 = vmatprep.subr.bf16.mxu0 0
        %4876 = vmatpush1.bf16.xpose.msra.mxu0 %v4835
        %4877 = vmatprep.subr.bf16.mxu0 0
        %4878 = vmatpush1.bf16.xpose.msra.mxu0 %v4838
        %4879 = vmatprep.subr.bf16.mxu0 0
        %4880 = vmatpush1.bf16.xpose.msra.mxu0 %v4841
        %4881 = vmatprep.subr.bf16.mxu0 0
        %4882 = vmatpush1.bf16.xpose.msra.mxu0 %v4844
        %4883 = vmatprep.subr.bf16.mxu0 0
        %4884 = vmatpush1.bf16.xpose.msra.mxu0 %v4847
        %4885 = vmatprep.subr.bf16.mxu0 0
        %4886 = vmatpush1.bf16.xpose.msra.mxu0 %v4850
        %4887 = vmatprep.subr.bf16.mxu0 0
        %4888 = vmatpush1.bf16.xpose.msra.mxu0 %v4853
        %4889 = vmatprep.subr.bf16.mxu0 0
        %4890 = vmatpush1.bf16.xpose.msra.mxu0 %v4856
        %4891 = vmatprep.subr.bf16.mxu0 0
        %4892 = vmatpush1.bf16.xpose.msra.mxu0 %v4859
        %4893 = vmatprep.mubr.bf16.mxu0 0
        %4894 = vmatmul.mubr.bf16.gmra.mrb[0].mxu0 %v4808
        %v4895 = vpop.f32.mrb[0].mxu0
        %v4896 = vadd.f32 0.0, %v4895
        %v4897 = vpop.f32.mrb[0].mxu0
        %v4898 = vadd.f32 0.0, %v4897
        %v4899 = vpop.f32.mrb[0].mxu0
        %v4900 = vadd.f32 0.0, %v4899
        %v4901 = vpop.f32.mrb[0].mxu0
        %v4902 = vadd.f32 0.0, %v4901
        %4903 = vmatprep.mubr.bf16.mxu0 0
        %4904 = vmatmul.mubr.bf16.gmra.mrb[0].mxu0 %v4811
        %v4905 = vpop.f32.mrb[0].mxu0
        %v4906 = vadd.f32 0.0, %v4905
        %v4907 = vpop.f32.mrb[0].mxu0
        %v4908 = vadd.f32 0.0, %v4907
        %v4909 = vpop.f32.mrb[0].mxu0
        %v4910 = vadd.f32 0.0, %v4909
        %v4911 = vpop.f32.mrb[0].mxu0
        %v4912 = vadd.f32 0.0, %v4911
        %4913 = vdwg.mxu0
        %v4914 = vadd.f32 %v3684, %v4896
        %v4915 = vadd.f32 %v3686, %v4898
        %v4916 = vadd.f32 %v3688, %v4900
        %v4917 = vadd.f32 %v3690, %v4902
        %v4918 = vadd.f32 %v3694, %v4906
        %v4919 = vadd.f32 %v3696, %v4908
        %v4920 = vadd.f32 %v3698, %v4910
        %v4921 = vadd.f32 %v3700, %v4912
        %4922 = vrot.lane.b32.xlu0 %v1294, 104
        %v4923 = vpop.permute.xlu0 %4922
        %4924 = vrot.lane.b32.xlu0 %v1295, 104
        %v4925 = vpop.permute.xlu0 %4924
        %4926 = vrot.lane.b32.xlu0 %v1296, 104
        %v4927 = vpop.permute.xlu0 %4926
        %4928 = vrot.lane.b32.xlu0 %v1297, 104
        %v4929 = vpop.permute.xlu0 %4928
        %4930 = vrot.lane.b32.xlu0 %v1298, 104
        %v4931 = vpop.permute.xlu0 %4930
        %4932 = vrot.lane.b32.xlu0 %v1299, 104
        %v4933 = vpop.permute.xlu0 %4932
        %4934 = vrot.lane.b32.xlu0 %v1300, 104
        %v4935 = vpop.permute.xlu0 %4934
        %4936 = vrot.lane.b32.xlu0 %v1301, 104
        %v4937 = vpop.permute.xlu0 %4936
        %4938 = vrot.lane.b32.xlu0 %v1302, 104
        %v4939 = vpop.permute.xlu0 %4938
        %4940 = vrot.lane.b32.xlu0 %v1303, 104
        %v4941 = vpop.permute.xlu0 %4940
        %4942 = vrot.lane.b32.xlu0 %v1304, 104
        %v4943 = vpop.permute.xlu0 %4942
        %4944 = vrot.lane.b32.xlu0 %v1305, 104
        %v4945 = vpop.permute.xlu0 %4944
        %4946 = vrot.lane.b32.xlu0 %v1306, 104
        %v4947 = vpop.permute.xlu0 %4946
        %4948 = vrot.lane.b32.xlu0 %v1307, 104
        %v4949 = vpop.permute.xlu0 %4948
        %4950 = vrot.lane.b32.xlu0 %v1308, 104
        %v4951 = vpop.permute.xlu0 %4950
        %4952 = vrot.lane.b32.xlu0 %v1309, 104
        %v4953 = vpop.permute.xlu0 %4952
        %4954 = vrot.lane.b32.xlu0 %v1310, 104
        %v4955 = vpop.permute.xlu0 %4954
        %4956 = vrot.lane.b32.xlu0 %v1311, 104
        %v4957 = vpop.permute.xlu0 %4956
        %4958 = vrot.lane.b32.xlu0 %v1312, 104
        %v4959 = vpop.permute.xlu0 %4958
        %4960 = vrot.lane.b32.xlu0 %v1313, 104
        %v4961 = vpop.permute.xlu0 %4960
        %4962 = vrot.lane.b32.xlu0 %v1314, 104
        %v4963 = vpop.permute.xlu0 %4962
        %4964 = vrot.lane.b32.xlu0 %v1315, 104
        %v4965 = vpop.permute.xlu0 %4964
        %4966 = vrot.lane.b32.xlu0 %v1316, 104
        %v4967 = vpop.permute.xlu0 %4966
        %4968 = vrot.lane.b32.xlu0 %v1317, 104
        %v4969 = vpop.permute.xlu0 %4968
        %4970 = vrot.lane.b32.xlu0 %v1318, 104
        %v4971 = vpop.permute.xlu0 %4970
        %4972 = vrot.lane.b32.xlu0 %v1319, 104
        %v4973 = vpop.permute.xlu0 %4972
        %4974 = vrot.lane.b32.xlu0 %v1320, 104
        %v4975 = vpop.permute.xlu0 %4974
        %4976 = vrot.lane.b32.xlu0 %v1321, 104
        %v4977 = vpop.permute.xlu0 %4976
        %4978 = vrot.lane.b32.xlu0 %v1322, 104
        %v4979 = vpop.permute.xlu0 %4978
        %4980 = vrot.lane.b32.xlu0 %v1323, 104
        %v4981 = vpop.permute.xlu0 %4980
        %4982 = vrot.lane.b32.xlu0 %v1324, 104
        %v4983 = vpop.permute.xlu0 %4982
        %4984 = vrot.lane.b32.xlu0 %v1325, 104
        %v4985 = vpop.permute.xlu0 %4984
        %v4987 = vsel %vm1342, %v4923, 0
        %v4990 = vsel %vm1342, %v4925, 0
        %v4993 = vsel %vm1342, %v4927, 0
        %v4996 = vsel %vm1342, %v4929, 0
        %v4999 = vsel %vm1342, %v4931, 0
        %v5002 = vsel %vm1342, %v4933, 0
        %v5005 = vsel %vm1342, %v4935, 0
        %v5008 = vsel %vm1342, %v4937, 0
        %v5011 = vsel %vm1342, %v4939, 0
        %v5014 = vsel %vm1342, %v4941, 0
        %v5017 = vsel %vm1342, %v4943, 0
        %v5020 = vsel %vm1342, %v4945, 0
        %v5023 = vsel %vm1342, %v4947, 0
        %v5026 = vsel %vm1342, %v4949, 0
        %v5029 = vsel %vm1342, %v4951, 0
        %v5032 = vsel %vm1342, %v4953, 0
        %v5035 = vsel %vm1342, %v4955, 0
        %v5038 = vsel %vm1342, %v4957, 0
        %v5041 = vsel %vm1342, %v4959, 0
        %v5044 = vsel %vm1342, %v4961, 0
        %v5047 = vsel %vm1342, %v4963, 0
        %v5050 = vsel %vm1342, %v4965, 0
        %v5053 = vsel %vm1342, %v4967, 0
        %v5056 = vsel %vm1342, %v4969, 0
        %v5059 = vsel %vm1342, %v4971, 0
        %v5062 = vsel %vm1342, %v4973, 0
        %v5065 = vsel %vm1342, %v4975, 0
        %v5068 = vsel %vm1342, %v4977, 0
        %v5071 = vsel %vm1342, %v4979, 0
        %v5074 = vsel %vm1342, %v4981, 0
        %v5077 = vsel %vm1342, %v4983, 0
        %v5080 = vsel %vm1342, %v4985, 0
        %5082 = vmatprep.subr.bf16.mxu0 0
        %5083 = vmatpush1.bf16.xpose.msra.mxu0 %v5035
        %5084 = vmatprep.subr.bf16.mxu0 0
        %5085 = vmatpush1.bf16.xpose.msra.mxu0 %v5038
        %5086 = vmatprep.subr.bf16.mxu0 0
        %5087 = vmatpush1.bf16.xpose.msra.mxu0 %v5041
        %5088 = vmatprep.subr.bf16.mxu0 0
        %5089 = vmatpush1.bf16.xpose.msra.mxu0 %v5044
        %5090 = vmatprep.subr.bf16.mxu0 0
        %5091 = vmatpush1.bf16.xpose.msra.mxu0 %v5047
        %5092 = vmatprep.subr.bf16.mxu0 0
        %5093 = vmatpush1.bf16.xpose.msra.mxu0 %v5050
        %5094 = vmatprep.subr.bf16.mxu0 0
        %5095 = vmatpush1.bf16.xpose.msra.mxu0 %v5053
        %5096 = vmatprep.subr.bf16.mxu0 0
        %5097 = vmatpush1.bf16.xpose.msra.mxu0 %v5056
        %5098 = vmatprep.subr.bf16.mxu0 0
        %5099 = vmatpush1.bf16.xpose.msra.mxu0 %v5059
        %5100 = vmatprep.subr.bf16.mxu0 0
        %5101 = vmatpush1.bf16.xpose.msra.mxu0 %v5062
        %5102 = vmatprep.subr.bf16.mxu0 0
        %5103 = vmatpush1.bf16.xpose.msra.mxu0 %v5065
        %5104 = vmatprep.subr.bf16.mxu0 0
        %5105 = vmatpush1.bf16.xpose.msra.mxu0 %v5068
        %5106 = vmatprep.subr.bf16.mxu0 0
        %5107 = vmatpush1.bf16.xpose.msra.mxu0 %v5071
        %5108 = vmatprep.subr.bf16.mxu0 0
        %5109 = vmatpush1.bf16.xpose.msra.mxu0 %v5074
        %5110 = vmatprep.subr.bf16.mxu0 0
        %5111 = vmatpush1.bf16.xpose.msra.mxu0 %v5077
        %5112 = vmatprep.subr.bf16.mxu0 0
        %5113 = vmatpush1.bf16.xpose.msra.mxu0 %v5080
        %5114 = vmatprep.mubr.bf16.mxu0 0
        %5115 = vmatmul.mubr.bf16.gmra.mrb[0].mxu0 %v4987
        %v5116 = vpop.f32.mrb[0].mxu0
        %v5117 = vadd.f32 0.0, %v5116
        %v5118 = vpop.f32.mrb[0].mxu0
        %v5119 = vadd.f32 0.0, %v5118
        %v5120 = vpop.f32.mrb[0].mxu0
        %v5121 = vadd.f32 0.0, %v5120
        %v5122 = vpop.f32.mrb[0].mxu0
        %v5123 = vadd.f32 0.0, %v5122
        %5124 = vmatprep.mubr.bf16.mxu0 0
        %5125 = vmatmul.mubr.bf16.gmra.mrb[0].mxu0 %v4990
        %v5126 = vpop.f32.mrb[0].mxu0
        %v5127 = vadd.f32 0.0, %v5126
        %v5128 = vpop.f32.mrb[0].mxu0
        %v5129 = vadd.f32 0.0, %v5128
        %v5130 = vpop.f32.mrb[0].mxu0
        %v5131 = vadd.f32 0.0, %v5130
        %v5132 = vpop.f32.mrb[0].mxu0
        %v5133 = vadd.f32 0.0, %v5132
        %5134 = vmatprep.mubr.bf16.mxu0 0
        %5135 = vmatmul.mubr.bf16.gmra.mrb[0].mxu0 %v4993
        %v5136 = vpop.f32.mrb[0].mxu0
        %v5137 = vadd.f32 0.0, %v5136
        %v5138 = vpop.f32.mrb[0].mxu0
        %v5139 = vadd.f32 0.0, %v5138
        %v5140 = vpop.f32.mrb[0].mxu0
        %v5141 = vadd.f32 0.0, %v5140
        %v5142 = vpop.f32.mrb[0].mxu0
        %v5143 = vadd.f32 0.0, %v5142
        %5144 = vmatprep.mubr.bf16.mxu0 0
        %5145 = vmatmul.mubr.bf16.gmra.mrb[0].mxu0 %v4996
        %v5146 = vpop.f32.mrb[0].mxu0
        %v5147 = vadd.f32 0.0, %v5146
        %v5148 = vpop.f32.mrb[0].mxu0
        %v5149 = vadd.f32 0.0, %v5148
        %v5150 = vpop.f32.mrb[0].mxu0
        %v5151 = vadd.f32 0.0, %v5150
        %v5152 = vpop.f32.mrb[0].mxu0
        %v5153 = vadd.f32 0.0, %v5152
        %5154 = vmatprep.mubr.bf16.mxu0 0
        %5155 = vmatmul.mubr.bf16.gmra.mrb[0].mxu0 %v4999
        %v5156 = vpop.f32.mrb[0].mxu0
        %v5157 = vadd.f32 0.0, %v5156
        %v5158 = vpop.f32.mrb[0].mxu0
        %v5159 = vadd.f32 0.0, %v5158
        %v5160 = vpop.f32.mrb[0].mxu0
        %v5161 = vadd.f32 0.0, %v5160
        %v5162 = vpop.f32.mrb[0].mxu0
        %v5163 = vadd.f32 0.0, %v5162
        %5164 = vmatprep.mubr.bf16.mxu0 0
        %5165 = vmatmul.mubr.bf16.gmra.mrb[0].mxu0 %v5002
        %v5166 = vpop.f32.mrb[0].mxu0
        %v5167 = vadd.f32 0.0, %v5166
        %v5168 = vpop.f32.mrb[0].mxu0
        %v5169 = vadd.f32 0.0, %v5168
        %v5170 = vpop.f32.mrb[0].mxu0
        %v5171 = vadd.f32 0.0, %v5170
        %v5172 = vpop.f32.mrb[0].mxu0
        %v5173 = vadd.f32 0.0, %v5172
        %5174 = vmatprep.mubr.bf16.mxu0 0
        %5175 = vmatmul.mubr.bf16.gmra.mrb[0].mxu0 %v5005
        %v5176 = vpop.f32.mrb[0].mxu0
        %v5177 = vadd.f32 0.0, %v5176
        %v5178 = vpop.f32.mrb[0].mxu0
        %v5179 = vadd.f32 0.0, %v5178
        %v5180 = vpop.f32.mrb[0].mxu0
        %v5181 = vadd.f32 0.0, %v5180
        %v5182 = vpop.f32.mrb[0].mxu0
        %v5183 = vadd.f32 0.0, %v5182
        %5184 = vmatprep.mubr.bf16.mxu0 0
        %5185 = vmatmul.mubr.bf16.gmra.mrb[0].mxu0 %v5008
        %v5186 = vpop.f32.mrb[0].mxu0
        %v5187 = vadd.f32 0.0, %v5186
        %v5188 = vpop.f32.mrb[0].mxu0
        %v5189 = vadd.f32 0.0, %v5188
        %v5190 = vpop.f32.mrb[0].mxu0
        %v5191 = vadd.f32 0.0, %v5190
        %v5192 = vpop.f32.mrb[0].mxu0
        %v5193 = vadd.f32 0.0, %v5192
        %5194 = vmatprep.mubr.bf16.mxu0 0
        %5195 = vmatmul.mubr.bf16.gmra.mrb[0].mxu0 %v5011
        %v5196 = vpop.f32.mrb[0].mxu0
        %v5197 = vadd.f32 0.0, %v5196
        %v5198 = vpop.f32.mrb[0].mxu0
        %v5199 = vadd.f32 0.0, %v5198
        %v5200 = vpop.f32.mrb[0].mxu0
        %v5201 = vadd.f32 0.0, %v5200
        %v5202 = vpop.f32.mrb[0].mxu0
        %v5203 = vadd.f32 0.0, %v5202
        %5204 = vmatprep.mubr.bf16.mxu0 0
        %5205 = vmatmul.mubr.bf16.gmra.mrb[0].mxu0 %v5014
        %v5206 = vpop.f32.mrb[0].mxu0
        %v5207 = vadd.f32 0.0, %v5206
        %v5208 = vpop.f32.mrb[0].mxu0
        %v5209 = vadd.f32 0.0, %v5208
        %v5210 = vpop.f32.mrb[0].mxu0
        %v5211 = vadd.f32 0.0, %v5210
        %v5212 = vpop.f32.mrb[0].mxu0
        %v5213 = vadd.f32 0.0, %v5212
        %5214 = vmatprep.mubr.bf16.mxu0 0
        %5215 = vmatmul.mubr.bf16.gmra.mrb[0].mxu0 %v5017
        %v5216 = vpop.f32.mrb[0].mxu0
        %v5217 = vadd.f32 0.0, %v5216
        %v5218 = vpop.f32.mrb[0].mxu0
        %v5219 = vadd.f32 0.0, %v5218
        %v5220 = vpop.f32.mrb[0].mxu0
        %v5221 = vadd.f32 0.0, %v5220
        %v5222 = vpop.f32.mrb[0].mxu0
        %v5223 = vadd.f32 0.0, %v5222
        %5224 = vmatprep.mubr.bf16.mxu0 0
        %5225 = vmatmul.mubr.bf16.gmra.mrb[0].mxu0 %v5020
        %v5226 = vpop.f32.mrb[0].mxu0
        %v5227 = vadd.f32 0.0, %v5226
        %v5228 = vpop.f32.mrb[0].mxu0
        %v5229 = vadd.f32 0.0, %v5228
        %v5230 = vpop.f32.mrb[0].mxu0
        %v5231 = vadd.f32 0.0, %v5230
        %v5232 = vpop.f32.mrb[0].mxu0
        %v5233 = vadd.f32 0.0, %v5232
        %5234 = vmatprep.mubr.bf16.mxu0 0
        %5235 = vmatmul.mubr.bf16.gmra.mrb[0].mxu0 %v5023
        %v5236 = vpop.f32.mrb[0].mxu0
        %v5237 = vadd.f32 0.0, %v5236
        %v5238 = vpop.f32.mrb[0].mxu0
        %v5239 = vadd.f32 0.0, %v5238
        %v5240 = vpop.f32.mrb[0].mxu0
        %v5241 = vadd.f32 0.0, %v5240
        %v5242 = vpop.f32.mrb[0].mxu0
        %v5243 = vadd.f32 0.0, %v5242
        %5244 = vmatprep.mubr.bf16.mxu0 0
        %5245 = vmatmul.mubr.bf16.gmra.mrb[0].mxu0 %v5026
        %v5246 = vpop.f32.mrb[0].mxu0
        %v5247 = vadd.f32 0.0, %v5246
        %v5248 = vpop.f32.mrb[0].mxu0
        %v5249 = vadd.f32 0.0, %v5248
        %v5250 = vpop.f32.mrb[0].mxu0
        %v5251 = vadd.f32 0.0, %v5250
        %v5252 = vpop.f32.mrb[0].mxu0
        %v5253 = vadd.f32 0.0, %v5252
        %5254 = vmatprep.mubr.bf16.mxu0 0
        %5255 = vmatmul.mubr.bf16.gmra.mrb[0].mxu0 %v5029
        %v5256 = vpop.f32.mrb[0].mxu0
        %v5257 = vadd.f32 0.0, %v5256
        %v5258 = vpop.f32.mrb[0].mxu0
        %v5259 = vadd.f32 0.0, %v5258
        %v5260 = vpop.f32.mrb[0].mxu0
        %v5261 = vadd.f32 0.0, %v5260
        %v5262 = vpop.f32.mrb[0].mxu0
        %v5263 = vadd.f32 0.0, %v5262
        %5264 = vmatprep.mubr.bf16.mxu0 0
        %5265 = vmatmul.mubr.bf16.gmra.mrb[0].mxu0 %v5032
        %v5266 = vpop.f32.mrb[0].mxu0
        %v5267 = vadd.f32 0.0, %v5266
        %v5268 = vpop.f32.mrb[0].mxu0
        %v5269 = vadd.f32 0.0, %v5268
        %v5270 = vpop.f32.mrb[0].mxu0
        %v5271 = vadd.f32 0.0, %v5270
        %v5272 = vpop.f32.mrb[0].mxu0
        %v5273 = vadd.f32 0.0, %v5272
        %5274 = vdwg.mxu0
        %v5275 = vmax.f32 %v5117, %v5119
        %5276 = vmax.xlane.f32.xlu0 %v5275
        %v5277 = vpop.xlane.xlu0 %5276
        %v5278 = vmax.f32 %v5121, %v5123
        %5279 = vmax.xlane.f32.xlu0 %v5278
        %v5280 = vpop.xlane.xlu0 %5279
        %v5281 = vmax.f32 %v5127, %v5129
        %5282 = vmax.xlane.f32.xlu0 %v5281
        %v5283 = vpop.xlane.xlu0 %5282
        %v5284 = vmax.f32 %v5131, %v5133
        %5285 = vmax.xlane.f32.xlu0 %v5284
        %v5286 = vpop.xlane.xlu0 %5285
        %v5287 = vmax.f32 %v5137, %v5139
        %5288 = vmax.xlane.f32.xlu0 %v5287
        %v5289 = vpop.xlane.xlu0 %5288
        %v5290 = vmax.f32 %v5141, %v5143
        %5291 = vmax.xlane.f32.xlu0 %v5290
        %v5292 = vpop.xlane.xlu0 %5291
        %v5293 = vmax.f32 %v5147, %v5149
        %5294 = vmax.xlane.f32.xlu0 %v5293
        %v5295 = vpop.xlane.xlu0 %5294
        %v5296 = vmax.f32 %v5151, %v5153
        %5297 = vmax.xlane.f32.xlu0 %v5296
        %v5298 = vpop.xlane.xlu0 %5297
        %v5299 = vmax.f32 %v5157, %v5159
        %5300 = vmax.xlane.f32.xlu0 %v5299
        %v5301 = vpop.xlane.xlu0 %5300
        %v5302 = vmax.f32 %v5161, %v5163
        %5303 = vmax.xlane.f32.xlu0 %v5302
        %v5304 = vpop.xlane.xlu0 %5303
        %v5305 = vmax.f32 %v5167, %v5169
        %5306 = vmax.xlane.f32.xlu0 %v5305
        %v5307 = vpop.xlane.xlu0 %5306
        %v5308 = vmax.f32 %v5171, %v5173
        %5309 = vmax.xlane.f32.xlu0 %v5308
        %v5310 = vpop.xlane.xlu0 %5309
        %v5311 = vmax.f32 %v5177, %v5179
        %5312 = vmax.xlane.f32.xlu0 %v5311
        %v5313 = vpop.xlane.xlu0 %5312
        %v5314 = vmax.f32 %v5181, %v5183
        %5315 = vmax.xlane.f32.xlu0 %v5314
        %v5316 = vpop.xlane.xlu0 %5315
        %v5317 = vmax.f32 %v5187, %v5189
        %5318 = vmax.xlane.f32.xlu0 %v5317
        %v5319 = vpop.xlane.xlu0 %5318
        %v5320 = vmax.f32 %v5191, %v5193
        %5321 = vmax.xlane.f32.xlu0 %v5320
        %v5322 = vpop.xlane.xlu0 %5321
        %v5323 = vmax.f32 %v5197, %v5199
        %5324 = vmax.xlane.f32.xlu0 %v5323
        %v5325 = vpop.xlane.xlu0 %5324
        %v5326 = vmax.f32 %v5201, %v5203
        %5327 = vmax.xlane.f32.xlu0 %v5326
        %v5328 = vpop.xlane.xlu0 %5327
        %v5329 = vmax.f32 %v5207, %v5209
        %5330 = vmax.xlane.f32.xlu0 %v5329
        %v5331 = vpop.xlane.xlu0 %5330
        %v5332 = vmax.f32 %v5211, %v5213
        %5333 = vmax.xlane.f32.xlu0 %v5332
        %v5334 = vpop.xlane.xlu0 %5333
        %v5335 = vmax.f32 %v5217, %v5219
        %5336 = vmax.xlane.f32.xlu0 %v5335
        %v5337 = vpop.xlane.xlu0 %5336
        %v5338 = vmax.f32 %v5221, %v5223
        %5339 = vmax.xlane.f32.xlu0 %v5338
        %v5340 = vpop.xlane.xlu0 %5339
        %v5341 = vmax.f32 %v5227, %v5229
        %5342 = vmax.xlane.f32.xlu0 %v5341
        %v5343 = vpop.xlane.xlu0 %5342
        %v5344 = vmax.f32 %v5231, %v5233
        %5345 = vmax.xlane.f32.xlu0 %v5344
        %v5346 = vpop.xlane.xlu0 %5345
        %v5347 = vmax.f32 %v5237, %v5239
        %5348 = vmax.xlane.f32.xlu0 %v5347
        %v5349 = vpop.xlane.xlu0 %5348
        %v5350 = vmax.f32 %v5241, %v5243
        %5351 = vmax.xlane.f32.xlu0 %v5350
        %v5352 = vpop.xlane.xlu0 %5351
        %v5353 = vmax.f32 %v5247, %v5249
        %5354 = vmax.xlane.f32.xlu0 %v5353
        %v5355 = vpop.xlane.xlu0 %5354
        %v5356 = vmax.f32 %v5251, %v5253
        %5357 = vmax.xlane.f32.xlu0 %v5356
        %v5358 = vpop.xlane.xlu0 %5357
        %v5359 = vmax.f32 %v5257, %v5259
        %5360 = vmax.xlane.f32.xlu0 %v5359
        %v5361 = vpop.xlane.xlu0 %5360
        %v5362 = vmax.f32 %v5261, %v5263
        %5363 = vmax.xlane.f32.xlu0 %v5362
        %v5364 = vpop.xlane.xlu0 %5363
        %v5365 = vmax.f32 %v5267, %v5269
        %5366 = vmax.xlane.f32.xlu0 %v5365
        %v5367 = vpop.xlane.xlu0 %5366
        %v5368 = vmax.f32 %v5271, %v5273
        %5369 = vmax.xlane.f32.xlu0 %v5368
        %v5370 = vpop.xlane.xlu0 %5369
        %v5371 = vsub.f32 %v5117, %v5277
        %v5372 = vsub.f32 %v5119, %v5277
        %v5373 = vsub.f32 %v5121, %v5280
        %v5374 = vsub.f32 %v5123, %v5280
        %v5375 = vsub.f32 %v5127, %v5283
        %v5376 = vsub.f32 %v5129, %v5283
        %v5377 = vsub.f32 %v5131, %v5286
        %v5378 = vsub.f32 %v5133, %v5286
        %v5379 = vsub.f32 %v5137, %v5289
        %v5380 = vsub.f32 %v5139, %v5289
        %v5381 = vsub.f32 %v5141, %v5292
        %v5382 = vsub.f32 %v5143, %v5292
        %v5383 = vsub.f32 %v5147, %v5295
        %v5384 = vsub.f32 %v5149, %v5295
        %v5385 = vsub.f32 %v5151, %v5298
        %v5386 = vsub.f32 %v5153, %v5298
        %v5387 = vsub.f32 %v5157, %v5301
        %v5388 = vsub.f32 %v5159, %v5301
        %v5389 = vsub.f32 %v5161, %v5304
        %v5390 = vsub.f32 %v5163, %v5304
        %v5391 = vsub.f32 %v5167, %v5307
        %v5392 = vsub.f32 %v5169, %v5307
        %v5393 = vsub.f32 %v5171, %v5310
        %v5394 = vsub.f32 %v5173, %v5310
        %v5395 = vsub.f32 %v5177, %v5313
        %v5396 = vsub.f32 %v5179, %v5313
        %v5397 = vsub.f32 %v5181, %v5316
        %v5398 = vsub.f32 %v5183, %v5316
        %v5399 = vsub.f32 %v5187, %v5319
        %v5400 = vsub.f32 %v5189, %v5319
        %v5401 = vsub.f32 %v5191, %v5322
        %v5402 = vsub.f32 %v5193, %v5322
        %v5403 = vsub.f32 %v5197, %v5325
        %v5404 = vsub.f32 %v5199, %v5325
        %v5405 = vsub.f32 %v5201, %v5328
        %v5406 = vsub.f32 %v5203, %v5328
        %v5407 = vsub.f32 %v5207, %v5331
        %v5408 = vsub.f32 %v5209, %v5331
        %v5409 = vsub.f32 %v5211, %v5334
        %v5410 = vsub.f32 %v5213, %v5334
        %v5411 = vsub.f32 %v5217, %v5337
        %v5412 = vsub.f32 %v5219, %v5337
        %v5413 = vsub.f32 %v5221, %v5340
        %v5414 = vsub.f32 %v5223, %v5340
        %v5415 = vsub.f32 %v5227, %v5343
        %v5416 = vsub.f32 %v5229, %v5343
        %v5417 = vsub.f32 %v5231, %v5346
        %v5418 = vsub.f32 %v5233, %v5346
        %v5419 = vsub.f32 %v5237, %v5349
        %v5420 = vsub.f32 %v5239, %v5349
        %v5421 = vsub.f32 %v5241, %v5352
        %v5422 = vsub.f32 %v5243, %v5352
        %v5423 = vsub.f32 %v5247, %v5355
        %v5424 = vsub.f32 %v5249, %v5355
        %v5425 = vsub.f32 %v5251, %v5358
        %v5426 = vsub.f32 %v5253, %v5358
        %v5427 = vsub.f32 %v5257, %v5361
        %v5428 = vsub.f32 %v5259, %v5361
        %v5429 = vsub.f32 %v5261, %v5364
        %v5430 = vsub.f32 %v5263, %v5364
        %v5431 = vsub.f32 %v5267, %v5367
        %v5432 = vsub.f32 %v5269, %v5367
        %v5433 = vsub.f32 %v5271, %v5370
        %v5434 = vsub.f32 %v5273, %v5370
        %v5435 = vmul.f32 %v5371, 1.442695
        %v5436 = vpow.pop %v5435
        %v5437 = vmul.f32 %v5372, 1.442695
        %v5438 = vpow.pop %v5437
        %v5439 = vmul.f32 %v5373, 1.442695
        %v5440 = vpow.pop %v5439
        %v5441 = vmul.f32 %v5374, 1.442695
        %v5442 = vpow.pop %v5441
        %v5443 = vmul.f32 %v5375, 1.442695
        %v5444 = vpow.pop %v5443
        %v5445 = vmul.f32 %v5376, 1.442695
        %v5446 = vpow.pop %v5445
        %v5447 = vmul.f32 %v5377, 1.442695
        %v5448 = vpow.pop %v5447
        %v5449 = vmul.f32 %v5378, 1.442695
        %v5450 = vpow.pop %v5449
        %v5451 = vmul.f32 %v5379, 1.442695
        %v5452 = vpow.pop %v5451
        %v5453 = vmul.f32 %v5380, 1.442695
        %v5454 = vpow.pop %v5453
        %v5455 = vmul.f32 %v5381, 1.442695
        %v5456 = vpow.pop %v5455
        %v5457 = vmul.f32 %v5382, 1.442695
        %v5458 = vpow.pop %v5457
        %v5459 = vmul.f32 %v5383, 1.442695
        %v5460 = vpow.pop %v5459
        %v5461 = vmul.f32 %v5384, 1.442695
        %v5462 = vpow.pop %v5461
        %v5463 = vmul.f32 %v5385, 1.442695
        %v5464 = vpow.pop %v5463
        %v5465 = vmul.f32 %v5386, 1.442695
        %v5466 = vpow.pop %v5465
        %v5467 = vmul.f32 %v5387, 1.442695
        %v5468 = vpow.pop %v5467
        %v5469 = vmul.f32 %v5388, 1.442695
        %v5470 = vpow.pop %v5469
        %v5471 = vmul.f32 %v5389, 1.442695
        %v5472 = vpow.pop %v5471
        %v5473 = vmul.f32 %v5390, 1.442695
        %v5474 = vpow.pop %v5473
        %v5475 = vmul.f32 %v5391, 1.442695
        %v5476 = vpow.pop %v5475
        %v5477 = vmul.f32 %v5392, 1.442695
        %v5478 = vpow.pop %v5477
        %v5479 = vmul.f32 %v5393, 1.442695
        %v5480 = vpow.pop %v5479
        %v5481 = vmul.f32 %v5394, 1.442695
        %v5482 = vpow.pop %v5481
        %v5483 = vmul.f32 %v5395, 1.442695
        %v5484 = vpow.pop %v5483
        %v5485 = vmul.f32 %v5396, 1.442695
        %v5486 = vpow.pop %v5485
        %v5487 = vmul.f32 %v5397, 1.442695
        %v5488 = vpow.pop %v5487
        %v5489 = vmul.f32 %v5398, 1.442695
        %v5490 = vpow.pop %v5489
        %v5491 = vmul.f32 %v5399, 1.442695
        %v5492 = vpow.pop %v5491
        %v5493 = vmul.f32 %v5400, 1.442695
        %v5494 = vpow.pop %v5493
        %v5495 = vmul.f32 %v5401, 1.442695
        %v5496 = vpow.pop %v5495
        %v5497 = vmul.f32 %v5402, 1.442695
        %v5498 = vpow.pop %v5497
        %v5499 = vmul.f32 %v5403, 1.442695
        %v5500 = vpow.pop %v5499
        %v5501 = vmul.f32 %v5404, 1.442695
        %v5502 = vpow.pop %v5501
        %v5503 = vmul.f32 %v5405, 1.442695
        %v5504 = vpow.pop %v5503
        %v5505 = vmul.f32 %v5406, 1.442695
        %v5506 = vpow.pop %v5505
        %v5507 = vmul.f32 %v5407, 1.442695
        %v5508 = vpow.pop %v5507
        %v5509 = vmul.f32 %v5408, 1.442695
        %v5510 = vpow.pop %v5509
        %v5511 = vmul.f32 %v5409, 1.442695
        %v5512 = vpow.pop %v5511
        %v5513 = vmul.f32 %v5410, 1.442695
        %v5514 = vpow.pop %v5513
        %v5515 = vmul.f32 %v5411, 1.442695
        %v5516 = vpow.pop %v5515
        %v5517 = vmul.f32 %v5412, 1.442695
        %v5518 = vpow.pop %v5517
        %v5519 = vmul.f32 %v5413, 1.442695
        %v5520 = vpow.pop %v5519
        %v5521 = vmul.f32 %v5414, 1.442695
        %v5522 = vpow.pop %v5521
        %v5523 = vmul.f32 %v5415, 1.442695
        %v5524 = vpow.pop %v5523
        %v5525 = vmul.f32 %v5416, 1.442695
        %v5526 = vpow.pop %v5525
        %v5527 = vmul.f32 %v5417, 1.442695
        %v5528 = vpow.pop %v5527
        %v5529 = vmul.f32 %v5418, 1.442695
        %v5530 = vpow.pop %v5529
        %v5531 = vmul.f32 %v5419, 1.442695
        %v5532 = vpow.pop %v5531
        %v5533 = vmul.f32 %v5420, 1.442695
        %v5534 = vpow.pop %v5533
        %v5535 = vmul.f32 %v5421, 1.442695
        %v5536 = vpow.pop %v5535
        %v5537 = vmul.f32 %v5422, 1.442695
        %v5538 = vpow.pop %v5537
        %v5539 = vmul.f32 %v5423, 1.442695
        %v5540 = vpow.pop %v5539
        %v5541 = vmul.f32 %v5424, 1.442695
        %v5542 = vpow.pop %v5541
        %v5543 = vmul.f32 %v5425, 1.442695
        %v5544 = vpow.pop %v5543
        %v5545 = vmul.f32 %v5426, 1.442695
        %v5546 = vpow.pop %v5545
        %v5547 = vmul.f32 %v5427, 1.442695
        %v5548 = vpow.pop %v5547
        %v5549 = vmul.f32 %v5428, 1.442695
        %v5550 = vpow.pop %v5549
        %v5551 = vmul.f32 %v5429, 1.442695
        %v5552 = vpow.pop %v5551
        %v5553 = vmul.f32 %v5430, 1.442695
        %v5554 = vpow.pop %v5553
        %v5555 = vmul.f32 %v5431, 1.442695
        %v5556 = vpow.pop %v5555
        %v5557 = vmul.f32 %v5432, 1.442695
        %v5558 = vpow.pop %v5557
        %v5559 = vmul.f32 %v5433, 1.442695
        %v5560 = vpow.pop %v5559
        %v5561 = vmul.f32 %v5434, 1.442695
        %v5562 = vpow.pop %v5561
        %v5563 = vadd.f32 %v5436, %v5438
        %5564 = vadd.xlane.f32.xlu0 %v5563
        %v5565 = vpop.xlane.xlu0 %5564
        %v5566 = vadd.f32 %v5440, %v5442
        %5567 = vadd.xlane.f32.xlu0 %v5566
        %v5568 = vpop.xlane.xlu0 %5567
        %v5569 = vadd.f32 %v5444, %v5446
        %5570 = vadd.xlane.f32.xlu0 %v5569
        %v5571 = vpop.xlane.xlu0 %5570
        %v5572 = vadd.f32 %v5448, %v5450
        %5573 = vadd.xlane.f32.xlu0 %v5572
        %v5574 = vpop.xlane.xlu0 %5573
        %v5575 = vadd.f32 %v5452, %v5454
        %5576 = vadd.xlane.f32.xlu0 %v5575
        %v5577 = vpop.xlane.xlu0 %5576
        %v5578 = vadd.f32 %v5456, %v5458
        %5579 = vadd.xlane.f32.xlu0 %v5578
        %v5580 = vpop.xlane.xlu0 %5579
        %v5581 = vadd.f32 %v5460, %v5462
        %5582 = vadd.xlane.f32.xlu0 %v5581
        %v5583 = vpop.xlane.xlu0 %5582
        %v5584 = vadd.f32 %v5464, %v5466
        %5585 = vadd.xlane.f32.xlu0 %v5584
        %v5586 = vpop.xlane.xlu0 %5585
        %v5587 = vadd.f32 %v5468, %v5470
        %5588 = vadd.xlane.f32.xlu0 %v5587
        %v5589 = vpop.xlane.xlu0 %5588
        %v5590 = vadd.f32 %v5472, %v5474
        %5591 = vadd.xlane.f32.xlu0 %v5590
        %v5592 = vpop.xlane.xlu0 %5591
        %v5593 = vadd.f32 %v5476, %v5478
        %5594 = vadd.xlane.f32.xlu0 %v5593
        %v5595 = vpop.xlane.xlu0 %5594
        %v5596 = vadd.f32 %v5480, %v5482
        %5597 = vadd.xlane.f32.xlu0 %v5596
        %v5598 = vpop.xlane.xlu0 %5597
        %v5599 = vadd.f32 %v5484, %v5486
        %5600 = vadd.xlane.f32.xlu0 %v5599
        %v5601 = vpop.xlane.xlu0 %5600
        %v5602 = vadd.f32 %v5488, %v5490
        %5603 = vadd.xlane.f32.xlu0 %v5602
        %v5604 = vpop.xlane.xlu0 %5603
        %v5605 = vadd.f32 %v5492, %v5494
        %5606 = vadd.xlane.f32.xlu0 %v5605
        %v5607 = vpop.xlane.xlu0 %5606
        %v5608 = vadd.f32 %v5496, %v5498
        %5609 = vadd.xlane.f32.xlu0 %v5608
        %v5610 = vpop.xlane.xlu0 %5609
        %v5611 = vadd.f32 %v5500, %v5502
        %5612 = vadd.xlane.f32.xlu0 %v5611
        %v5613 = vpop.xlane.xlu0 %5612
        %v5614 = vadd.f32 %v5504, %v5506
        %5615 = vadd.xlane.f32.xlu0 %v5614
        %v5616 = vpop.xlane.xlu0 %5615
        %v5617 = vadd.f32 %v5508, %v5510
        %5618 = vadd.xlane.f32.xlu0 %v5617
        %v5619 = vpop.xlane.xlu0 %5618
        %v5620 = vadd.f32 %v5512, %v5514
        %5621 = vadd.xlane.f32.xlu0 %v5620
        %v5622 = vpop.xlane.xlu0 %5621
        %v5623 = vadd.f32 %v5516, %v5518
        %5624 = vadd.xlane.f32.xlu0 %v5623
        %v5625 = vpop.xlane.xlu0 %5624
        %v5626 = vadd.f32 %v5520, %v5522
        %5627 = vadd.xlane.f32.xlu0 %v5626
        %v5628 = vpop.xlane.xlu0 %5627
        %v5629 = vadd.f32 %v5524, %v5526
        %5630 = vadd.xlane.f32.xlu0 %v5629
        %v5631 = vpop.xlane.xlu0 %5630
        %v5632 = vadd.f32 %v5528, %v5530
        %5633 = vadd.xlane.f32.xlu0 %v5632
        %v5634 = vpop.xlane.xlu0 %5633
        %v5635 = vadd.f32 %v5532, %v5534
        %5636 = vadd.xlane.f32.xlu0 %v5635
        %v5637 = vpop.xlane.xlu0 %5636
        %v5638 = vadd.f32 %v5536, %v5538
        %5639 = vadd.xlane.f32.xlu0 %v5638
        %v5640 = vpop.xlane.xlu0 %5639
        %v5641 = vadd.f32 %v5540, %v5542
        %5642 = vadd.xlane.f32.xlu0 %v5641
        %v5643 = vpop.xlane.xlu0 %5642
        %v5644 = vadd.f32 %v5544, %v5546
        %5645 = vadd.xlane.f32.xlu0 %v5644
        %v5646 = vpop.xlane.xlu0 %5645
        %v5647 = vadd.f32 %v5548, %v5550
        %5648 = vadd.xlane.f32.xlu0 %v5647
        %v5649 = vpop.xlane.xlu0 %5648
        %v5650 = vadd.f32 %v5552, %v5554
        %5651 = vadd.xlane.f32.xlu0 %v5650
        %v5652 = vpop.xlane.xlu0 %5651
        %v5653 = vadd.f32 %v5556, %v5558
        %5654 = vadd.xlane.f32.xlu0 %v5653
        %v5655 = vpop.xlane.xlu0 %5654
        %v5656 = vadd.f32 %v5560, %v5562
        %5657 = vadd.xlane.f32.xlu0 %v5656
        %v5658 = vpop.xlane.xlu0 %5657
        %v5659 = vrcp.pop %v5565
        %v5660 = vrcp.pop %v5568
        %v5661 = vrcp.pop %v5571
        %v5662 = vrcp.pop %v5574
        %v5663 = vrcp.pop %v5577
        %v5664 = vrcp.pop %v5580
        %v5665 = vrcp.pop %v5583
        %v5666 = vrcp.pop %v5586
        %v5667 = vrcp.pop %v5589
        %v5668 = vrcp.pop %v5592
        %v5669 = vrcp.pop %v5595
        %v5670 = vrcp.pop %v5598
        %v5671 = vrcp.pop %v5601
        %v5672 = vrcp.pop %v5604
        %v5673 = vrcp.pop %v5607
        %v5674 = vrcp.pop %v5610
        %v5675 = vrcp.pop %v5613
        %v5676 = vrcp.pop %v5616
        %v5677 = vrcp.pop %v5619
        %v5678 = vrcp.pop %v5622
        %v5679 = vrcp.pop %v5625
        %v5680 = vrcp.pop %v5628
        %v5681 = vrcp.pop %v5631
        %v5682 = vrcp.pop %v5634
        %v5683 = vrcp.pop %v5637
        %v5684 = vrcp.pop %v5640
        %v5685 = vrcp.pop %v5643
        %v5686 = vrcp.pop %v5646
        %v5687 = vrcp.pop %v5649
        %v5688 = vrcp.pop %v5652
        %v5689 = vrcp.pop %v5655
        %v5690 = vrcp.pop %v5658
        %v5691 = vmul.f32 %v5436, %v5659
        %v5692 = vmul.f32 %v5438, %v5659
        %v5693 = vmul.f32 %v5440, %v5660
        %v5694 = vmul.f32 %v5442, %v5660
        %v5695 = vmul.f32 %v5444, %v5661
        %v5696 = vmul.f32 %v5446, %v5661
        %v5697 = vmul.f32 %v5448, %v5662
        %v5698 = vmul.f32 %v5450, %v5662
        %v5699 = vmul.f32 %v5452, %v5663
        %v5700 = vmul.f32 %v5454, %v5663
        %v5701 = vmul.f32 %v5456, %v5664
        %v5702 = vmul.f32 %v5458, %v5664
        %v5703 = vmul.f32 %v5460, %v5665
        %v5704 = vmul.f32 %v5462, %v5665
        %v5705 = vmul.f32 %v5464, %v5666
        %v5706 = vmul.f32 %v5466, %v5666
        %v5707 = vmul.f32 %v5468, %v5667
        %v5708 = vmul.f32 %v5470, %v5667
        %v5709 = vmul.f32 %v5472, %v5668
        %v5710 = vmul.f32 %v5474, %v5668
        %v5711 = vmul.f32 %v5476, %v5669
        %v5712 = vmul.f32 %v5478, %v5669
        %v5713 = vmul.f32 %v5480, %v5670
        %v5714 = vmul.f32 %v5482, %v5670
        %v5715 = vmul.f32 %v5484, %v5671
        %v5716 = vmul.f32 %v5486, %v5671
        %v5717 = vmul.f32 %v5488, %v5672
        %v5718 = vmul.f32 %v5490, %v5672
        %v5719 = vmul.f32 %v5492, %v5673
        %v5720 = vmul.f32 %v5494, %v5673
        %v5721 = vmul.f32 %v5496, %v5674
        %v5722 = vmul.f32 %v5498, %v5674
        %v5723 = vmul.f32 %v5500, %v5675
        %v5724 = vmul.f32 %v5502, %v5675
        %v5725 = vmul.f32 %v5504, %v5676
        %v5726 = vmul.f32 %v5506, %v5676
        %v5727 = vmul.f32 %v5508, %v5677
        %v5728 = vmul.f32 %v5510, %v5677
        %v5729 = vmul.f32 %v5512, %v5678
        %v5730 = vmul.f32 %v5514, %v5678
        %v5731 = vmul.f32 %v5516, %v5679
        %v5732 = vmul.f32 %v5518, %v5679
        %v5733 = vmul.f32 %v5520, %v5680
        %v5734 = vmul.f32 %v5522, %v5680
        %v5735 = vmul.f32 %v5524, %v5681
        %v5736 = vmul.f32 %v5526, %v5681
        %v5737 = vmul.f32 %v5528, %v5682
        %v5738 = vmul.f32 %v5530, %v5682
        %v5739 = vmul.f32 %v5532, %v5683
        %v5740 = vmul.f32 %v5534, %v5683
        %v5741 = vmul.f32 %v5536, %v5684
        %v5742 = vmul.f32 %v5538, %v5684
        %v5743 = vmul.f32 %v5540, %v5685
        %v5744 = vmul.f32 %v5542, %v5685
        %v5745 = vmul.f32 %v5544, %v5686
        %v5746 = vmul.f32 %v5546, %v5686
        %v5747 = vmul.f32 %v5548, %v5687
        %v5748 = vmul.f32 %v5550, %v5687
        %v5749 = vmul.f32 %v5552, %v5688
        %v5750 = vmul.f32 %v5554, %v5688
        %v5751 = vmul.f32 %v5556, %v5689
        %v5752 = vmul.f32 %v5558, %v5689
        %v5753 = vmul.f32 %v5560, %v5690
        %v5754 = vmul.f32 %v5562, %v5690
        %v5755 = vpack.c.bf16 %v5693, %v5691
        %v5756 = vpack.c.bf16 %v5694, %v5692
        %v5757 = vpack.c.bf16 %v5697, %v5695
        %v5758 = vpack.c.bf16 %v5698, %v5696
        %v5759 = vpack.c.bf16 %v5701, %v5699
        %v5760 = vpack.c.bf16 %v5702, %v5700
        %v5761 = vpack.c.bf16 %v5705, %v5703
        %v5762 = vpack.c.bf16 %v5706, %v5704
        %v5763 = vpack.c.bf16 %v5709, %v5707
        %v5764 = vpack.c.bf16 %v5710, %v5708
        %v5765 = vpack.c.bf16 %v5713, %v5711
        %v5766 = vpack.c.bf16 %v5714, %v5712
        %v5767 = vpack.c.bf16 %v5717, %v5715
        %v5768 = vpack.c.bf16 %v5718, %v5716
        %v5769 = vpack.c.bf16 %v5721, %v5719
        %v5770 = vpack.c.bf16 %v5722, %v5720
        %v5771 = vpack.c.bf16 %v5725, %v5723
        %v5772 = vpack.c.bf16 %v5726, %v5724
        %v5773 = vpack.c.bf16 %v5729, %v5727
        %v5774 = vpack.c.bf16 %v5730, %v5728
        %v5775 = vpack.c.bf16 %v5733, %v5731
        %v5776 = vpack.c.bf16 %v5734, %v5732
        %v5777 = vpack.c.bf16 %v5737, %v5735
        %v5778 = vpack.c.bf16 %v5738, %v5736
        %v5779 = vpack.c.bf16 %v5741, %v5739
        %v5780 = vpack.c.bf16 %v5742, %v5740
        %v5781 = vpack.c.bf16 %v5745, %v5743
        %v5782 = vpack.c.bf16 %v5746, %v5744
        %v5783 = vpack.c.bf16 %v5749, %v5747
        %v5784 = vpack.c.bf16 %v5750, %v5748
        %v5785 = vpack.c.bf16 %v5753, %v5751
        %v5786 = vpack.c.bf16 %v5754, %v5752
        %5787 = vrot.lane.b32.xlu0 %v1326, 104
        %v5788 = vpop.permute.xlu0 %5787
        %5789 = vrot.lane.b32.xlu0 %v1327, 104
        %v5790 = vpop.permute.xlu0 %5789
        %5791 = vrot.lane.b32.xlu0 %v1328, 104
        %v5792 = vpop.permute.xlu0 %5791
        %5793 = vrot.lane.b32.xlu0 %v1329, 104
        %v5794 = vpop.permute.xlu0 %5793
        %5795 = vrot.lane.b32.xlu0 %v1330, 104
        %v5796 = vpop.permute.xlu0 %5795
        %5797 = vrot.lane.b32.xlu0 %v1331, 104
        %v5798 = vpop.permute.xlu0 %5797
        %5799 = vrot.lane.b32.xlu0 %v1332, 104
        %v5800 = vpop.permute.xlu0 %5799
        %5801 = vrot.lane.b32.xlu0 %v1333, 104
        %v5802 = vpop.permute.xlu0 %5801
        %5803 = vrot.lane.b32.xlu0 %v1334, 104
        %v5804 = vpop.permute.xlu0 %5803
        %5805 = vrot.lane.b32.xlu0 %v1335, 104
        %v5806 = vpop.permute.xlu0 %5805
        %5807 = vrot.lane.b32.xlu0 %v1336, 104
        %v5808 = vpop.permute.xlu0 %5807
        %5809 = vrot.lane.b32.xlu0 %v1337, 104
        %v5810 = vpop.permute.xlu0 %5809
        %5811 = vrot.lane.b32.xlu0 %v1338, 104
        %v5812 = vpop.permute.xlu0 %5811
        %5813 = vrot.lane.b32.xlu0 %v1339, 104
        %v5814 = vpop.permute.xlu0 %5813
        %5815 = vrot.lane.b32.xlu0 %v1340, 104
        %v5816 = vpop.permute.xlu0 %5815
        %5817 = vrot.lane.b32.xlu0 %v1341, 104
        %v5818 = vpop.permute.xlu0 %5817
        %5835 = vmatprep.subr.bf16.mxu0 0
        %5836 = vmatpush1.bf16.msra.mxu0 %v5788
        %5837 = vmatprep.subr.bf16.mxu0 0
        %5838 = vmatpush1.bf16.msra.mxu0 %v5790
        %5839 = vmatprep.subr.bf16.mxu0 0
        %5840 = vmatpush1.bf16.msra.mxu0 %v5792
        %5841 = vmatprep.subr.bf16.mxu0 0
        %5842 = vmatpush1.bf16.msra.mxu0 %v5794
        %5843 = vmatprep.subr.bf16.mxu0 0
        %5844 = vmatpush1.bf16.msra.mxu0 %v5796
        %5845 = vmatprep.subr.bf16.mxu0 0
        %5846 = vmatpush1.bf16.msra.mxu0 %v5798
        %5847 = vmatprep.subr.bf16.mxu0 0
        %5848 = vmatpush1.bf16.msra.mxu0 %v5800
        %5849 = vmatprep.subr.bf16.mxu0 0
        %5850 = vmatpush1.bf16.msra.mxu0 %v5802
        %5851 = vmatprep.subr.bf16.mxu0 0
        %5852 = vmatpush1.bf16.msra.mxu0 %v5804
        %5853 = vmatprep.subr.bf16.mxu0 0
        %5854 = vmatpush1.bf16.msra.mxu0 %v5806
        %5855 = vmatprep.subr.bf16.mxu0 0
        %5856 = vmatpush1.bf16.msra.mxu0 %v5808
        %5857 = vmatprep.subr.bf16.mxu0 0
        %5858 = vmatpush1.bf16.msra.mxu0 %v5810
        %5859 = vmatprep.subr.bf16.mxu0 0
        %5860 = vmatpush1.bf16.msra.mxu0 %v5812
        %5861 = vmatprep.subr.bf16.mxu0 0
        %5862 = vmatpush1.bf16.msra.mxu0 %v5814
        %5863 = vmatprep.subr.bf16.mxu0 0
        %5864 = vmatpush1.bf16.msra.mxu0 %v5816
        %5865 = vmatprep.subr.bf16.mxu0 0
        %5866 = vmatpush1.bf16.msra.mxu0 %v5818
        %5867 = vmatprep.mubr.bf16.mxu0 %v5756
        %5868 = vmatmul.mubr.bf16.gmra.mrb[0].mxu0 %v5755
        %v5869 = vpop.f32.mrb[0].mxu0
        %v5870 = vadd.f32 0.0, %v5869
        %v5871 = vpop.f32.mrb[0].mxu0
        %v5872 = vpop.f32.mrb[0].mxu0
        %v5873 = vadd.f32 0.0, %v5872
        %v5874 = vpop.f32.mrb[0].mxu0
        %5875 = vmatprep.mubr.bf16.mxu0 %v5758
        %5876 = vmatmul.mubr.bf16.gmra.mrb[0].mxu0 %v5757
        %v5877 = vpop.f32.mrb[0].mxu0
        %v5878 = vadd.f32 0.0, %v5877
        %v5879 = vpop.f32.mrb[0].mxu0
        %v5880 = vpop.f32.mrb[0].mxu0
        %v5881 = vadd.f32 0.0, %v5880
        %v5882 = vpop.f32.mrb[0].mxu0
        %5883 = vmatprep.mubr.bf16.mxu0 %v5760
        %5884 = vmatmul.mubr.bf16.gmra.mrb[0].mxu0 %v5759
        %v5885 = vpop.f32.mrb[0].mxu0
        %v5886 = vadd.f32 0.0, %v5885
        %v5887 = vpop.f32.mrb[0].mxu0
        %v5888 = vpop.f32.mrb[0].mxu0
        %v5889 = vadd.f32 0.0, %v5888
        %v5890 = vpop.f32.mrb[0].mxu0
        %5891 = vmatprep.mubr.bf16.mxu0 %v5762
        %5892 = vmatmul.mubr.bf16.gmra.mrb[0].mxu0 %v5761
        %v5893 = vpop.f32.mrb[0].mxu0
        %v5894 = vadd.f32 0.0, %v5893
        %v5895 = vpop.f32.mrb[0].mxu0
        %v5896 = vpop.f32.mrb[0].mxu0
        %v5897 = vadd.f32 0.0, %v5896
        %v5898 = vpop.f32.mrb[0].mxu0
        %5899 = vmatprep.mubr.bf16.mxu0 %v5764
        %5900 = vmatmul.mubr.bf16.gmra.mrb[0].mxu0 %v5763
        %v5901 = vpop.f32.mrb[0].mxu0
        %v5902 = vadd.f32 0.0, %v5901
        %v5903 = vpop.f32.mrb[0].mxu0
        %v5904 = vpop.f32.mrb[0].mxu0
        %v5905 = vadd.f32 0.0, %v5904
        %v5906 = vpop.f32.mrb[0].mxu0
        %5907 = vmatprep.mubr.bf16.mxu0 %v5766
        %5908 = vmatmul.mubr.bf16.gmra.mrb[0].mxu0 %v5765
        %v5909 = vpop.f32.mrb[0].mxu0
        %v5910 = vadd.f32 0.0, %v5909
        %v5911 = vpop.f32.mrb[0].mxu0
        %v5912 = vpop.f32.mrb[0].mxu0
        %v5913 = vadd.f32 0.0, %v5912
        %v5914 = vpop.f32.mrb[0].mxu0
        %5915 = vmatprep.mubr.bf16.mxu0 %v5768
        %5916 = vmatmul.mubr.bf16.gmra.mrb[0].mxu0 %v5767
        %v5917 = vpop.f32.mrb[0].mxu0
        %v5918 = vadd.f32 0.0, %v5917
        %v5919 = vpop.f32.mrb[0].mxu0
        %v5920 = vpop.f32.mrb[0].mxu0
        %v5921 = vadd.f32 0.0, %v5920
        %v5922 = vpop.f32.mrb[0].mxu0
        %5923 = vmatprep.mubr.bf16.mxu0 %v5770
        %5924 = vmatmul.mubr.bf16.gmra.mrb[0].mxu0 %v5769
        %v5925 = vpop.f32.mrb[0].mxu0
        %v5926 = vadd.f32 0.0, %v5925
        %v5927 = vpop.f32.mrb[0].mxu0
        %v5928 = vpop.f32.mrb[0].mxu0
        %v5929 = vadd.f32 0.0, %v5928
        %v5930 = vpop.f32.mrb[0].mxu0
        %5931 = vmatprep.mubr.bf16.mxu0 %v5772
        %5932 = vmatmul.mubr.bf16.gmra.mrb[0].mxu0 %v5771
        %v5933 = vpop.f32.mrb[0].mxu0
        %v5934 = vadd.f32 0.0, %v5933
        %v5935 = vpop.f32.mrb[0].mxu0
        %v5936 = vpop.f32.mrb[0].mxu0
        %v5937 = vadd.f32 0.0, %v5936
        %v5938 = vpop.f32.mrb[0].mxu0
        %5939 = vmatprep.mubr.bf16.mxu0 %v5774
        %5940 = vmatmul.mubr.bf16.gmra.mrb[0].mxu0 %v5773
        %v5941 = vpop.f32.mrb[0].mxu0
        %v5942 = vadd.f32 0.0, %v5941
        %v5943 = vpop.f32.mrb[0].mxu0
        %v5944 = vpop.f32.mrb[0].mxu0
        %v5945 = vadd.f32 0.0, %v5944
        %v5946 = vpop.f32.mrb[0].mxu0
        %5947 = vmatprep.mubr.bf16.mxu0 %v5776
        %5948 = vmatmul.mubr.bf16.gmra.mrb[0].mxu0 %v5775
        %v5949 = vpop.f32.mrb[0].mxu0
        %v5950 = vadd.f32 0.0, %v5949
        %v5951 = vpop.f32.mrb[0].mxu0
        %v5952 = vpop.f32.mrb[0].mxu0
        %v5953 = vadd.f32 0.0, %v5952
        %v5954 = vpop.f32.mrb[0].mxu0
        %5955 = vmatprep.mubr.bf16.mxu0 %v5778
        %5956 = vmatmul.mubr.bf16.gmra.mrb[0].mxu0 %v5777
        %v5957 = vpop.f32.mrb[0].mxu0
        %v5958 = vadd.f32 0.0, %v5957
        %v5959 = vpop.f32.mrb[0].mxu0
        %v5960 = vpop.f32.mrb[0].mxu0
        %v5961 = vadd.f32 0.0, %v5960
        %v5962 = vpop.f32.mrb[0].mxu0
        %5963 = vmatprep.mubr.bf16.mxu0 %v5780
        %5964 = vmatmul.mubr.bf16.gmra.mrb[0].mxu0 %v5779
        %v5965 = vpop.f32.mrb[0].mxu0
        %v5966 = vadd.f32 0.0, %v5965
        %v5967 = vpop.f32.mrb[0].mxu0
        %v5968 = vpop.f32.mrb[0].mxu0
        %v5969 = vadd.f32 0.0, %v5968
        %v5970 = vpop.f32.mrb[0].mxu0
        %5971 = vmatprep.mubr.bf16.mxu0 %v5782
        %5972 = vmatmul.mubr.bf16.gmra.mrb[0].mxu0 %v5781
        %v5973 = vpop.f32.mrb[0].mxu0
        %v5974 = vadd.f32 0.0, %v5973
        %v5975 = vpop.f32.mrb[0].mxu0
        %v5976 = vpop.f32.mrb[0].mxu0
        %v5977 = vadd.f32 0.0, %v5976
        %v5978 = vpop.f32.mrb[0].mxu0
        %5979 = vmatprep.mubr.bf16.mxu0 %v5784
        %5980 = vmatmul.mubr.bf16.gmra.mrb[0].mxu0 %v5783
        %v5981 = vpop.f32.mrb[0].mxu0
        %v5982 = vadd.f32 0.0, %v5981
        %v5983 = vpop.f32.mrb[0].mxu0
        %v5984 = vpop.f32.mrb[0].mxu0
        %v5985 = vadd.f32 0.0, %v5984
        %v5986 = vpop.f32.mrb[0].mxu0
        %5987 = vmatprep.mubr.bf16.mxu0 %v5786
        %5988 = vmatmul.mubr.bf16.gmra.mrb[0].mxu0 %v5785
        %v5989 = vpop.f32.mrb[0].mxu0
        %v5990 = vadd.f32 0.0, %v5989
        %v5991 = vpop.f32.mrb[0].mxu0
        %v5992 = vpop.f32.mrb[0].mxu0
        %v5993 = vadd.f32 0.0, %v5992
        %v5994 = vpop.f32.mrb[0].mxu0
        %5995 = vdwg.mxu0
        %s5996 = scalar_lea.vmem %s7, 48
        %v5997 = vld [vmem:[%s5996] sm:$0xf]
        %v5998 = vld [vmem:[%s5996 + $0x4] sm:$0xf]
        %v5999 = vld [vmem:[%s5996 + $0x8] sm:$0xf]
        %v6000 = vld [vmem:[%s5996 + $0xc] sm:$0xf]
        %v6001 = vpack.c.bf16 %v5873, %v5870
        %v6002 = vpack.c.bf16 %v5881, %v5878
        %v6003 = vpack.c.bf16 %v5889, %v5886
        %v6004 = vpack.c.bf16 %v5897, %v5894
        %v6005 = vpack.c.bf16 %v5905, %v5902
        %v6006 = vpack.c.bf16 %v5913, %v5910
        %v6007 = vpack.c.bf16 %v5921, %v5918
        %v6008 = vpack.c.bf16 %v5929, %v5926
        %v6009 = vpack.c.bf16 %v5937, %v5934
        %v6010 = vpack.c.bf16 %v5945, %v5942
        %v6011 = vpack.c.bf16 %v5953, %v5950
        %v6012 = vpack.c.bf16 %v5961, %v5958
        %v6013 = vpack.c.bf16 %v5969, %v5966
        %v6014 = vpack.c.bf16 %v5977, %v5974
        %v6015 = vpack.c.bf16 %v5985, %v5982
        %v6016 = vpack.c.bf16 %v5993, %v5990
        %v6021 = vunpack.c.l.b16 %v5997
        %v6022 = vunpack.c.l.b16 %v5998
        %v6023 = vunpack.c.l.b16 %v5999
        %v6024 = vunpack.c.l.b16 %v6000
        %v6025 = vpack.c.b16 %v6022, %v6021
        %v6026 = vpack.c.b16 %v6024, %v6023
        %v6028 = vsel %vm1342, %v6025, 0
        %v6031 = vsel %vm1342, %v6026, 0
        %v6034 = vsel %vm1342, %v6001, 0
        %v6037 = vsel %vm1342, %v6002, 0
        %v6040 = vsel %vm1342, %v6003, 0
        %v6043 = vsel %vm1342, %v6004, 0
        %v6046 = vsel %vm1342, %v6005, 0
        %v6049 = vsel %vm1342, %v6006, 0
        %v6052 = vsel %vm1342, %v6007, 0
        %v6055 = vsel %vm1342, %v6008, 0
        %v6058 = vsel %vm1342, %v6009, 0
        %v6061 = vsel %vm1342, %v6010, 0
        %v6064 = vsel %vm1342, %v6011, 0
        %v6067 = vsel %vm1342, %v6012, 0
        %v6070 = vsel %vm1342, %v6013, 0
        %v6073 = vsel %vm1342, %v6014, 0
        %v6076 = vsel %vm1342, %v6015, 0
        %v6079 = vsel %vm1342, %v6016, 0
        %6081 = vmatprep.subr.bf16.mxu0 0
        %6082 = vmatpush1.bf16.xpose.msra.mxu0 %v6034
        %6083 = vmatprep.subr.bf16.mxu0 0
        %6084 = vmatpush1.bf16.xpose.msra.mxu0 %v6037
        %6085 = vmatprep.subr.bf16.mxu0 0
        %6086 = vmatpush1.bf16.xpose.msra.mxu0 %v6040
        %6087 = vmatprep.subr.bf16.mxu0 0
        %6088 = vmatpush1.bf16.xpose.msra.mxu0 %v6043
        %6089 = vmatprep.subr.bf16.mxu0 0
        %6090 = vmatpush1.bf16.xpose.msra.mxu0 %v6046
        %6091 = vmatprep.subr.bf16.mxu0 0
        %6092 = vmatpush1.bf16.xpose.msra.mxu0 %v6049
        %6093 = vmatprep.subr.bf16.mxu0 0
        %6094 = vmatpush1.bf16.xpose.msra.mxu0 %v6052
        %6095 = vmatprep.subr.bf16.mxu0 0
        %6096 = vmatpush1.bf16.xpose.msra.mxu0 %v6055
        %6097 = vmatprep.subr.bf16.mxu0 0
        %6098 = vmatpush1.bf16.xpose.msra.mxu0 %v6058
        %6099 = vmatprep.subr.bf16.mxu0 0
        %6100 = vmatpush1.bf16.xpose.msra.mxu0 %v6061
        %6101 = vmatprep.subr.bf16.mxu0 0
        %6102 = vmatpush1.bf16.xpose.msra.mxu0 %v6064
        %6103 = vmatprep.subr.bf16.mxu0 0
        %6104 = vmatpush1.bf16.xpose.msra.mxu0 %v6067
        %6105 = vmatprep.subr.bf16.mxu0 0
        %6106 = vmatpush1.bf16.xpose.msra.mxu0 %v6070
        %6107 = vmatprep.subr.bf16.mxu0 0
        %6108 = vmatpush1.bf16.xpose.msra.mxu0 %v6073
        %6109 = vmatprep.subr.bf16.mxu0 0
        %6110 = vmatpush1.bf16.xpose.msra.mxu0 %v6076
        %6111 = vmatprep.subr.bf16.mxu0 0
        %6112 = vmatpush1.bf16.xpose.msra.mxu0 %v6079
        %6113 = vmatprep.mubr.bf16.mxu0 0
        %6114 = vmatmul.mubr.bf16.gmra.mrb[0].mxu0 %v6028
        %v6115 = vpop.f32.mrb[0].mxu0
        %v6116 = vadd.f32 0.0, %v6115
        %v6117 = vpop.f32.mrb[0].mxu0
        %v6118 = vadd.f32 0.0, %v6117
        %v6119 = vpop.f32.mrb[0].mxu0
        %v6120 = vadd.f32 0.0, %v6119
        %v6121 = vpop.f32.mrb[0].mxu0
        %v6122 = vadd.f32 0.0, %v6121
        %6123 = vmatprep.mubr.bf16.mxu0 0
        %6124 = vmatmul.mubr.bf16.gmra.mrb[0].mxu0 %v6031
        %v6125 = vpop.f32.mrb[0].mxu0
        %v6126 = vadd.f32 0.0, %v6125
        %v6127 = vpop.f32.mrb[0].mxu0
        %v6128 = vadd.f32 0.0, %v6127
        %v6129 = vpop.f32.mrb[0].mxu0
        %v6130 = vadd.f32 0.0, %v6129
        %v6131 = vpop.f32.mrb[0].mxu0
        %v6132 = vadd.f32 0.0, %v6131
        %6133 = vdwg.mxu0
        %v6134 = vadd.f32 %v4914, %v6116
        %v6135 = vadd.f32 %v4915, %v6118
        %v6136 = vadd.f32 %v4916, %v6120
        %v6137 = vadd.f32 %v4917, %v6122
        %v6138 = vadd.f32 %v4918, %v6126
        %v6139 = vadd.f32 %v4919, %v6128
        %v6140 = vadd.f32 %v4920, %v6130
        %v6141 = vadd.f32 %v4921, %v6132
        %v6142 = vld [vmem:[%s8] sm:$0xff]
        %v6143 = vld [vmem:[%s8 + $0x8] sm:$0xff]
        %v6144 = vld [vmem:[%s8 + $0x10] sm:$0xff]
        %v6145 = vld [vmem:[%s8 + $0x18] sm:$0xff]
        %6147 = vset.pattern.permute.xlu0 0
        %6148 = vperm.xlu0 %6147, %v6142
        %v6149 = vpop.permute.xlu0 %6148
        %6152 = vset.pattern.permute.xlu0 0
        %6153 = vperm.xlu0 %6152, %v6143
        %v6154 = vpop.permute.xlu0 %6153
        %6157 = vset.pattern.permute.xlu0 0
        %6158 = vperm.xlu0 %6157, %v6144
        %v6159 = vpop.permute.xlu0 %6158
        %6162 = vset.pattern.permute.xlu0 0
        %6163 = vperm.xlu0 %6162, %v6145
        %v6164 = vpop.permute.xlu0 %6163
        %v6166 = vadd.f32 %v6134, %v6149
        %v6167 = vadd.f32 %v6135, %v6149
        %v6168 = vadd.f32 %v6136, %v6154
        %v6169 = vadd.f32 %v6137, %v6154
        %v6170 = vadd.f32 %v6138, %v6159
        %v6171 = vadd.f32 %v6139, %v6159
        %v6172 = vadd.f32 %v6140, %v6164
        %v6173 = vadd.f32 %v6141, %v6164
        %6174 = vst [vmem:[%s339] sm:$0xff] %v6166
        %6175 = vst [vmem:[%s339 + $0x8] sm:$0xff] %v6167
        %6176 = vst [vmem:[%s339 + $0x10] sm:$0xff] %v6168
        %6177 = vst [vmem:[%s339 + $0x18] sm:$0xff] %v6169
        %6178 = vst [vmem:[%s339 + $0x20] sm:$0xff] %v6170
        %6179 = vst [vmem:[%s339 + $0x28] sm:$0xff] %v6171
        %6180 = vst [vmem:[%s339 + $0x30] sm:$0xff] %v6172
        %6181 = vst [vmem:[%s339 + $0x38] sm:$0xff] %v6173
        %s6182 = sand.u32 %s239, 1
        %s6183 = scalar_lea.sflag [#allocation5], %s6182
        %s6184 = sand.u32 %s239, 1
        %s6185 = smul.addr %s6184, 64
        %s6186 = scalar_lea.vmem [#allocation4], %s6185
        // Predicated region
        $region61: #{tpu_custom_call.1} parent=55 // pred_check
          %p6187 = pneg %p249
        $region62: #{tpu_custom_call.1} parent=55 // pred_check_branch
          %6189 = sbr.rel (%p6187) target = $region64
        $region63: #{tpu_custom_call.1} parent=55 // pred_region
          %s6190 = smul.u32 2, %s28
          %s6192 = ssub.s32 1024, 1024
          %6193 = vsyncadd %s6183, %s6192
          %s6194 = smul.addr %s27, 8
          %s6195 = sadd.s32 %s6190, %s6194
          %s6196 = smul.addr %s6195, 128
          %s6197 = scalar_lea.hbm %s9, %s6196
          %s6198 = sshll.u32 %s6186, 4
          %s6199 = int_to_ptr.vmem [resolvable:$true] %s6198
          %6204 = dma.vmem_to_hbm [thread:$0]  %s6199, 1024, %s6197, %s6183, 256, 256, 16
        $region64: #{tpu_custom_call.1} parent=55 // pred_fallthru
          _
      $region56: #{tpu_custom_call.1} parent=5 // pred_fallthru
        _
      %p6205 = scmp.le.s32.totalorder 2, %s18
      // Predicated region
      $region65: #{tpu_custom_call.1} parent=5 // pred_check
        %p6206 = pneg %p6205
      $region66: #{tpu_custom_call.1} parent=5 // pred_check_branch
        %6208 = sbr.rel (%p6206) target = $region68
      $region67: #{tpu_custom_call.1} parent=5 // pred_region
        %s6209 = ssub.s32 %s18, 2
        // Predicated region
        $region69: #{tpu_custom_call.1} parent=67 // pred_check
          %p6210 = pneg %p255
        $region70: #{tpu_custom_call.1} parent=67 // pred_check_branch
          %6212 = sbr.rel (%p6210) target = $region72
        $region71: #{tpu_custom_call.1} parent=67 // pred_region
          %s6213 = sand.u32 %s240, 1
          %s6214 = scalar_lea.sflag [#allocation5], %s6213
          %s6215 = sand.u32 %s240, 1
          %s6216 = smul.addr %s6215, 64
          %s6217 = scalar_lea.vmem [#allocation4], %s6216
          %6218 = dma.done %s6214, 1024
        $region72: #{tpu_custom_call.1} parent=67 // pred_fallthru
          _
      $region68: #{tpu_custom_call.1} parent=5 // pred_fallthru
        _
    $region6: #{tpu_custom_call.1} parent=1 // loop_footer
      %s22 = sadd.s32 1, %s18
    $region7: #{tpu_custom_call.1} parent=1 // loop_footer_branch
      %17 = sbr.rel target = $region3
    $region8: #{tpu_custom_call.1} parent=1 // loop_exit
      _
    %6219 = vsyncpa [#allocation5], 1
    %s6220 = scalar_lea.sflag [#allocation5], 1
    %6221 = vsyncpa %s6220, 1

</llo_original>
